<compile_context>
chip_gen: v6e
topology: v6e:2x2x1
jax: 0.10.0
libtpu: 0.0.40
codegen_flags: <defaults>
</compile_context>

<pallas_src>
import functools

import jax
import jax.numpy as jnp
from jax import lax
from jax.experimental import pallas as pl
from jax.experimental.pallas import tpu as pltpu


def _round_up(v, m):
    return (v + m - 1) // m * m


def _pick_divisor(n, target, mult=1):
    """Largest multiple of `mult` that divides n and is <= max(target, mult)."""
    t = min(n, max(target, mult))
    t -= t % mult
    while t >= mult:
        if n % t == 0:
            return t
        t -= mult
    return n


def _vmem_budget():
    """Generation-aware scoped-VMEM limit (~70% of physical: 64 MiB v7x, 128 MiB v5e/v6e)."""
    try:
        phys = int(pltpu.get_tpu_info().vmem_capacity_bytes)
        return max(32 << 20, min(int(phys * 0.7), 112 << 20))
    except Exception:  # pragma: no cover - conservative fallback (known-safe)
        return 32 << 20


# ---------------------------------------------------------------------------
# Pass 1: per batch element, accumulate S = pooled_phi^T @ (pooled_g / Ng) in a VMEM
# scratch, then fold it into  M = [wt; bt] @ S @ W_bn  and  bias = row(bt) + bw_bn.
# ---------------------------------------------------------------------------
def _pool_fold_kernel(x_ref, wpg_ref, bpg_ref, wtb_ref, ww_ref, bw_ref,
                      m_ref, b_ref, s_acc):
    # x_ref  : (TMH, 2, Wo, 2*Cp) f32   window-structured view of x
    # wpg_ref: (Cp, 2*Cip) bf16         fused [wp | wg/Ng] pointwise-conv weights
    # bpg_ref: (1, 2*Cip)  f32          fused [bp | bg/Ng] biases
    # wtb_ref: (Cp+8, Cip) bf16         [wt ; bt ; 0-pad] (theta bias as extra row)
    # ww_ref : (Cip, C)    bf16         W conv with eval BatchNorm scale folded in
    # bw_ref : (1, C)      f32          W conv bias with BatchNorm folded in
    # m_ref  : (1, Cp, C)  bf16 out     M_b  (written only on the last tile)
    # b_ref  : (1, 1, C)   f32  out     bias_b
    # s_acc  : (Cip, Cip)  f32  scratch resident accumulator across the tile axis
    tmh, _, wo, two_cp = x_ref.shape
    cp = two_cp // 2
    cip = wtb_ref.shape[1]
    r = tmh * wo
    f32, bf16 = jnp.float32, jnp.bfloat16

    @pl.when(pl.program_id(1) == 0)
    def _():
        s_acc[...] = jnp.zeros_like(s_acc)

    def proj(hp, wp):
        # One corner of the 2x2 pooling window: (TMH, Wo, Cp) rows -> [phi | g] proj.
        corner = x_ref[:, hp, :, wp * cp:(wp + 1) * cp].reshape(r, cp)
        return jnp.dot(corner.astype(bf16), wpg_ref[...],
                       preferred_element_type=f32)                     # (R, 2*Cip)

    # MaxPool3d((1,2,2)) after a 1x1 conv == elementwise max of the 4 projected
    # corners; the bias is constant over the window, so it is added after the max.
    pooled = jnp.maximum(jnp.maximum(proj(0, 0), proj(0, 1)),
                         jnp.maximum(proj(1, 0), proj(1, 1)))
    pooled = pooled + bpg_ref[...]                                     # (R, 2*Cip)

    phi_p = pooled[:, :cip].astype(bf16)                               # (R, Cip)
    g_p = pooled[:, cip:].astype(bf16)                                 # (R, Cip), pre-scaled 1/Ng
    s_acc[...] += lax.dot_general(phi_p, g_p, (((0,), (0,)), ((), ())),
                                  preferred_element_type=f32)          # (Cip, Cip)

    @pl.when(pl.program_id(1) == pl.num_programs(1) - 1)
    def _():
        sw = jnp.dot(s_acc[...].astype(bf16), ww_ref[...],
                     preferred_element_type=f32).astype(bf16)          # (Cip, C)
        ma = jnp.dot(wtb_ref[...], sw, preferred_element_type=f32)     # (Cp+8, C)
        m_ref[0] = ma[:cp].astype(m_ref.dtype)
        b_ref[0] = (ma[cp:cp + 1] + bw_ref[...]).astype(b_ref.dtype)


# ---------------------------------------------------------------------------
# Pass 2: out = x + x @ M_b + bias_b   (one long-K MXU matmul per token tile)
# ---------------------------------------------------------------------------
def _apply_kernel(x_ref, m_ref, b_ref, o_ref):
    x = x_ref[...]                                                     # (TN, Cp) f32
    y = jnp.dot(x.astype(jnp.bfloat16), m_ref[0],
                preferred_element_type=jnp.float32)                    # (TN, C)
    c = o_ref.shape[-1]
    o_ref[...] = (y + b_ref[0] + x[:, :c]).astype(o_ref.dtype)


@functools.partial(jax.jit, static_argnames=("tile_n", "tile_mh"))
def nonlocal_block(x, params, *, tile_n=None, tile_mh=None):
    """x: (B, C, T, H, W) float32 -> (B, C, T, H, W); eval-mode BatchNorm folded."""
    B, C, T, H, W = x.shape
    assert H % 2 == 0 and W % 2 == 0, "MaxPool3d((1,2,2)) needs even H and W"
    Ho, Wo = H // 2, W // 2
    assert Wo % 8 == 0, "copy-free window view assumes W % 16 == 0"
    N = T * H * W
    Ng = T * Ho * Wo
    THo = T * Ho
    Ci = params["wt"].shape[1]

    f32, bf16 = jnp.float32, jnp.bfloat16
    Cp = _round_up(C, 128)
    # 256-multiples fill the 256x256 MXU on v6e/v7x; 128 is enough for tiny Ci.
    Cip = _round_up(Ci, 256) if Ci > 128 else _round_up(Ci, 128)

    vmem = _vmem_budget()
    tn_tgt = 2048 if vmem >= (80 << 20) else (1024 if vmem >= (48 << 20) else 512)
    r_tgt = 512 if vmem >= (48 << 20) else 256
    TN = tile_n if tile_n is not None else _pick_divisor(N, tn_tgt, 8)
    TMH = tile_mh if tile_mh is not None else _pick_divisor(THo, max(1, r_tgt // Wo), 1)
    assert N % TN == 0 and TN % 8 == 0
    assert THo % TMH == 0

    inv_ng = 1.0 / Ng

    def pad2(w, rows, cols, dt):
        w = w.astype(f32)
        return jnp.pad(w, ((0, rows - w.shape[0]), (0, cols - w.shape[1]))).astype(dt)

    def pad1(v, cols, dt=f32):
        return jnp.pad(v.astype(f32), (0, cols - v.shape[0])).reshape(1, cols).astype(dt)

    # Fused [phi | g] projection; 1/Ng folded into the g branch (a positive scale
    # commutes with max-pool); eval-mode BatchNorm folded into the W conv.
    wpg = jnp.concatenate([pad2(params["wp"], Cp, Cip, bf16),
                           pad2(params["wg"] * inv_ng, Cp, Cip, bf16)], axis=1)
    bpg = jnp.concatenate([pad1(params["bp"], Cip),
                           pad1(params["bg"] * inv_ng, Cip)], axis=1)
    # theta weights with the theta bias appended as one extra (8-aligned) row.
    wt_aug = jnp.zeros((Cp + 8, Cip), f32)
    wt_aug = wt_aug.at[:C, :Ci].set(params["wt"].astype(f32))
    wt_aug = wt_aug.at[Cp, :Ci].set(params["bt"].astype(f32))
    wt_aug = wt_aug.astype(bf16)
    ww_f = pad2(params["ww"] * params["bn_scale"][None, :], Cip, C, bf16)
    bw_f = pad1(params["bw"] * params["bn_scale"] + params["bn_shift"], C)

    # One channels-last, channel-padded copy of x; both passes view it via free
    # reshapes (no second "window layout" copy in HBM).
    x_t = jnp.transpose(x, (0, 2, 3, 4, 1))                      # (B,T,H,W,C)
    if Cp != C:
        x_t = jnp.pad(x_t, ((0, 0), (0, 0), (0, 0), (0, 0), (0, Cp - C)))
    x_win = x_t.reshape(B * THo, 2, Wo, 2 * Cp)   # (b*t*ho, h-parity, wo, [w-parity|c])
    x_tok = x_t.reshape(B * N, Cp)                # token-major

    n_i = THo // TMH
    n_j = N // TN

    # ---- pass 1: pooled projections -> S_b -> folded (M_b, bias_b) ----
    m_all, b_all = pl.pallas_call(
        _pool_fold_kernel,
        out_shape=(jax.ShapeDtypeStruct((B, Cp, C), bf16),
                   jax.ShapeDtypeStruct((B, 1, C), f32)),
        grid_spec=pltpu.PrefetchScalarGridSpec(
            num_scalar_prefetch=0,
            grid=(B, n_i),
            in_specs=[
                pl.BlockSpec((TMH, 2, Wo, 2 * Cp), lambda b, i: (b * n_i + i, 0, 0, 0)),
                pl.BlockSpec((Cp, 2 * Cip), lambda b, i: (0, 0)),
                pl.BlockSpec((1, 2 * Cip), lambda b, i: (0, 0)),
                pl.BlockSpec((Cp + 8, Cip), lambda b, i: (0, 0)),
                pl.BlockSpec((Cip, C), lambda b, i: (0, 0)),
                pl.BlockSpec((1, C), lambda b, i: (0, 0)),
            ],
            out_specs=(pl.BlockSpec((1, Cp, C), lambda b, i: (b, 0, 0)),
                       pl.BlockSpec((1, 1, C), lambda b, i: (b, 0, 0))),
            scratch_shapes=[pltpu.VMEM((Cip, Cip), f32)],
        ),
        compiler_params=pltpu.CompilerParams(
            dimension_semantics=("parallel", "arbitrary"),
            vmem_limit_bytes=vmem),
    )(x_win, wpg, bpg, wt_aug, ww_f, bw_f)

    # ---- pass 2: out = x + x @ M_b + bias_b ----
    out_tok = pl.pallas_call(
        _apply_kernel,
        out_shape=jax.ShapeDtypeStruct((B * N, C), x.dtype),
        grid_spec=pltpu.PrefetchScalarGridSpec(
            num_scalar_prefetch=0,
            grid=(B, n_j),
            in_specs=[
                pl.BlockSpec((TN, Cp), lambda b, j: (b * n_j + j, 0)),
                pl.BlockSpec((1, Cp, C), lambda b, j: (b, 0, 0)),
                pl.BlockSpec((1, 1, C), lambda b, j: (b, 0, 0)),
            ],
            out_specs=pl.BlockSpec((TN, C), lambda b, j: (b * n_j + j, 0)),
        ),
        compiler_params=pltpu.CompilerParams(
            dimension_semantics=("parallel", "parallel"),
            vmem_limit_bytes=vmem),
    )(x_tok, m_all, b_all)

    return out_tok.reshape(B, T, H, W, C).transpose(0, 4, 1, 2, 3)


# ---------------------------------------------------------------------------
# Pure-JAX reference replicating the PyTorch forward (for validation).
# ---------------------------------------------------------------------------
def ref_forward(x, params):
    B, C, T, H, W = x.shape

    def conv1(v, w, b):  # pointwise conv, w: (C_in, C_out)
        return jnp.einsum("bcthw,cd->bdthw", v, w) + b[None, :, None, None, None]

    def pool(v):  # MaxPool3d kernel (1,2,2)
        b, ci, t, h, w = v.shape
        return v.reshape(b, ci, t, h // 2, 2, w // 2, 2).max(axis=(4, 6))

    theta = conv1(x, params["wt"], params["bt"])
    phi = pool(conv1(x, params["wp"], params["bp"]))
    g = pool(conv1(x, params["wg"], params["bg"]))
    Ci = theta.shape[1]

    theta_x = theta.reshape(B, Ci, -1).transpose(0, 2, 1)
    phi_x = phi.reshape(B, Ci, -1)
    g_x = g.reshape(B, Ci, -1).transpose(0, 2, 1)

    f = theta_x @ phi_x
    f_div_c = f / f.shape[-1]
    y = f_div_c @ g_x
    y = y.transpose(0, 2, 1).reshape(B, Ci, T, H, W)

    wy = conv1(y, params["ww"], params["bw"])
    wy = (wy * params["bn_scale"][None, :, None, None, None]
          + params["bn_shift"][None, :, None, None, None])
    return wy + x


def make_params(key, in_channels, inter_channels, bn_gamma=None, bn_beta=None):
    C, Ci = in_channels, inter_channels
    ks = jax.random.split(key, 8)
    params = {
        "wt": 0.1 * jax.random.normal(ks[0], (C, Ci), jnp.float32),
        "bt": 0.1 * jax.random.normal(ks[1], (Ci,), jnp.float32),
        "wp": 0.1 * jax.random.normal(ks[2], (C, Ci), jnp.float32),
        "bp": 0.1 * jax.random.normal(ks[3], (Ci,), jnp.float32),
        "wg": 0.1 * jax.random.normal(ks[4], (C, Ci), jnp.float32),
        "bg": 0.1 * jax.random.normal(ks[5], (Ci,), jnp.float32),
        "ww": 0.1 * jax.random.normal(ks[6], (Ci, C), jnp.float32),
        "bw": 0.1 * jax.random.normal(ks[7], (C,), jnp.float32),
    }
    # BatchNorm folded into scale/shift (eval: running_mean=0, running_var=1).
    eps = 1e-5
    gamma = jnp.zeros((C,), jnp.float32) if bn_gamma is None else bn_gamma  # init constant 0
    beta = jnp.zeros((C,), jnp.float32) if bn_beta is None else bn_beta     # init constant 0
    running_mean = jnp.zeros((C,), jnp.float32)
    running_var = jnp.ones((C,), jnp.float32)
    scale = gamma / jnp.sqrt(running_var + eps)
    params["bn_scale"] = scale
    params["bn_shift"] = beta - running_mean * scale
    return params


if __name__ == "__main__":
    key = jax.random.PRNGKey(0)
    kx, kp = jax.random.split(key)

    B, C, T, H, W = 2, 4, 4, 16, 16          # in_channels=4 -> inter_channels=2
    Ci = C // 2
    x = jax.random.normal(kx, (B, C, T, H, W), jnp.float32)

    # Faithful init: the W-branch BatchNorm gamma/beta are zero (as in the PyTorch
    # __init__), so z == x exactly.
    params = make_params(kp, C, Ci)
    z = jax.block_until_ready(nonlocal_block(x, params))
    assert z.shape == x.shape
    assert jnp.allclose(z, ref_forward(x, params), atol=1e-5)
    assert jnp.allclose(z, x, atol=1e-6)     # zero-init BN => exact identity residual

    # Non-zero BN scale/shift exercises the full matmul chain (bf16 MXU operands,
    # f32 accumulation and residual -> compare at bf16-level tolerance).
    params2 = make_params(kp, C, Ci,
                          bn_gamma=jnp.linspace(0.5, 1.5, C, dtype=jnp.float32),
                          bn_beta=jnp.linspace(-0.2, 0.2, C, dtype=jnp.float32))
    z2_ref = ref_forward(x, params2)
    z2 = jax.block_until_ready(nonlocal_block(x, params2))
    assert jnp.allclose(z2, z2_ref, atol=1e-2, rtol=1e-2), \
        float(jnp.max(jnp.abs(z2 - z2_ref)))

    # Force multi-tile grids to exercise cross-tile S accumulation and token tiling.
    z3 = jax.block_until_ready(nonlocal_block(x, params2, tile_n=128, tile_mh=8))
    assert jnp.allclose(z3, z2_ref, atol=1e-2, rtol=1e-2)

    print("KERNEL_OK")
</pallas_src>

<mosaic_0001>
module attributes {stable_mosaic.version = 11 : i64} {
  func.func @_pool_fold_kernel(%arg0: i32, %arg1: i32, %arg2: memref<32x2x8x256xf32, #tpu.memory_space<vmem>>, %arg3: memref<128x256xbf16, #tpu.memory_space<vmem>>, %arg4: memref<1x256xf32, #tpu.memory_space<vmem>>, %arg5: memref<136x128xbf16, #tpu.memory_space<vmem>>, %arg6: memref<128x4xbf16, #tpu.memory_space<vmem>>, %arg7: memref<1x4xf32, #tpu.memory_space<vmem>>, %arg8: memref<1x128x4xbf16, #tpu.memory_space<vmem>>, %arg9: memref<1x1x4xf32, #tpu.memory_space<vmem>>, %arg10: memref<128x128xf32, #tpu.memory_space<vmem>>) attributes {dimension_semantics = [#tpu.dimension_semantics<parallel>, #tpu.dimension_semantics<arbitrary>], iteration_bounds = array<i64: 2, 1>, scalar_prefetch = 0 : i64, scratch_operands = 1 : i64, tpu.core_type = #tpu.core_type<tc>, window_params = [{transform_indices = @transform_0, window_bounds = array<i64: 32, 2, 8, 256>}, {pipeline_mode = #tpu.pipeline_mode<synchronous>, transform_indices = @transform_1, window_bounds = array<i64: 128, 256>}, {pipeline_mode = #tpu.pipeline_mode<synchronous>, transform_indices = @transform_2, window_bounds = array<i64: 1, 256>}, {pipeline_mode = #tpu.pipeline_mode<synchronous>, transform_indices = @transform_3, window_bounds = array<i64: 136, 128>}, {pipeline_mode = #tpu.pipeline_mode<synchronous>, transform_indices = @transform_4, window_bounds = array<i64: 128, 4>}, {pipeline_mode = #tpu.pipeline_mode<synchronous>, transform_indices = @transform_5, window_bounds = array<i64: 1, 4>}, {transform_indices = @transform_6, window_bounds = array<i64: 1, 128, 4>}, {transform_indices = @transform_7, window_bounds = array<i64: 1, 1, 4>}]} {
    %c0_i32 = arith.constant 0 : i32
    %0 = arith.cmpi eq, %arg1, %c0_i32 : i32
    %1 = arith.extui %0 : i1 to i32
    %c0_i32_0 = arith.constant 0 : i32
    %2 = arith.cmpi ne, %1, %c0_i32_0 : i32
    scf.if %2 {
      %cst_34 = arith.constant 0.000000e+00 : f32
      %44 = vector.broadcast %cst_34 : f32 to vector<128x128xf32>
      %c0_35 = arith.constant 0 : index
      %c0_36 = arith.constant 0 : index
      %45 = vector.load %arg10[%c0_35, %c0_36] : memref<128x128xf32, #tpu.memory_space<vmem>>, vector<128x128xf32>
      tpu.vector_store %arg10[%c0_35, %c0_36], %44 {strides = array<i32>} : memref<128x128xf32, #tpu.memory_space<vmem>>, vector<128x128xf32>,
    } else {
    }
    %c0 = arith.constant 0 : index
    %c0_1 = arith.constant 0 : index
    %c0_2 = arith.constant 0 : index
    %c0_3 = arith.constant 0 : index
    %3 = vector.load %arg2[%c0, %c0_1, %c0_2, %c0_3] : memref<32x2x8x256xf32, #tpu.memory_space<vmem>>, vector<32x1x8x128xf32>
    %4 = vector.shape_cast %3 : vector<32x1x8x128xf32> to vector<32x8x128xf32>
    %5 = vector.shape_cast %4 : vector<32x8x128xf32> to vector<256x128xf32>
    %6 = arith.truncf %5 : vector<256x128xf32> to vector<256x128xbf16>
    %c0_4 = arith.constant 0 : index
    %c0_5 = arith.constant 0 : index
    %7 = vector.load %arg3[%c0_4, %c0_5] : memref<128x256xbf16, #tpu.memory_space<vmem>>, vector<128x256xbf16>
    %cst = arith.constant dense<0.000000e+00> : vector<256x256xf32>
    %8 = tpu.matmul %6, %7, %cst {dimension_numbers = #tpu.dot_dimension_numbers<[1], [0], [0], [1], [0, 0, 1, 1], [], []>} : vector<256x128xbf16>, vector<128x256xbf16>, vector<256x256xf32> -> vector<256x256xf32>
    %c0_6 = arith.constant 0 : index
    %c0_7 = arith.constant 0 : index
    %c0_8 = arith.constant 0 : index
    %c128 = arith.constant 128 : index
    %9 = vector.load %arg2[%c0_6, %c0_7, %c0_8, %c128] : memref<32x2x8x256xf32, #tpu.memory_space<vmem>>, vector<32x1x8x128xf32>
    %10 = vector.shape_cast %9 : vector<32x1x8x128xf32> to vector<32x8x128xf32>
    %11 = vector.shape_cast %10 : vector<32x8x128xf32> to vector<256x128xf32>
    %12 = arith.truncf %11 : vector<256x128xf32> to vector<256x128xbf16>
    %c0_9 = arith.constant 0 : index
    %c0_10 = arith.constant 0 : index
    %13 = vector.load %arg3[%c0_9, %c0_10] : memref<128x256xbf16, #tpu.memory_space<vmem>>, vector<128x256xbf16>
    %cst_11 = arith.constant dense<0.000000e+00> : vector<256x256xf32>
    %14 = tpu.matmul %12, %13, %cst_11 {dimension_numbers = #tpu.dot_dimension_numbers<[1], [0], [0], [1], [0, 0, 1, 1], [], []>} : vector<256x128xbf16>, vector<128x256xbf16>, vector<256x256xf32> -> vector<256x256xf32>
    %15 = arith.maximumf %8, %14 : vector<256x256xf32>
    %c0_12 = arith.constant 0 : index
    %c1 = arith.constant 1 : index
    %c0_13 = arith.constant 0 : index
    %c0_14 = arith.constant 0 : index
    %16 = vector.load %arg2[%c0_12, %c1, %c0_13, %c0_14] : memref<32x2x8x256xf32, #tpu.memory_space<vmem>>, vector<32x1x8x128xf32>
    %17 = vector.shape_cast %16 : vector<32x1x8x128xf32> to vector<32x8x128xf32>
    %18 = vector.shape_cast %17 : vector<32x8x128xf32> to vector<256x128xf32>
    %19 = arith.truncf %18 : vector<256x128xf32> to vector<256x128xbf16>
    %c0_15 = arith.constant 0 : index
    %c0_16 = arith.constant 0 : index
    %20 = vector.load %arg3[%c0_15, %c0_16] : memref<128x256xbf16, #tpu.memory_space<vmem>>, vector<128x256xbf16>
    %cst_17 = arith.constant dense<0.000000e+00> : vector<256x256xf32>
    %21 = tpu.matmul %19, %20, %cst_17 {dimension_numbers = #tpu.dot_dimension_numbers<[1], [0], [0], [1], [0, 0, 1, 1], [], []>} : vector<256x128xbf16>, vector<128x256xbf16>, vector<256x256xf32> -> vector<256x256xf32>
    %c0_18 = arith.constant 0 : index
    %c1_19 = arith.constant 1 : index
    %c0_20 = arith.constant 0 : index
    %c128_21 = arith.constant 128 : index
    %22 = vector.load %arg2[%c0_18, %c1_19, %c0_20, %c128_21] : memref<32x2x8x256xf32, #tpu.memory_space<vmem>>, vector<32x1x8x128xf32>
    %23 = vector.shape_cast %22 : vector<32x1x8x128xf32> to vector<32x8x128xf32>
    %24 = vector.shape_cast %23 : vector<32x8x128xf32> to vector<256x128xf32>
    %25 = arith.truncf %24 : vector<256x128xf32> to vector<256x128xbf16>
    %c0_22 = arith.constant 0 : index
    %c0_23 = arith.constant 0 : index
    %26 = vector.load %arg3[%c0_22, %c0_23] : memref<128x256xbf16, #tpu.memory_space<vmem>>, vector<128x256xbf16>
    %cst_24 = arith.constant dense<0.000000e+00> : vector<256x256xf32>
    %27 = tpu.matmul %25, %26, %cst_24 {dimension_numbers = #tpu.dot_dimension_numbers<[1], [0], [0], [1], [0, 0, 1, 1], [], []>} : vector<256x128xbf16>, vector<128x256xbf16>, vector<256x256xf32> -> vector<256x256xf32>
    %28 = arith.maximumf %21, %27 : vector<256x256xf32>
    %29 = arith.maximumf %15, %28 : vector<256x256xf32>
    %c0_25 = arith.constant 0 : index
    %c0_26 = arith.constant 0 : index
    %30 = vector.load %arg4[%c0_25, %c0_26] : memref<1x256xf32, #tpu.memory_space<vmem>>, vector<1x256xf32>
    %31 = vector.broadcast %30 : vector<1x256xf32> to vector<256x256xf32>
    %32 = arith.addf %29, %31 : vector<256x256xf32>
    %33 = vector.extract_strided_slice %32 {offsets = [0, 0], sizes = [256, 128], strides = [1, 1]} : vector<256x256xf32> to vector<256x128xf32>
    %34 = arith.truncf %33 : vector<256x128xf32> to vector<256x128xbf16>
    %35 = vector.extract_strided_slice %32 {offsets = [0, 128], sizes = [256, 128], strides = [1, 1]} : vector<256x256xf32> to vector<256x128xf32>
    %36 = arith.truncf %35 : vector<256x128xf32> to vector<256x128xbf16>
    %c0_27 = arith.constant 0 : index
    %c0_28 = arith.constant 0 : index
    %37 = vector.load %arg10[%c0_27, %c0_28] : memref<128x128xf32, #tpu.memory_space<vmem>>, vector<128x128xf32>
    %cst_29 = arith.constant dense<0.000000e+00> : vector<128x128xf32>
    %38 = tpu.matmul %34, %36, %cst_29 {dimension_numbers = #tpu.dot_dimension_numbers<[0], [0], [1], [1], [0, 1, 1, 1], [], []>} : vector<256x128xbf16>, vector<256x128xbf16>, vector<128x128xf32> -> vector<128x128xf32>
    %39 = arith.addf %37, %38 : vector<128x128xf32>
    %c0_30 = arith.constant 0 : index
    %c0_31 = arith.constant 0 : index
    %40 = vector.load %arg10[%c0_30, %c0_31] : memref<128x128xf32, #tpu.memory_space<vmem>>, vector<128x128xf32>
    tpu.vector_store %arg10[%c0_30, %c0_31], %39 {strides = array<i32>} : memref<128x128xf32, #tpu.memory_space<vmem>>, vector<128x128xf32>,
    %c0_i32_32 = arith.constant 0 : i32
    %41 = arith.cmpi eq, %arg1, %c0_i32_32 : i32
    %42 = arith.extui %41 : i1 to i32
    %c0_i32_33 = arith.constant 0 : i32
    %43 = arith.cmpi ne, %42, %c0_i32_33 : i32
    scf.if %43 {
      %c0_34 = arith.constant 0 : index
      %c0_35 = arith.constant 0 : index
      %44 = vector.load %arg10[%c0_34, %c0_35] : memref<128x128xf32, #tpu.memory_space<vmem>>, vector<128x128xf32>
      %45 = arith.truncf %44 : vector<128x128xf32> to vector<128x128xbf16>
      %c0_36 = arith.constant 0 : index
      %c0_37 = arith.constant 0 : index
      %46 = vector.load %arg6[%c0_36, %c0_37] : memref<128x4xbf16, #tpu.memory_space<vmem>>, vector<128x4xbf16>
      %cst_38 = arith.constant dense<0.000000e+00> : vector<128x4xf32>
      %47 = tpu.matmul %45, %46, %cst_38 {dimension_numbers = #tpu.dot_dimension_numbers<[1], [0], [0], [1], [0, 0, 1, 1], [], []>} : vector<128x128xbf16>, vector<128x4xbf16>, vector<128x4xf32> -> vector<128x4xf32>
      %48 = arith.truncf %47 : vector<128x4xf32> to vector<128x4xbf16>
      %c0_39 = arith.constant 0 : index
      %c0_40 = arith.constant 0 : index
      %49 = vector.load %arg5[%c0_39, %c0_40] : memref<136x128xbf16, #tpu.memory_space<vmem>>, vector<136x128xbf16>
      %cst_41 = arith.constant dense<0.000000e+00> : vector<136x4xf32>
      %50 = tpu.matmul %49, %48, %cst_41 {dimension_numbers = #tpu.dot_dimension_numbers<[1], [0], [0], [1], [0, 0, 1, 1], [], []>} : vector<136x128xbf16>, vector<128x4xbf16>, vector<136x4xf32> -> vector<136x4xf32>
      %51 = vector.extract_strided_slice %50 {offsets = [0, 0], sizes = [128, 4], strides = [1, 1]} : vector<136x4xf32> to vector<128x4xf32>
      %52 = arith.truncf %51 : vector<128x4xf32> to vector<128x4xbf16>
      %c0_42 = arith.constant 0 : index
      %c0_43 = arith.constant 0 : index
      %c0_44 = arith.constant 0 : index
      %53 = vector.load %arg8[%c0_42, %c0_43, %c0_44] : memref<1x128x4xbf16, #tpu.memory_space<vmem>>, vector<1x128x4xbf16>
      %54 = vector.shape_cast %53 : vector<1x128x4xbf16> to vector<128x4xbf16>
      %55 = vector.shape_cast %52 : vector<128x4xbf16> to vector<1x128x4xbf16>
      tpu.vector_store %arg8[%c0_42, %c0_43, %c0_44], %55 {strides = array<i32>} : memref<1x128x4xbf16, #tpu.memory_space<vmem>>, vector<1x128x4xbf16>,
      %56 = vector.extract_strided_slice %50 {offsets = [128, 0], sizes = [1, 4], strides = [1, 1]} : vector<136x4xf32> to vector<1x4xf32>
      %c0_45 = arith.constant 0 : index
      %c0_46 = arith.constant 0 : index
      %57 = vector.load %arg7[%c0_45, %c0_46] : memref<1x4xf32, #tpu.memory_space<vmem>>, vector<1x4xf32>
      %58 = arith.addf %56, %57 : vector<1x4xf32>
      %c0_47 = arith.constant 0 : index
      %c0_48 = arith.constant 0 : index
      %c0_49 = arith.constant 0 : index
      %59 = vector.load %arg9[%c0_47, %c0_48, %c0_49] : memref<1x1x4xf32, #tpu.memory_space<vmem>>, vector<1x1x4xf32>
      %60 = vector.shape_cast %59 : vector<1x1x4xf32> to vector<1x4xf32>
      %61 = vector.shape_cast %58 : vector<1x4xf32> to vector<1x1x4xf32>
      tpu.vector_store %arg9[%c0_47, %c0_48, %c0_49], %61 {strides = array<i32>} : memref<1x1x4xf32, #tpu.memory_space<vmem>>, vector<1x1x4xf32>,
    } else {
    }
    return
  }
  func.func @transform_0(%arg0: i32, %arg1: i32) -> (i32, i32, i32, i32) {
    %c1_i32 = arith.constant 1 : i32
    %0 = arith.muli %arg0, %c1_i32 : i32
    %1 = arith.addi %0, %arg1 : i32
    %c0_i32 = arith.constant 0 : i32
    %c0_i32_0 = arith.constant 0 : i32
    %c0_i32_1 = arith.constant 0 : i32
    %c0_i32_2 = arith.constant 0 : i32
    return %1, %c0_i32, %c0_i32_0, %c0_i32_1 : i32, i32, i32, i32
  }
  func.func @transform_1(%arg0: i32, %arg1: i32) -> (i32, i32) {
    %c0_i32 = arith.constant 0 : i32
    %c0_i32_0 = arith.constant 0 : i32
    %c0_i32_1 = arith.constant 0 : i32
    return %c0_i32, %c0_i32_0 : i32, i32
  }
  func.func @transform_2(%arg0: i32, %arg1: i32) -> (i32, i32) {
    %c0_i32 = arith.constant 0 : i32
    %c0_i32_0 = arith.constant 0 : i32
    %c0_i32_1 = arith.constant 0 : i32
    return %c0_i32, %c0_i32_0 : i32, i32
  }
  func.func @transform_3(%arg0: i32, %arg1: i32) -> (i32, i32) {
    %c0_i32 = arith.constant 0 : i32
    %c0_i32_0 = arith.constant 0 : i32
    %c0_i32_1 = arith.constant 0 : i32
    return %c0_i32, %c0_i32_0 : i32, i32
  }
  func.func @transform_4(%arg0: i32, %arg1: i32) -> (i32, i32) {
    %c0_i32 = arith.constant 0 : i32
    %c0_i32_0 = arith.constant 0 : i32
    %c0_i32_1 = arith.constant 0 : i32
    return %c0_i32, %c0_i32_0 : i32, i32
  }
  func.func @transform_5(%arg0: i32, %arg1: i32) -> (i32, i32) {
    %c0_i32 = arith.constant 0 : i32
    %c0_i32_0 = arith.constant 0 : i32
    %c0_i32_1 = arith.constant 0 : i32
    return %c0_i32, %c0_i32_0 : i32, i32
  }
  func.func @transform_6(%arg0: i32, %arg1: i32) -> (i32, i32, i32) {
    %c0_i32 = arith.constant 0 : i32
    %c0_i32_0 = arith.constant 0 : i32
    %c0_i32_1 = arith.constant 0 : i32
    return %arg0, %c0_i32, %c0_i32_0 : i32, i32, i32
  }
  func.func @transform_7(%arg0: i32, %arg1: i32) -> (i32, i32, i32) {
    %c0_i32 = arith.constant 0 : i32
    %c0_i32_0 = arith.constant 0 : i32
    %c0_i32_1 = arith.constant 0 : i32
    return %arg0, %c0_i32, %c0_i32_0 : i32, i32, i32
  }
}

module attributes {stable_mosaic.version = 11 : i64} {
  func.func @_apply_kernel(%arg0: i32, %arg1: i32, %arg2: memref<512x128xf32, #tpu.memory_space<vmem>>, %arg3: memref<1x128x4xbf16, #tpu.memory_space<vmem>>, %arg4: memref<1x1x4xf32, #tpu.memory_space<vmem>>, %arg5: memref<512x4xf32, #tpu.memory_space<vmem>>) attributes {dimension_semantics = [#tpu.dimension_semantics<parallel>, #tpu.dimension_semantics<parallel>], iteration_bounds = array<i64: 2, 2>, scalar_prefetch = 0 : i64, scratch_operands = 0 : i64, tpu.core_type = #tpu.core_type<tc>, window_params = [{transform_indices = @transform_0, window_bounds = array<i64: 512, 128>}, {transform_indices = @transform_1, window_bounds = array<i64: 1, 128, 4>}, {transform_indices = @transform_2, window_bounds = array<i64: 1, 1, 4>}, {transform_indices = @transform_3, window_bounds = array<i64: 512, 4>}]} {
    %c0 = arith.constant 0 : index
    %c0_0 = arith.constant 0 : index
    %0 = vector.load %arg2[%c0, %c0_0] : memref<512x128xf32, #tpu.memory_space<vmem>>, vector<512x128xf32>
    %1 = arith.truncf %0 : vector<512x128xf32> to vector<512x128xbf16>
    %c0_1 = arith.constant 0 : index
    %c0_2 = arith.constant 0 : index
    %c0_3 = arith.constant 0 : index
    %2 = vector.load %arg3[%c0_1, %c0_2, %c0_3] : memref<1x128x4xbf16, #tpu.memory_space<vmem>>, vector<1x128x4xbf16>
    %3 = vector.shape_cast %2 : vector<1x128x4xbf16> to vector<128x4xbf16>
    %cst = arith.constant dense<0.000000e+00> : vector<512x4xf32>
    %4 = tpu.matmul %1, %3, %cst {dimension_numbers = #tpu.dot_dimension_numbers<[1], [0], [0], [1], [0, 0, 1, 1], [], []>} : vector<512x128xbf16>, vector<128x4xbf16>, vector<512x4xf32> -> vector<512x4xf32>
    %c0_4 = arith.constant 0 : index
    %c0_5 = arith.constant 0 : index
    %c0_6 = arith.constant 0 : index
    %5 = vector.load %arg4[%c0_4, %c0_5, %c0_6] : memref<1x1x4xf32, #tpu.memory_space<vmem>>, vector<1x1x4xf32>
    %6 = vector.shape_cast %5 : vector<1x1x4xf32> to vector<1x4xf32>
    %7 = vector.broadcast %6 : vector<1x4xf32> to vector<512x4xf32>
    %8 = arith.addf %4, %7 : vector<512x4xf32>
    %9 = vector.extract_strided_slice %0 {offsets = [0, 0], sizes = [512, 4], strides = [1, 1]} : vector<512x128xf32> to vector<512x4xf32>
    %10 = arith.addf %8, %9 : vector<512x4xf32>
    %c0_7 = arith.constant 0 : index
    %c0_8 = arith.constant 0 : index
    %11 = vector.load %arg5[%c0_7, %c0_8] : memref<512x4xf32, #tpu.memory_space<vmem>>, vector<512x4xf32>
    tpu.vector_store %arg5[%c0_7, %c0_8], %10 {strides = array<i32>} : memref<512x4xf32, #tpu.memory_space<vmem>>, vector<512x4xf32>,
    return
  }
  func.func @transform_0(%arg0: i32, %arg1: i32) -> (i32, i32) {
    %c2_i32 = arith.constant 2 : i32
    %0 = arith.muli %arg0, %c2_i32 : i32
    %1 = arith.addi %0, %arg1 : i32
    %c0_i32 = arith.constant 0 : i32
    %c0_i32_0 = arith.constant 0 : i32
    return %1, %c0_i32 : i32, i32
  }
  func.func @transform_1(%arg0: i32, %arg1: i32) -> (i32, i32, i32) {
    %c0_i32 = arith.constant 0 : i32
    %c0_i32_0 = arith.constant 0 : i32
    %c0_i32_1 = arith.constant 0 : i32
    return %arg0, %c0_i32, %c0_i32_0 : i32, i32, i32
  }
  func.func @transform_2(%arg0: i32, %arg1: i32) -> (i32, i32, i32) {
    %c0_i32 = arith.constant 0 : i32
    %c0_i32_0 = arith.constant 0 : i32
    %c0_i32_1 = arith.constant 0 : i32
    return %arg0, %c0_i32, %c0_i32_0 : i32, i32, i32
  }
  func.func @transform_3(%arg0: i32, %arg1: i32) -> (i32, i32) {
    %c2_i32 = arith.constant 2 : i32
    %0 = arith.muli %arg0, %c2_i32 : i32
    %1 = arith.addi %0, %arg1 : i32
    %c0_i32 = arith.constant 0 : i32
    %c0_i32_0 = arith.constant 0 : i32
    return %1, %c0_i32 : i32, i32
  }
}

</mosaic_0001>

<llo_original>
// kernel: nonlocal_block.3
$region0: #{nonlocal_block.3}
  #allocation0 [shape = 'u32[]', space=smem, size = 0x4, offset = 0x4, fixed_abs, tag = 'smem constant byte address 0x4 - core index']
  #allocation1 [shape = 'u32[144,128]{1,0:T(1,128)}', space=vmem, size = 0x12000, scoped, tag = 'internal scratch']
  %s0 = inlined_call_operand.vmem [shape: f32[2048,128], index: 0, kind: input, shape index: {}]
  %s1 = inlined_call_operand.vmem [shape: bf16[2,128,4], index: 1, kind: input, shape index: {}]
  %s2 = inlined_call_operand.vmem [shape: f32[2,1,4], index: 2, kind: input, shape index: {}]
  %s3 = inlined_call_operand.vmem [shape: f32[2048,4], index: 3, kind: output, shape index: {}]
  %s4 = sld [smem:[#allocation0]]
  $region45: #{nonlocal_block.3} parent=0
    _
  %s6 = ssub.s32 1, %s4
  %s7 = scalar_select 0, %s6, %s4
  loop: start=0, step=1, limit=6
  $region2: #{nonlocal_block.3} parent=0 // loop_pre_header
    _
  $region3: #{nonlocal_block.3} parent=0 // loop_header
    %s9 = sphi 0, %s13
    %p10 = scmp.ge.s32.totalorder %s9, 6
    %s16 = sphi 0, %s28
    %s17 = sphi 0, %s24
    %s18 = sphi 0, %s16
    %s19 = sphi 0, %s17
    %s20 = sphi 0, %s18
    %s21 = sphi 0, %s19
    %s35 = sphi 0, %s37
    %s38 = sphi 0, %s35
    %s39 = sphi 0, %s38
    %s55 = sphi 0, %s39
    %s61 = sphi 0, %s63
    %s64 = sphi 0, %s61
    %s65 = sphi 0, %s64
    %s81 = sphi 0, %s65
    %s87 = sphi 0, %s89
    %s90 = sphi 0, %s87
    %s91 = sphi 0, %s90
    %s107 = sphi 0, %s91
    %s117 = sphi 0, %s119
    %s120 = sphi 0, %s117
    %s121 = sphi 0, %s120
    %s137 = sphi 0, %s121
  $region4: #{nonlocal_block.3} parent=0 // loop_header_branch
    %12 = sbr.rel (%p10) target = $region8
  $region5: #{nonlocal_block.3} parent=0 // loop_body
    %s14 = ssub.s32 %s9, 1
    %s15 = ssub.s32 %s9, 2
    %s22 = sadd.s32 1, %s17
    %p23 = scmp.ge.s32.totalorder %s22, 2
    %s24 = scalar_select %p23, 0, %s22
    %s25 = sadd.s32 1, %s16
    %s26 = scalar_select %p23, %s25, %s16
    %p27 = scmp.ge.s32.totalorder %s26, 2
    %s28 = scalar_select %p27, 0, %s26
    %s29 = smul.u32 %s16, 2
    %s30 = sadd.s32 %s29, %s17
    %s31 = smul.u32 %s28, 2
    %s32 = sadd.s32 %s31, %s24
    %s33 = ssub.s32 %s30, %s32
    %p34 = scmp.eq.s32.totalorder %s33, 0
    %s36 = sadd.s32 %s35, 1
    %s37 = scalar_select %p34, %s35, %s36
    %p40 = pneg %p34
    %p41 = scmp.eq.s32.totalorder %s9, 3
    %p42 = por %p40, %p41
    %p43 = scmp.ne.s32.totalorder %s35, %s38
    %p44 = scmp.eq.s32.totalorder %s9, 0
    %p45 = por %p43, %p44
    %p46 = scmp.ne.s32.totalorder %s35, %s38
    %p47 = scmp.eq.s32.totalorder %s14, 3
    %p48 = por %p46, %p47
    %p49 = scmp.ne.s32.totalorder %s38, %s39
    %p50 = scmp.eq.s32.totalorder %s14, 0
    %p51 = por %p49, %p50
    %p52 = scmp.ne.s32.totalorder %s38, %s39
    %p53 = scmp.eq.s32.totalorder %s15, 3
    %p54 = por %p52, %p53
    %p56 = scmp.ne.s32.totalorder %s39, %s55
    %p57 = scmp.eq.s32.totalorder %s15, 0
    %p58 = por %p56, %p57
    %s59 = ssub.s32 %s16, %s28
    %p60 = scmp.eq.s32.totalorder %s59, 0
    %s62 = sadd.s32 %s61, 1
    %s63 = scalar_select %p60, %s61, %s62
    %p66 = pneg %p60
    %p67 = scmp.eq.s32.totalorder %s9, 3
    %p68 = por %p66, %p67
    %p69 = scmp.ne.s32.totalorder %s61, %s64
    %p70 = scmp.eq.s32.totalorder %s9, 0
    %p71 = por %p69, %p70
    %p72 = scmp.ne.s32.totalorder %s61, %s64
    %p73 = scmp.eq.s32.totalorder %s14, 3
    %p74 = por %p72, %p73
    %p75 = scmp.ne.s32.totalorder %s64, %s65
    %p76 = scmp.eq.s32.totalorder %s14, 0
    %p77 = por %p75, %p76
    %p78 = scmp.ne.s32.totalorder %s64, %s65
    %p79 = scmp.eq.s32.totalorder %s15, 3
    %p80 = por %p78, %p79
    %p82 = scmp.ne.s32.totalorder %s65, %s81
    %p83 = scmp.eq.s32.totalorder %s15, 0
    %p84 = por %p82, %p83
    %s85 = ssub.s32 %s16, %s28
    %p86 = scmp.eq.s32.totalorder %s85, 0
    %s88 = sadd.s32 %s87, 1
    %s89 = scalar_select %p86, %s87, %s88
    %p92 = pneg %p86
    %p93 = scmp.eq.s32.totalorder %s9, 3
    %p94 = por %p92, %p93
    %p95 = scmp.ne.s32.totalorder %s87, %s90
    %p96 = scmp.eq.s32.totalorder %s9, 0
    %p97 = por %p95, %p96
    %p98 = scmp.ne.s32.totalorder %s87, %s90
    %p99 = scmp.eq.s32.totalorder %s14, 3
    %p100 = por %p98, %p99
    %p101 = scmp.ne.s32.totalorder %s90, %s91
    %p102 = scmp.eq.s32.totalorder %s14, 0
    %p103 = por %p101, %p102
    %p104 = scmp.ne.s32.totalorder %s90, %s91
    %p105 = scmp.eq.s32.totalorder %s15, 3
    %p106 = por %p104, %p105
    %p108 = scmp.ne.s32.totalorder %s91, %s107
    %p109 = scmp.eq.s32.totalorder %s15, 0
    %p110 = por %p108, %p109
    %s111 = smul.u32 %s16, 2
    %s112 = sadd.s32 %s111, %s17
    %s113 = smul.u32 %s28, 2
    %s114 = sadd.s32 %s113, %s24
    %s115 = ssub.s32 %s112, %s114
    %p116 = scmp.eq.s32.totalorder %s115, 0
    %s118 = sadd.s32 %s117, 1
    %s119 = scalar_select %p116, %s117, %s118
    %p122 = pneg %p116
    %p123 = scmp.eq.s32.totalorder %s9, 3
    %p124 = por %p122, %p123
    %p125 = scmp.ne.s32.totalorder %s117, %s120
    %p126 = scmp.eq.s32.totalorder %s9, 0
    %p127 = por %p125, %p126
    %p128 = scmp.ne.s32.totalorder %s117, %s120
    %p129 = scmp.eq.s32.totalorder %s14, 3
    %p130 = por %p128, %p129
    %p131 = scmp.ne.s32.totalorder %s120, %s121
    %p132 = scmp.eq.s32.totalorder %s14, 0
    %p133 = por %p131, %p132
    %p134 = scmp.ne.s32.totalorder %s120, %s121
    %p135 = scmp.eq.s32.totalorder %s15, 3
    %p136 = por %p134, %p135
    %p138 = scmp.ne.s32.totalorder %s121, %s137
    %p139 = scmp.eq.s32.totalorder %s15, 0
    %p140 = por %p138, %p139
    %p141 = scmp.le.s32.totalorder 1, %s9
    %p142 = scmp.lt.s32.totalorder %s9, 5
    %p143 = pnand %p141, %p142
    %p144 = pneg %p143
    // Predicated region
    $region9: #{nonlocal_block.3} parent=5 // pred_check
      _
    $region10: #{nonlocal_block.3} parent=5 // pred_check_branch
      %146 = sbr.rel (%p143) target = $region12
    $region11: #{nonlocal_block.3} parent=5 // pred_region
      %s147 = ssub.s32 %s9, 1
    $region12: #{nonlocal_block.3} parent=5 // pred_fallthru
      _
    %p148 = scmp.lt.s32.totalorder %s9, 4
    // Predicated region
    $region13: #{nonlocal_block.3} parent=5 // pred_check
      %p149 = pneg %p148
    $region14: #{nonlocal_block.3} parent=5 // pred_check_branch
      %151 = sbr.rel (%p149) target = $region16
    $region15: #{nonlocal_block.3} parent=5 // pred_region
      // Predicated region
      $region17: #{nonlocal_block.3} parent=15 // pred_check
        %p152 = pneg %p45
      $region18: #{nonlocal_block.3} parent=15 // pred_check_branch
        %154 = sbr.rel (%p152) target = $region20
      $region19: #{nonlocal_block.3} parent=15 // pred_region
        %s155 = smul.u32 %s16, 2
        %s156 = sadd.s32 %s155, %s17
        %s157 = smul.u32 64, %s156
        %p158 = scmp.lt.s32.totalorder %s157, 255
        %s159 = scalar_select %p158, %s157, 255
        %s160 = smul.addr %s159, 8
        %s161 = scalar_lea.vmem %s0, %s160
        %s162 = smul.u32 %s16, 2
        %s163 = sadd.s32 %s162, %s17
        %s164 = smul.u32 64, %s163
      $region20: #{nonlocal_block.3} parent=15 // pred_fallthru
        _
      // Predicated region
      $region21: #{nonlocal_block.3} parent=15 // pred_check
        %p165 = pneg %p71
      $region22: #{nonlocal_block.3} parent=15 // pred_check_branch
        %167 = sbr.rel (%p165) target = $region24
      $region23: #{nonlocal_block.3} parent=15 // pred_region
        %p168 = scmp.lt.s32.totalorder %s16, 1
        %s169 = scalar_select %p168, %s16, 1
        %s170 = smul.addr %s169, 16
        %s171 = smul.addr %s170, 4
        %s172 = scalar_lea.vmem %s1, %s171
      $region24: #{nonlocal_block.3} parent=15 // pred_fallthru
        _
      // Predicated region
      $region25: #{nonlocal_block.3} parent=15 // pred_check
        %p173 = pneg %p97
      $region26: #{nonlocal_block.3} parent=15 // pred_check_branch
        %175 = sbr.rel (%p173) target = $region28
      $region27: #{nonlocal_block.3} parent=15 // pred_region
        %p176 = scmp.lt.s32.totalorder %s16, 1
        %s177 = scalar_select %p176, %s16, 1
        %s178 = scalar_lea.vmem %s2, %s177
      $region28: #{nonlocal_block.3} parent=15 // pred_fallthru
        _
    $region16: #{nonlocal_block.3} parent=5 // pred_fallthru
      _
    %p179 = scmp.le.s32.totalorder 1, %s9
    %p180 = scmp.lt.s32.totalorder %s9, 5
    %p181 = pnand %p179, %p180
    %p182 = pneg %p181
    // Predicated region
    $region29: #{nonlocal_block.3} parent=5 // pred_check
      _
    $region30: #{nonlocal_block.3} parent=5 // pred_check_branch
      %184 = sbr.rel (%p181) target = $region32
    $region31: #{nonlocal_block.3} parent=5 // pred_region
      %s185 = ssub.s32 %s9, 1
      %s186 = smul.u32 %s18, 2
      %s187 = sadd.s32 %s186, %s19
      %s188 = smul.u32 64, %s187
      %p189 = scmp.lt.s32.totalorder %s188, 255
      %s190 = scalar_select %p189, %s188, 255
      %s191 = smul.addr %s190, 8
      %s192 = scalar_lea.vmem %s0, %s191
      %p193 = pneg %p51
      %p194 = pneg %p48
      %p195 = scmp.lt.s32.totalorder %s18, 1
      %s196 = scalar_select %p195, %s18, 1
      %s197 = smul.addr %s196, 16
      %s198 = smul.addr %s197, 4
      %s199 = scalar_lea.vmem %s1, %s198
      %p200 = pneg %p77
      %p201 = pneg %p74
      %p202 = scmp.lt.s32.totalorder %s18, 1
      %s203 = scalar_select %p202, %s18, 1
      %s204 = scalar_lea.vmem %s2, %s203
      %p205 = pneg %p103
      %p206 = pneg %p100
      %p207 = pneg %p133
      %p208 = pneg %p130
      %s209 = smul.u32 %s18, 2
      %s210 = sadd.s32 %s209, %s19
      %s211 = smul.u32 64, %s210
      %p212 = scmp.lt.s32.totalorder %s211, 255
      %s213 = scalar_select %p212, %s211, 255
      %s214 = smul.addr %s213, 8
      %s215 = scalar_lea.vmem %s3, %s214
      %s216 = smul.u32 %s18, 2
      %s217 = sadd.s32 %s216, %s19
      %s218 = smul.u32 64, %s217
      %p219 = scmp.lt.s32.totalorder %s218, 255
      %s220 = scalar_select %p219, %s218, 255
      %s221 = smul.addr %s220, 8
      %s222 = scalar_lea.vmem %s0, %s221
      %s223 = smul.u32 %s18, 2
      %s224 = sadd.s32 %s223, %s19
      %s225 = smul.u32 64, %s224
      %p226 = scmp.lt.s32.totalorder %s18, 1
      %s227 = scalar_select %p226, %s18, 1
      %s228 = smul.addr %s227, 16
      %s229 = smul.addr %s228, 4
      %s230 = scalar_lea.vmem %s1, %s229
      %p231 = scmp.lt.s32.totalorder %s18, 1
      %s232 = scalar_select %p231, %s18, 1
      %s233 = scalar_lea.vmem %s2, %s232
      %s234 = smul.u32 %s18, 2
      %s235 = sadd.s32 %s234, %s19
      %s236 = smul.u32 64, %s235
      %p237 = scmp.lt.s32.totalorder %s236, 255
      %s238 = scalar_select %p237, %s236, 255
      %s239 = smul.addr %s238, 8
      %s240 = scalar_lea.vmem %s3, %s239
      %s241 = smul.u32 %s18, 2
      %s242 = sadd.s32 %s241, %s19
      %s243 = smul.u32 64, %s242
      %v245 = vld [vmem:[%s222] sm:$0xff]
      %v246 = vld [vmem:[%s222 + $0x8] sm:$0xff]
      %v247 = vld [vmem:[%s222 + $0x10] sm:$0xff]
      %v248 = vld [vmem:[%s222 + $0x18] sm:$0xff]
      %v249 = vld [vmem:[%s222 + $0x20] sm:$0xff]
      %v250 = vld [vmem:[%s222 + $0x28] sm:$0xff]
      %v251 = vld [vmem:[%s222 + $0x30] sm:$0xff]
      %v252 = vld [vmem:[%s222 + $0x38] sm:$0xff]
      %v253 = vld [vmem:[%s222 + $0x40] sm:$0xff]
      %v254 = vld [vmem:[%s222 + $0x48] sm:$0xff]
      %v255 = vld [vmem:[%s222 + $0x50] sm:$0xff]
      %v256 = vld [vmem:[%s222 + $0x58] sm:$0xff]
      %v257 = vld [vmem:[%s222 + $0x60] sm:$0xff]
      %v258 = vld [vmem:[%s222 + $0x68] sm:$0xff]
      %v259 = vld [vmem:[%s222 + $0x70] sm:$0xff]
      %v260 = vld [vmem:[%s222 + $0x78] sm:$0xff]
      %v261 = vld [vmem:[%s222 + $0x80] sm:$0xff]
      %v262 = vld [vmem:[%s222 + $0x88] sm:$0xff]
      %v263 = vld [vmem:[%s222 + $0x90] sm:$0xff]
      %v264 = vld [vmem:[%s222 + $0x98] sm:$0xff]
      %v265 = vld [vmem:[%s222 + $0xa0] sm:$0xff]
      %v266 = vld [vmem:[%s222 + $0xa8] sm:$0xff]
      %v267 = vld [vmem:[%s222 + $0xb0] sm:$0xff]
      %v268 = vld [vmem:[%s222 + $0xb8] sm:$0xff]
      %v269 = vld [vmem:[%s222 + $0xc0] sm:$0xff]
      %v270 = vld [vmem:[%s222 + $0xc8] sm:$0xff]
      %v271 = vld [vmem:[%s222 + $0xd0] sm:$0xff]
      %v272 = vld [vmem:[%s222 + $0xd8] sm:$0xff]
      %v273 = vld [vmem:[%s222 + $0xe0] sm:$0xff]
      %v274 = vld [vmem:[%s222 + $0xe8] sm:$0xff]
      %v275 = vld [vmem:[%s222 + $0xf0] sm:$0xff]
      %v276 = vld [vmem:[%s222 + $0xf8] sm:$0xff]
      %v277 = vld [vmem:[%s222 + $0x100] sm:$0xff]
      %v278 = vld [vmem:[%s222 + $0x108] sm:$0xff]
      %v279 = vld [vmem:[%s222 + $0x110] sm:$0xff]
      %v280 = vld [vmem:[%s222 + $0x118] sm:$0xff]
      %v281 = vld [vmem:[%s222 + $0x120] sm:$0xff]
      %v282 = vld [vmem:[%s222 + $0x128] sm:$0xff]
      %v283 = vld [vmem:[%s222 + $0x130] sm:$0xff]
      %v284 = vld [vmem:[%s222 + $0x138] sm:$0xff]
      %v285 = vld [vmem:[%s222 + $0x140] sm:$0xff]
      %v286 = vld [vmem:[%s222 + $0x148] sm:$0xff]
      %v287 = vld [vmem:[%s222 + $0x150] sm:$0xff]
      %v288 = vld [vmem:[%s222 + $0x158] sm:$0xff]
      %v289 = vld [vmem:[%s222 + $0x160] sm:$0xff]
      %v290 = vld [vmem:[%s222 + $0x168] sm:$0xff]
      %v291 = vld [vmem:[%s222 + $0x170] sm:$0xff]
      %v292 = vld [vmem:[%s222 + $0x178] sm:$0xff]
      %v293 = vld [vmem:[%s222 + $0x180] sm:$0xff]
      %v294 = vld [vmem:[%s222 + $0x188] sm:$0xff]
      %v295 = vld [vmem:[%s222 + $0x190] sm:$0xff]
      %v296 = vld [vmem:[%s222 + $0x198] sm:$0xff]
      %v297 = vld [vmem:[%s222 + $0x1a0] sm:$0xff]
      %v298 = vld [vmem:[%s222 + $0x1a8] sm:$0xff]
      %v299 = vld [vmem:[%s222 + $0x1b0] sm:$0xff]
      %v300 = vld [vmem:[%s222 + $0x1b8] sm:$0xff]
      %v301 = vld [vmem:[%s222 + $0x1c0] sm:$0xff]
      %v302 = vld [vmem:[%s222 + $0x1c8] sm:$0xff]
      %v303 = vld [vmem:[%s222 + $0x1d0] sm:$0xff]
      %v304 = vld [vmem:[%s222 + $0x1d8] sm:$0xff]
      %v305 = vld [vmem:[%s222 + $0x1e0] sm:$0xff]
      %v306 = vld [vmem:[%s222 + $0x1e8] sm:$0xff]
      %v307 = vld [vmem:[%s222 + $0x1f0] sm:$0xff]
      %v308 = vld [vmem:[%s222 + $0x1f8] sm:$0xff]
      %v309 = vpack.c.bf16 %v246, %v245
      %v310 = vpack.c.bf16 %v248, %v247
      %v311 = vpack.c.bf16 %v250, %v249
      %v312 = vpack.c.bf16 %v252, %v251
      %v313 = vpack.c.bf16 %v254, %v253
      %v314 = vpack.c.bf16 %v256, %v255
      %v315 = vpack.c.bf16 %v258, %v257
      %v316 = vpack.c.bf16 %v260, %v259
      %v317 = vpack.c.bf16 %v262, %v261
      %v318 = vpack.c.bf16 %v264, %v263
      %v319 = vpack.c.bf16 %v266, %v265
      %v320 = vpack.c.bf16 %v268, %v267
      %v321 = vpack.c.bf16 %v270, %v269
      %v322 = vpack.c.bf16 %v272, %v271
      %v323 = vpack.c.bf16 %v274, %v273
      %v324 = vpack.c.bf16 %v276, %v275
      %v325 = vpack.c.bf16 %v278, %v277
      %v326 = vpack.c.bf16 %v280, %v279
      %v327 = vpack.c.bf16 %v282, %v281
      %v328 = vpack.c.bf16 %v284, %v283
      %v329 = vpack.c.bf16 %v286, %v285
      %v330 = vpack.c.bf16 %v288, %v287
      %v331 = vpack.c.bf16 %v290, %v289
      %v332 = vpack.c.bf16 %v292, %v291
      %v333 = vpack.c.bf16 %v294, %v293
      %v334 = vpack.c.bf16 %v296, %v295
      %v335 = vpack.c.bf16 %v298, %v297
      %v336 = vpack.c.bf16 %v300, %v299
      %v337 = vpack.c.bf16 %v302, %v301
      %v338 = vpack.c.bf16 %v304, %v303
      %v339 = vpack.c.bf16 %v306, %v305
      %v340 = vpack.c.bf16 %v308, %v307
      %v341 = vld [vmem:[%s230] sm:$0xf]
      %v342 = vld [vmem:[%s230 + $0x4] sm:$0xf]
      %v343 = vld [vmem:[%s230 + $0x8] sm:$0xf]
      %v344 = vld [vmem:[%s230 + $0xc] sm:$0xf]
      %v345 = vld [vmem:[%s230 + $0x10] sm:$0xf]
      %v346 = vld [vmem:[%s230 + $0x14] sm:$0xf]
      %v347 = vld [vmem:[%s230 + $0x18] sm:$0xf]
      %v348 = vld [vmem:[%s230 + $0x1c] sm:$0xf]
      %v349 = vld [vmem:[%s230 + $0x20] sm:$0xf]
      %v350 = vld [vmem:[%s230 + $0x24] sm:$0xf]
      %v351 = vld [vmem:[%s230 + $0x28] sm:$0xf]
      %v352 = vld [vmem:[%s230 + $0x2c] sm:$0xf]
      %v353 = vld [vmem:[%s230 + $0x30] sm:$0xf]
      %v354 = vld [vmem:[%s230 + $0x34] sm:$0xf]
      %v355 = vld [vmem:[%s230 + $0x38] sm:$0xf]
      %v356 = vld [vmem:[%s230 + $0x3c] sm:$0xf]
      %v357 = vld [vmem:[%s233] sm:$0x1]
      %v359 = vlaneseq
      %v360 = vshrl.u32 %v359, 7
      %v361 = vsub.s32 0, %v360
      %v362 = vrot.slane %v357, %v361
      %v380 = vunpack.c.l.b16 %v341
      %v381 = vunpack.c.l.b16 %v342
      %v382 = vunpack.c.l.b16 %v343
      %v383 = vunpack.c.l.b16 %v344
      %v384 = vunpack.c.l.b16 %v345
      %v385 = vunpack.c.l.b16 %v346
      %v386 = vunpack.c.l.b16 %v347
      %v387 = vunpack.c.l.b16 %v348
      %v388 = vunpack.c.l.b16 %v349
      %v389 = vunpack.c.l.b16 %v350
      %v390 = vunpack.c.l.b16 %v351
      %v391 = vunpack.c.l.b16 %v352
      %v392 = vunpack.c.l.b16 %v353
      %v393 = vunpack.c.l.b16 %v354
      %v394 = vunpack.c.l.b16 %v355
      %v395 = vunpack.c.l.b16 %v356
      %v396 = vpack.c.b16 %v381, %v380
      %v397 = vpack.c.b16 %v383, %v382
      %v398 = vpack.c.b16 %v385, %v384
      %v399 = vpack.c.b16 %v387, %v386
      %v400 = vpack.c.b16 %v389, %v388
      %v401 = vpack.c.b16 %v391, %v390
      %v402 = vpack.c.b16 %v393, %v392
      %v403 = vpack.c.b16 %v395, %v394
      %412 = vmatprep.subr.bf16.mxu0 0
      %413 = vmatpush1.bf16.msra.mxu0 %v403
      %414 = vmatprep.subr.bf16.mxu0 0
      %415 = vmatpush1.bf16.msra.mxu0 %v402
      %416 = vmatprep.subr.bf16.mxu0 0
      %417 = vmatpush1.bf16.msra.mxu0 %v401
      %418 = vmatprep.subr.bf16.mxu0 0
      %419 = vmatpush1.bf16.msra.mxu0 %v400
      %420 = vmatprep.subr.bf16.mxu0 0
      %421 = vmatpush1.bf16.msra.mxu0 %v399
      %422 = vmatprep.subr.bf16.mxu0 0
      %423 = vmatpush1.bf16.msra.mxu0 %v398
      %424 = vmatprep.subr.bf16.mxu0 0
      %425 = vmatpush1.bf16.msra.mxu0 %v397
      %426 = vmatprep.subr.bf16.mxu0 0
      %427 = vmatpush1.bf16.msra.mxu0 %v396
      %428 = vmatprep.subr.bf16.mxu0 0
      %429 = vmatpush2.bf16.msra.mxu0 0
      %430 = vmatprep.subr.bf16.mxu0 0
      %431 = vmatpush2.bf16.msra.mxu0 0
      %432 = vmatprep.subr.bf16.mxu0 0
      %433 = vmatpush2.bf16.msra.mxu0 0
      %434 = vmatprep.subr.bf16.mxu0 0
      %435 = vmatpush2.bf16.msra.mxu0 0
      %436 = vmatprep.subr.bf16.mxu0 0
      %437 = vmatpush2.bf16.msra.mxu0 0
      %438 = vmatprep.subr.bf16.mxu0 0
      %439 = vmatpush2.bf16.msra.mxu0 0
      %440 = vmatprep.subr.bf16.mxu0 0
      %441 = vmatpush2.bf16.msra.mxu0 0
      %442 = vmatprep.subr.bf16.mxu0 0
      %443 = vmatpush2.bf16.msra.mxu0 0
      %444 = vmatprep.mubr.bf16.mxu0 0
      %445 = vmatmul.mubr.bf16.gmra.mxu0 %v309
      %v446 = vpop.f32.mrf.mxu0
      %v447 = vadd.f32 %v362, %v446
      %v448 = vpop.f32.mrf.mxu0
      %v449 = vpop.f32.mrf.mxu0
      %v450 = vadd.f32 %v362, %v449
      %v451 = vpop.f32.mrf.mxu0
      %452 = vmatprep.mubr.bf16.mxu0 0
      %453 = vmatmul.mubr.bf16.gmra.mxu0 %v310
      %v454 = vpop.f32.mrf.mxu0
      %v455 = vadd.f32 %v362, %v454
      %v456 = vpop.f32.mrf.mxu0
      %v457 = vpop.f32.mrf.mxu0
      %v458 = vadd.f32 %v362, %v457
      %v459 = vpop.f32.mrf.mxu0
      %460 = vmatprep.mubr.bf16.mxu0 0
      %461 = vmatmul.mubr.bf16.gmra.mxu0 %v311
      %v462 = vpop.f32.mrf.mxu0
      %v463 = vadd.f32 %v362, %v462
      %v464 = vpop.f32.mrf.mxu0
      %v465 = vpop.f32.mrf.mxu0
      %v466 = vadd.f32 %v362, %v465
      %v467 = vpop.f32.mrf.mxu0
      %468 = vmatprep.mubr.bf16.mxu0 0
      %469 = vmatmul.mubr.bf16.gmra.mxu0 %v312
      %v470 = vpop.f32.mrf.mxu0
      %v471 = vadd.f32 %v362, %v470
      %v472 = vpop.f32.mrf.mxu0
      %v473 = vpop.f32.mrf.mxu0
      %v474 = vadd.f32 %v362, %v473
      %v475 = vpop.f32.mrf.mxu0
      %476 = vmatprep.mubr.bf16.mxu0 0
      %477 = vmatmul.mubr.bf16.gmra.mxu0 %v313
      %v478 = vpop.f32.mrf.mxu0
      %v479 = vadd.f32 %v362, %v478
      %v480 = vpop.f32.mrf.mxu0
      %v481 = vpop.f32.mrf.mxu0
      %v482 = vadd.f32 %v362, %v481
      %v483 = vpop.f32.mrf.mxu0
      %484 = vmatprep.mubr.bf16.mxu0 0
      %485 = vmatmul.mubr.bf16.gmra.mxu0 %v314
      %v486 = vpop.f32.mrf.mxu0
      %v487 = vadd.f32 %v362, %v486
      %v488 = vpop.f32.mrf.mxu0
      %v489 = vpop.f32.mrf.mxu0
      %v490 = vadd.f32 %v362, %v489
      %v491 = vpop.f32.mrf.mxu0
      %492 = vmatprep.mubr.bf16.mxu0 0
      %493 = vmatmul.mubr.bf16.gmra.mxu0 %v315
      %v494 = vpop.f32.mrf.mxu0
      %v495 = vadd.f32 %v362, %v494
      %v496 = vpop.f32.mrf.mxu0
      %v497 = vpop.f32.mrf.mxu0
      %v498 = vadd.f32 %v362, %v497
      %v499 = vpop.f32.mrf.mxu0
      %500 = vmatprep.mubr.bf16.mxu0 0
      %501 = vmatmul.mubr.bf16.gmra.mxu0 %v316
      %v502 = vpop.f32.mrf.mxu0
      %v503 = vadd.f32 %v362, %v502
      %v504 = vpop.f32.mrf.mxu0
      %v505 = vpop.f32.mrf.mxu0
      %v506 = vadd.f32 %v362, %v505
      %v507 = vpop.f32.mrf.mxu0
      %508 = vmatprep.mubr.bf16.mxu0 0
      %509 = vmatmul.mubr.bf16.gmra.mxu0 %v317
      %v510 = vpop.f32.mrf.mxu0
      %v511 = vadd.f32 %v362, %v510
      %v512 = vpop.f32.mrf.mxu0
      %v513 = vpop.f32.mrf.mxu0
      %v514 = vadd.f32 %v362, %v513
      %v515 = vpop.f32.mrf.mxu0
      %516 = vmatprep.mubr.bf16.mxu0 0
      %517 = vmatmul.mubr.bf16.gmra.mxu0 %v318
      %v518 = vpop.f32.mrf.mxu0
      %v519 = vadd.f32 %v362, %v518
      %v520 = vpop.f32.mrf.mxu0
      %v521 = vpop.f32.mrf.mxu0
      %v522 = vadd.f32 %v362, %v521
      %v523 = vpop.f32.mrf.mxu0
      %524 = vmatprep.mubr.bf16.mxu0 0
      %525 = vmatmul.mubr.bf16.gmra.mxu0 %v319
      %v526 = vpop.f32.mrf.mxu0
      %v527 = vadd.f32 %v362, %v526
      %v528 = vpop.f32.mrf.mxu0
      %v529 = vpop.f32.mrf.mxu0
      %v530 = vadd.f32 %v362, %v529
      %v531 = vpop.f32.mrf.mxu0
      %532 = vmatprep.mubr.bf16.mxu0 0
      %533 = vmatmul.mubr.bf16.gmra.mxu0 %v320
      %v534 = vpop.f32.mrf.mxu0
      %v535 = vadd.f32 %v362, %v534
      %v536 = vpop.f32.mrf.mxu0
      %v537 = vpop.f32.mrf.mxu0
      %v538 = vadd.f32 %v362, %v537
      %v539 = vpop.f32.mrf.mxu0
      %540 = vmatprep.mubr.bf16.mxu0 0
      %541 = vmatmul.mubr.bf16.gmra.mxu0 %v321
      %v542 = vpop.f32.mrf.mxu0
      %v543 = vadd.f32 %v362, %v542
      %v544 = vpop.f32.mrf.mxu0
      %v545 = vpop.f32.mrf.mxu0
      %v546 = vadd.f32 %v362, %v545
      %v547 = vpop.f32.mrf.mxu0
      %548 = vmatprep.mubr.bf16.mxu0 0
      %549 = vmatmul.mubr.bf16.gmra.mxu0 %v322
      %v550 = vpop.f32.mrf.mxu0
      %v551 = vadd.f32 %v362, %v550
      %v552 = vpop.f32.mrf.mxu0
      %v553 = vpop.f32.mrf.mxu0
      %v554 = vadd.f32 %v362, %v553
      %v555 = vpop.f32.mrf.mxu0
      %556 = vmatprep.mubr.bf16.mxu0 0
      %557 = vmatmul.mubr.bf16.gmra.mxu0 %v323
      %v558 = vpop.f32.mrf.mxu0
      %v559 = vadd.f32 %v362, %v558
      %v560 = vpop.f32.mrf.mxu0
      %v561 = vpop.f32.mrf.mxu0
      %v562 = vadd.f32 %v362, %v561
      %v563 = vpop.f32.mrf.mxu0
      %564 = vmatprep.mubr.bf16.mxu0 0
      %565 = vmatmul.mubr.bf16.gmra.mxu0 %v324
      %v566 = vpop.f32.mrf.mxu0
      %v567 = vadd.f32 %v362, %v566
      %v568 = vpop.f32.mrf.mxu0
      %v569 = vpop.f32.mrf.mxu0
      %v570 = vadd.f32 %v362, %v569
      %v571 = vpop.f32.mrf.mxu0
      %572 = vmatprep.mubr.bf16.mxu0 0
      %573 = vmatmul.mubr.bf16.gmra.mxu0 %v325
      %v574 = vpop.f32.mrf.mxu0
      %v575 = vadd.f32 %v362, %v574
      %v576 = vpop.f32.mrf.mxu0
      %v577 = vpop.f32.mrf.mxu0
      %v578 = vadd.f32 %v362, %v577
      %v579 = vpop.f32.mrf.mxu0
      %580 = vmatprep.mubr.bf16.mxu0 0
      %581 = vmatmul.mubr.bf16.gmra.mxu0 %v326
      %v582 = vpop.f32.mrf.mxu0
      %v583 = vadd.f32 %v362, %v582
      %v584 = vpop.f32.mrf.mxu0
      %v585 = vpop.f32.mrf.mxu0
      %v586 = vadd.f32 %v362, %v585
      %v587 = vpop.f32.mrf.mxu0
      %588 = vmatprep.mubr.bf16.mxu0 0
      %589 = vmatmul.mubr.bf16.gmra.mxu0 %v327
      %v590 = vpop.f32.mrf.mxu0
      %v591 = vadd.f32 %v362, %v590
      %v592 = vpop.f32.mrf.mxu0
      %v593 = vpop.f32.mrf.mxu0
      %v594 = vadd.f32 %v362, %v593
      %v595 = vpop.f32.mrf.mxu0
      %596 = vmatprep.mubr.bf16.mxu0 0
      %597 = vmatmul.mubr.bf16.gmra.mxu0 %v328
      %v598 = vpop.f32.mrf.mxu0
      %v599 = vadd.f32 %v362, %v598
      %v600 = vpop.f32.mrf.mxu0
      %v601 = vpop.f32.mrf.mxu0
      %v602 = vadd.f32 %v362, %v601
      %v603 = vpop.f32.mrf.mxu0
      %604 = vmatprep.mubr.bf16.mxu0 0
      %605 = vmatmul.mubr.bf16.gmra.mxu0 %v329
      %v606 = vpop.f32.mrf.mxu0
      %v607 = vadd.f32 %v362, %v606
      %v608 = vpop.f32.mrf.mxu0
      %v609 = vpop.f32.mrf.mxu0
      %v610 = vadd.f32 %v362, %v609
      %v611 = vpop.f32.mrf.mxu0
      %612 = vmatprep.mubr.bf16.mxu0 0
      %613 = vmatmul.mubr.bf16.gmra.mxu0 %v330
      %v614 = vpop.f32.mrf.mxu0
      %v615 = vadd.f32 %v362, %v614
      %v616 = vpop.f32.mrf.mxu0
      %v617 = vpop.f32.mrf.mxu0
      %v618 = vadd.f32 %v362, %v617
      %v619 = vpop.f32.mrf.mxu0
      %620 = vmatprep.mubr.bf16.mxu0 0
      %621 = vmatmul.mubr.bf16.gmra.mxu0 %v331
      %v622 = vpop.f32.mrf.mxu0
      %v623 = vadd.f32 %v362, %v622
      %v624 = vpop.f32.mrf.mxu0
      %v625 = vpop.f32.mrf.mxu0
      %v626 = vadd.f32 %v362, %v625
      %v627 = vpop.f32.mrf.mxu0
      %628 = vmatprep.mubr.bf16.mxu0 0
      %629 = vmatmul.mubr.bf16.gmra.mxu0 %v332
      %v630 = vpop.f32.mrf.mxu0
      %v631 = vadd.f32 %v362, %v630
      %v632 = vpop.f32.mrf.mxu0
      %v633 = vpop.f32.mrf.mxu0
      %v634 = vadd.f32 %v362, %v633
      %v635 = vpop.f32.mrf.mxu0
      %636 = vmatprep.mubr.bf16.mxu0 0
      %637 = vmatmul.mubr.bf16.gmra.mxu0 %v333
      %v638 = vpop.f32.mrf.mxu0
      %v639 = vadd.f32 %v362, %v638
      %v640 = vpop.f32.mrf.mxu0
      %v641 = vpop.f32.mrf.mxu0
      %v642 = vadd.f32 %v362, %v641
      %v643 = vpop.f32.mrf.mxu0
      %644 = vmatprep.mubr.bf16.mxu0 0
      %645 = vmatmul.mubr.bf16.gmra.mxu0 %v334
      %v646 = vpop.f32.mrf.mxu0
      %v647 = vadd.f32 %v362, %v646
      %v648 = vpop.f32.mrf.mxu0
      %v649 = vpop.f32.mrf.mxu0
      %v650 = vadd.f32 %v362, %v649
      %v651 = vpop.f32.mrf.mxu0
      %652 = vmatprep.mubr.bf16.mxu0 0
      %653 = vmatmul.mubr.bf16.gmra.mxu0 %v335
      %v654 = vpop.f32.mrf.mxu0
      %v655 = vadd.f32 %v362, %v654
      %v656 = vpop.f32.mrf.mxu0
      %v657 = vpop.f32.mrf.mxu0
      %v658 = vadd.f32 %v362, %v657
      %v659 = vpop.f32.mrf.mxu0
      %660 = vmatprep.mubr.bf16.mxu0 0
      %661 = vmatmul.mubr.bf16.gmra.mxu0 %v336
      %v662 = vpop.f32.mrf.mxu0
      %v663 = vadd.f32 %v362, %v662
      %v664 = vpop.f32.mrf.mxu0
      %v665 = vpop.f32.mrf.mxu0
      %v666 = vadd.f32 %v362, %v665
      %v667 = vpop.f32.mrf.mxu0
      %668 = vmatprep.mubr.bf16.mxu0 0
      %669 = vmatmul.mubr.bf16.gmra.mxu0 %v337
      %v670 = vpop.f32.mrf.mxu0
      %v671 = vadd.f32 %v362, %v670
      %v672 = vpop.f32.mrf.mxu0
      %v673 = vpop.f32.mrf.mxu0
      %v674 = vadd.f32 %v362, %v673
      %v675 = vpop.f32.mrf.mxu0
      %676 = vmatprep.mubr.bf16.mxu0 0
      %677 = vmatmul.mubr.bf16.gmra.mxu0 %v338
      %v678 = vpop.f32.mrf.mxu0
      %v679 = vadd.f32 %v362, %v678
      %v680 = vpop.f32.mrf.mxu0
      %v681 = vpop.f32.mrf.mxu0
      %v682 = vadd.f32 %v362, %v681
      %v683 = vpop.f32.mrf.mxu0
      %684 = vmatprep.mubr.bf16.mxu0 0
      %685 = vmatmul.mubr.bf16.gmra.mxu0 %v339
      %v686 = vpop.f32.mrf.mxu0
      %v687 = vadd.f32 %v362, %v686
      %v688 = vpop.f32.mrf.mxu0
      %v689 = vpop.f32.mrf.mxu0
      %v690 = vadd.f32 %v362, %v689
      %v691 = vpop.f32.mrf.mxu0
      %692 = vmatprep.mubr.bf16.mxu0 0
      %693 = vmatmul.mubr.bf16.gmra.mxu0 %v340
      %v694 = vpop.f32.mrf.mxu0
      %v695 = vadd.f32 %v362, %v694
      %v696 = vpop.f32.mrf.mxu0
      %v697 = vpop.f32.mrf.mxu0
      %v698 = vadd.f32 %v362, %v697
      %v699 = vpop.f32.mrf.mxu0
      %700 = vdwg.mxu0
      %v701 = vadd.f32 %v447, %v245
      %v702 = vadd.f32 %v450, %v246
      %v703 = vadd.f32 %v455, %v247
      %v704 = vadd.f32 %v458, %v248
      %v705 = vadd.f32 %v463, %v249
      %v706 = vadd.f32 %v466, %v250
      %v707 = vadd.f32 %v471, %v251
      %v708 = vadd.f32 %v474, %v252
      %v709 = vadd.f32 %v479, %v253
      %v710 = vadd.f32 %v482, %v254
      %v711 = vadd.f32 %v487, %v255
      %v712 = vadd.f32 %v490, %v256
      %v713 = vadd.f32 %v495, %v257
      %v714 = vadd.f32 %v498, %v258
      %v715 = vadd.f32 %v503, %v259
      %v716 = vadd.f32 %v506, %v260
      %v717 = vadd.f32 %v511, %v261
      %v718 = vadd.f32 %v514, %v262
      %v719 = vadd.f32 %v519, %v263
      %v720 = vadd.f32 %v522, %v264
      %v721 = vadd.f32 %v527, %v265
      %v722 = vadd.f32 %v530, %v266
      %v723 = vadd.f32 %v535, %v267
      %v724 = vadd.f32 %v538, %v268
      %v725 = vadd.f32 %v543, %v269
      %v726 = vadd.f32 %v546, %v270
      %v727 = vadd.f32 %v551, %v271
      %v728 = vadd.f32 %v554, %v272
      %v729 = vadd.f32 %v559, %v273
      %v730 = vadd.f32 %v562, %v274
      %v731 = vadd.f32 %v567, %v275
      %v732 = vadd.f32 %v570, %v276
      %v733 = vadd.f32 %v575, %v277
      %v734 = vadd.f32 %v578, %v278
      %v735 = vadd.f32 %v583, %v279
      %v736 = vadd.f32 %v586, %v280
      %v737 = vadd.f32 %v591, %v281
      %v738 = vadd.f32 %v594, %v282
      %v739 = vadd.f32 %v599, %v283
      %v740 = vadd.f32 %v602, %v284
      %v741 = vadd.f32 %v607, %v285
      %v742 = vadd.f32 %v610, %v286
      %v743 = vadd.f32 %v615, %v287
      %v744 = vadd.f32 %v618, %v288
      %v745 = vadd.f32 %v623, %v289
      %v746 = vadd.f32 %v626, %v290
      %v747 = vadd.f32 %v631, %v291
      %v748 = vadd.f32 %v634, %v292
      %v749 = vadd.f32 %v639, %v293
      %v750 = vadd.f32 %v642, %v294
      %v751 = vadd.f32 %v647, %v295
      %v752 = vadd.f32 %v650, %v296
      %v753 = vadd.f32 %v655, %v297
      %v754 = vadd.f32 %v658, %v298
      %v755 = vadd.f32 %v663, %v299
      %v756 = vadd.f32 %v666, %v300
      %v757 = vadd.f32 %v671, %v301
      %v758 = vadd.f32 %v674, %v302
      %v759 = vadd.f32 %v679, %v303
      %v760 = vadd.f32 %v682, %v304
      %v761 = vadd.f32 %v687, %v305
      %v762 = vadd.f32 %v690, %v306
      %v763 = vadd.f32 %v695, %v307
      %v764 = vadd.f32 %v698, %v308
      %vm765 = vcmask 31744
      %766 = vst.msk [vmem:[%s240] sm:$0xff] %vm765, %v701
      %767 = vst.msk [vmem:[%s240 + $0x8] sm:$0xff] %vm765, %v702
      %768 = vst.msk [vmem:[%s240 + $0x10] sm:$0xff] %vm765, %v703
      %769 = vst.msk [vmem:[%s240 + $0x18] sm:$0xff] %vm765, %v704
      %770 = vst.msk [vmem:[%s240 + $0x20] sm:$0xff] %vm765, %v705
      %771 = vst.msk [vmem:[%s240 + $0x28] sm:$0xff] %vm765, %v706
      %772 = vst.msk [vmem:[%s240 + $0x30] sm:$0xff] %vm765, %v707
      %773 = vst.msk [vmem:[%s240 + $0x38] sm:$0xff] %vm765, %v708
      %774 = vst.msk [vmem:[%s240 + $0x40] sm:$0xff] %vm765, %v709
      %775 = vst.msk [vmem:[%s240 + $0x48] sm:$0xff] %vm765, %v710
      %776 = vst.msk [vmem:[%s240 + $0x50] sm:$0xff] %vm765, %v711
      %777 = vst.msk [vmem:[%s240 + $0x58] sm:$0xff] %vm765, %v712
      %778 = vst.msk [vmem:[%s240 + $0x60] sm:$0xff] %vm765, %v713
      %779 = vst.msk [vmem:[%s240 + $0x68] sm:$0xff] %vm765, %v714
      %780 = vst.msk [vmem:[%s240 + $0x70] sm:$0xff] %vm765, %v715
      %781 = vst.msk [vmem:[%s240 + $0x78] sm:$0xff] %vm765, %v716
      %782 = vst.msk [vmem:[%s240 + $0x80] sm:$0xff] %vm765, %v717
      %783 = vst.msk [vmem:[%s240 + $0x88] sm:$0xff] %vm765, %v718
      %784 = vst.msk [vmem:[%s240 + $0x90] sm:$0xff] %vm765, %v719
      %785 = vst.msk [vmem:[%s240 + $0x98] sm:$0xff] %vm765, %v720
      %786 = vst.msk [vmem:[%s240 + $0xa0] sm:$0xff] %vm765, %v721
      %787 = vst.msk [vmem:[%s240 + $0xa8] sm:$0xff] %vm765, %v722
      %788 = vst.msk [vmem:[%s240 + $0xb0] sm:$0xff] %vm765, %v723
      %789 = vst.msk [vmem:[%s240 + $0xb8] sm:$0xff] %vm765, %v724
      %790 = vst.msk [vmem:[%s240 + $0xc0] sm:$0xff] %vm765, %v725
      %791 = vst.msk [vmem:[%s240 + $0xc8] sm:$0xff] %vm765, %v726
      %792 = vst.msk [vmem:[%s240 + $0xd0] sm:$0xff] %vm765, %v727
      %793 = vst.msk [vmem:[%s240 + $0xd8] sm:$0xff] %vm765, %v728
      %794 = vst.msk [vmem:[%s240 + $0xe0] sm:$0xff] %vm765, %v729
      %795 = vst.msk [vmem:[%s240 + $0xe8] sm:$0xff] %vm765, %v730
      %796 = vst.msk [vmem:[%s240 + $0xf0] sm:$0xff] %vm765, %v731
      %797 = vst.msk [vmem:[%s240 + $0xf8] sm:$0xff] %vm765, %v732
      %798 = vst.msk [vmem:[%s240 + $0x100] sm:$0xff] %vm765, %v733
      %799 = vst.msk [vmem:[%s240 + $0x108] sm:$0xff] %vm765, %v734
      %800 = vst.msk [vmem:[%s240 + $0x110] sm:$0xff] %vm765, %v735
      %801 = vst.msk [vmem:[%s240 + $0x118] sm:$0xff] %vm765, %v736
      %802 = vst.msk [vmem:[%s240 + $0x120] sm:$0xff] %vm765, %v737
      %803 = vst.msk [vmem:[%s240 + $0x128] sm:$0xff] %vm765, %v738
      %804 = vst.msk [vmem:[%s240 + $0x130] sm:$0xff] %vm765, %v739
      %805 = vst.msk [vmem:[%s240 + $0x138] sm:$0xff] %vm765, %v740
      %806 = vst.msk [vmem:[%s240 + $0x140] sm:$0xff] %vm765, %v741
      %807 = vst.msk [vmem:[%s240 + $0x148] sm:$0xff] %vm765, %v742
      %808 = vst.msk [vmem:[%s240 + $0x150] sm:$0xff] %vm765, %v743
      %809 = vst.msk [vmem:[%s240 + $0x158] sm:$0xff] %vm765, %v744
      %810 = vst.msk [vmem:[%s240 + $0x160] sm:$0xff] %vm765, %v745
      %811 = vst.msk [vmem:[%s240 + $0x168] sm:$0xff] %vm765, %v746
      %812 = vst.msk [vmem:[%s240 + $0x170] sm:$0xff] %vm765, %v747
      %813 = vst.msk [vmem:[%s240 + $0x178] sm:$0xff] %vm765, %v748
      %814 = vst.msk [vmem:[%s240 + $0x180] sm:$0xff] %vm765, %v749
      %815 = vst.msk [vmem:[%s240 + $0x188] sm:$0xff] %vm765, %v750
      %816 = vst.msk [vmem:[%s240 + $0x190] sm:$0xff] %vm765, %v751
      %817 = vst.msk [vmem:[%s240 + $0x198] sm:$0xff] %vm765, %v752
      %818 = vst.msk [vmem:[%s240 + $0x1a0] sm:$0xff] %vm765, %v753
      %819 = vst.msk [vmem:[%s240 + $0x1a8] sm:$0xff] %vm765, %v754
      %820 = vst.msk [vmem:[%s240 + $0x1b0] sm:$0xff] %vm765, %v755
      %821 = vst.msk [vmem:[%s240 + $0x1b8] sm:$0xff] %vm765, %v756
      %822 = vst.msk [vmem:[%s240 + $0x1c0] sm:$0xff] %vm765, %v757
      %823 = vst.msk [vmem:[%s240 + $0x1c8] sm:$0xff] %vm765, %v758
      %824 = vst.msk [vmem:[%s240 + $0x1d0] sm:$0xff] %vm765, %v759
      %825 = vst.msk [vmem:[%s240 + $0x1d8] sm:$0xff] %vm765, %v760
      %826 = vst.msk [vmem:[%s240 + $0x1e0] sm:$0xff] %vm765, %v761
      %827 = vst.msk [vmem:[%s240 + $0x1e8] sm:$0xff] %vm765, %v762
      %828 = vst.msk [vmem:[%s240 + $0x1f0] sm:$0xff] %vm765, %v763
      %829 = vst.msk [vmem:[%s240 + $0x1f8] sm:$0xff] %vm765, %v764
      %s830 = smul.u32 %s18, 2
      %s831 = sadd.s32 %s830, %s19
      %s832 = smul.u32 64, %s831
      %p833 = scmp.lt.s32.totalorder %s832, 255
      %s834 = scalar_select %p833, %s832, 255
      %s835 = smul.addr %s834, 8
      %s836 = scalar_lea.vmem %s3, %s835
      // Predicated region
      $region33: #{nonlocal_block.3} parent=31 // pred_check
        %p837 = pneg %p130
      $region34: #{nonlocal_block.3} parent=31 // pred_check_branch
        %839 = sbr.rel (%p837) target = $region36
      $region35: #{nonlocal_block.3} parent=31 // pred_region
        %s840 = smul.u32 %s18, 2
        %s841 = sadd.s32 %s840, %s19
        %s842 = smul.u32 64, %s841
      $region36: #{nonlocal_block.3} parent=31 // pred_fallthru
        _
    $region32: #{nonlocal_block.3} parent=5 // pred_fallthru
      _
    %p843 = scmp.le.s32.totalorder 2, %s9
    // Predicated region
    $region37: #{nonlocal_block.3} parent=5 // pred_check
      %p844 = pneg %p843
    $region38: #{nonlocal_block.3} parent=5 // pred_check_branch
      %846 = sbr.rel (%p844) target = $region40
    $region39: #{nonlocal_block.3} parent=5 // pred_region
      %s847 = ssub.s32 %s9, 2
      // Predicated region
      $region41: #{nonlocal_block.3} parent=39 // pred_check
        %p848 = pneg %p136
      $region42: #{nonlocal_block.3} parent=39 // pred_check_branch
        %850 = sbr.rel (%p848) target = $region44
      $region43: #{nonlocal_block.3} parent=39 // pred_region
        %s851 = smul.u32 %s20, 2
        %s852 = sadd.s32 %s851, %s21
        %s853 = smul.u32 64, %s852
        %p854 = scmp.lt.s32.totalorder %s853, 255
        %s855 = scalar_select %p854, %s853, 255
        %s856 = smul.addr %s855, 8
        %s857 = scalar_lea.vmem %s3, %s856
      $region44: #{nonlocal_block.3} parent=39 // pred_fallthru
        _
    $region40: #{nonlocal_block.3} parent=5 // pred_fallthru
      _
  $region6: #{nonlocal_block.3} parent=0 // loop_footer
    %s13 = sadd.s32 1, %s9
  $region7: #{nonlocal_block.3} parent=0 // loop_footer_branch
    %8 = sbr.rel target = $region3
  $region8: #{nonlocal_block.3} parent=0 // loop_exit
    _

// kernel: nonlocal_block.2
$region0: #{nonlocal_block.2}
  #allocation0 [shape = 'u32[]', space=smem, size = 0x4, offset = 0x4, fixed_abs, tag = 'smem constant byte address 0x4 - core index']
  #allocation1 [shape = 'u32[144,128]{1,0:T(1,128)}', space=vmem, size = 0x12000, scoped, tag = 'internal scratch']
  #allocation2 [shape = 'f32[128,128]{1,0:T(8,128)}', space=vmem, size = 0x10000, scoped, tag = 'scratch operand']
  %s0 = inlined_call_operand.vmem [shape: f32[64,2,8,256], index: 0, kind: input, shape index: {}]
  %s1 = inlined_call_operand.vmem [shape: bf16[128,256], index: 1, kind: input, shape index: {}]
  %s2 = inlined_call_operand.vmem [shape: f32[1,256], index: 2, kind: input, shape index: {}]
  %s3 = inlined_call_operand.vmem [shape: bf16[136,128], index: 3, kind: input, shape index: {}]
  %s4 = inlined_call_operand.vmem [shape: bf16[128,4], index: 4, kind: input, shape index: {}]
  %s5 = inlined_call_operand.vmem [shape: f32[1,4], index: 5, kind: input, shape index: {}]
  %s6 = inlined_call_operand.vmem [shape: bf16[2,128,4], index: 6, kind: output, shape index: {0}]
  %s7 = inlined_call_operand.vmem [shape: f32[2,1,4], index: 7, kind: output, shape index: {1}]
  %8 = xla_tuple %s6, %s7
  %s9 = sld [smem:[#allocation0]]
  $region73: #{nonlocal_block.2} parent=0
    _
  %s11 = ssub.s32 1, %s9
  %s12 = scalar_select 0, %s11, %s9
  loop: start=0, step=1, limit=4
  $region2: #{nonlocal_block.2} parent=0 // loop_pre_header
    _
  $region3: #{nonlocal_block.2} parent=0 // loop_header
    %s14 = sphi 0, %s18
    %p15 = scmp.ge.s32.totalorder %s14, 4
    %s21 = sphi 0, %s33
    %s22 = sphi 0, %s29
    %s23 = sphi 0, %s21
    %s24 = sphi 0, %s22
    %s25 = sphi 0, %s23
    %s26 = sphi 0, %s24
    %s38 = sphi 0, %s40
    %s41 = sphi 0, %s38
    %s42 = sphi 0, %s41
    %s58 = sphi 0, %s42
    %s62 = sphi 0, %s62
    %s64 = sphi 0, %s62
    %s65 = sphi 0, %s64
    %s79 = sphi 0, %s65
    %s83 = sphi 0, %s83
    %s85 = sphi 0, %s83
    %s86 = sphi 0, %s85
    %s100 = sphi 0, %s86
    %s104 = sphi 0, %s104
    %s106 = sphi 0, %s104
    %s107 = sphi 0, %s106
    %s121 = sphi 0, %s107
    %s125 = sphi 0, %s125
    %s127 = sphi 0, %s125
    %s128 = sphi 0, %s127
    %s142 = sphi 0, %s128
    %s146 = sphi 0, %s146
    %s148 = sphi 0, %s146
    %s149 = sphi 0, %s148
    %s163 = sphi 0, %s149
    %s169 = sphi 0, %s171
    %s172 = sphi 0, %s169
    %s173 = sphi 0, %s172
    %s189 = sphi 0, %s173
    %s195 = sphi 0, %s197
    %s198 = sphi 0, %s195
    %s199 = sphi 0, %s198
    %s215 = sphi 0, %s199
  $region4: #{nonlocal_block.2} parent=0 // loop_header_branch
    %17 = sbr.rel (%p15) target = $region8
  $region5: #{nonlocal_block.2} parent=0 // loop_body
    %s19 = ssub.s32 %s14, 1
    %s20 = ssub.s32 %s14, 2
    %s27 = sadd.s32 1, %s22
    %p28 = scmp.ge.s32.totalorder %s27, 1
    %s29 = scalar_select %p28, 0, %s27
    %s30 = sadd.s32 1, %s21
    %s31 = scalar_select %p28, %s30, %s21
    %p32 = scmp.ge.s32.totalorder %s31, 2
    %s33 = scalar_select %p32, 0, %s31
    %s34 = sadd.s32 %s21, %s22
    %s35 = sadd.s32 %s33, %s29
    %s36 = ssub.s32 %s34, %s35
    %p37 = scmp.eq.s32.totalorder %s36, 0
    %s39 = sadd.s32 %s38, 1
    %s40 = scalar_select %p37, %s38, %s39
    %p43 = pneg %p37
    %p44 = scmp.eq.s32.totalorder %s14, 1
    %p45 = por %p43, %p44
    %p46 = scmp.ne.s32.totalorder %s38, %s41
    %p47 = scmp.eq.s32.totalorder %s14, 0
    %p48 = por %p46, %p47
    %p49 = scmp.ne.s32.totalorder %s38, %s41
    %p50 = scmp.eq.s32.totalorder %s19, 1
    %p51 = por %p49, %p50
    %p52 = scmp.ne.s32.totalorder %s41, %s42
    %p53 = scmp.eq.s32.totalorder %s19, 0
    %p54 = por %p52, %p53
    %p55 = scmp.ne.s32.totalorder %s41, %s42
    %p56 = scmp.eq.s32.totalorder %s20, 1
    %p57 = por %p55, %p56
    %p59 = scmp.ne.s32.totalorder %s42, %s58
    %p60 = scmp.eq.s32.totalorder %s20, 0
    %p61 = por %p59, %p60
    %s63 = sadd.s32 %s62, 1
    %p66 = scmp.eq.s32.totalorder %s14, 1
    %p67 = scmp.ne.s32.totalorder %s62, %s64
    %p68 = scmp.eq.s32.totalorder %s14, 0
    %p69 = por %p67, %p68
    %p70 = scmp.ne.s32.totalorder %s62, %s64
    %p71 = scmp.eq.s32.totalorder %s19, 1
    %p72 = por %p70, %p71
    %p73 = scmp.ne.s32.totalorder %s64, %s65
    %p74 = scmp.eq.s32.totalorder %s19, 0
    %p75 = por %p73, %p74
    %p76 = scmp.ne.s32.totalorder %s64, %s65
    %p77 = scmp.eq.s32.totalorder %s20, 1
    %p78 = por %p76, %p77
    %p80 = scmp.ne.s32.totalorder %s65, %s79
    %p81 = scmp.eq.s32.totalorder %s20, 0
    %p82 = por %p80, %p81
    %s84 = sadd.s32 %s83, 1
    %p87 = scmp.eq.s32.totalorder %s14, 1
    %p88 = scmp.ne.s32.totalorder %s83, %s85
    %p89 = scmp.eq.s32.totalorder %s14, 0
    %p90 = por %p88, %p89
    %p91 = scmp.ne.s32.totalorder %s83, %s85
    %p92 = scmp.eq.s32.totalorder %s19, 1
    %p93 = por %p91, %p92
    %p94 = scmp.ne.s32.totalorder %s85, %s86
    %p95 = scmp.eq.s32.totalorder %s19, 0
    %p96 = por %p94, %p95
    %p97 = scmp.ne.s32.totalorder %s85, %s86
    %p98 = scmp.eq.s32.totalorder %s20, 1
    %p99 = por %p97, %p98
    %p101 = scmp.ne.s32.totalorder %s86, %s100
    %p102 = scmp.eq.s32.totalorder %s20, 0
    %p103 = por %p101, %p102
    %s105 = sadd.s32 %s104, 1
    %p108 = scmp.eq.s32.totalorder %s14, 1
    %p109 = scmp.ne.s32.totalorder %s104, %s106
    %p110 = scmp.eq.s32.totalorder %s14, 0
    %p111 = por %p109, %p110
    %p112 = scmp.ne.s32.totalorder %s104, %s106
    %p113 = scmp.eq.s32.totalorder %s19, 1
    %p114 = por %p112, %p113
    %p115 = scmp.ne.s32.totalorder %s106, %s107
    %p116 = scmp.eq.s32.totalorder %s19, 0
    %p117 = por %p115, %p116
    %p118 = scmp.ne.s32.totalorder %s106, %s107
    %p119 = scmp.eq.s32.totalorder %s20, 1
    %p120 = por %p118, %p119
    %p122 = scmp.ne.s32.totalorder %s107, %s121
    %p123 = scmp.eq.s32.totalorder %s20, 0
    %p124 = por %p122, %p123
    %s126 = sadd.s32 %s125, 1
    %p129 = scmp.eq.s32.totalorder %s14, 1
    %p130 = scmp.ne.s32.totalorder %s125, %s127
    %p131 = scmp.eq.s32.totalorder %s14, 0
    %p132 = por %p130, %p131
    %p133 = scmp.ne.s32.totalorder %s125, %s127
    %p134 = scmp.eq.s32.totalorder %s19, 1
    %p135 = por %p133, %p134
    %p136 = scmp.ne.s32.totalorder %s127, %s128
    %p137 = scmp.eq.s32.totalorder %s19, 0
    %p138 = por %p136, %p137
    %p139 = scmp.ne.s32.totalorder %s127, %s128
    %p140 = scmp.eq.s32.totalorder %s20, 1
    %p141 = por %p139, %p140
    %p143 = scmp.ne.s32.totalorder %s128, %s142
    %p144 = scmp.eq.s32.totalorder %s20, 0
    %p145 = por %p143, %p144
    %s147 = sadd.s32 %s146, 1
    %p150 = scmp.eq.s32.totalorder %s14, 1
    %p151 = scmp.ne.s32.totalorder %s146, %s148
    %p152 = scmp.eq.s32.totalorder %s14, 0
    %p153 = por %p151, %p152
    %p154 = scmp.ne.s32.totalorder %s146, %s148
    %p155 = scmp.eq.s32.totalorder %s19, 1
    %p156 = por %p154, %p155
    %p157 = scmp.ne.s32.totalorder %s148, %s149
    %p158 = scmp.eq.s32.totalorder %s19, 0
    %p159 = por %p157, %p158
    %p160 = scmp.ne.s32.totalorder %s148, %s149
    %p161 = scmp.eq.s32.totalorder %s20, 1
    %p162 = por %p160, %p161
    %p164 = scmp.ne.s32.totalorder %s149, %s163
    %p165 = scmp.eq.s32.totalorder %s20, 0
    %p166 = por %p164, %p165
    %s167 = ssub.s32 %s21, %s33
    %p168 = scmp.eq.s32.totalorder %s167, 0
    %s170 = sadd.s32 %s169, 1
    %s171 = scalar_select %p168, %s169, %s170
    %p174 = pneg %p168
    %p175 = scmp.eq.s32.totalorder %s14, 1
    %p176 = por %p174, %p175
    %p177 = scmp.ne.s32.totalorder %s169, %s172
    %p178 = scmp.eq.s32.totalorder %s14, 0
    %p179 = por %p177, %p178
    %p180 = scmp.ne.s32.totalorder %s169, %s172
    %p181 = scmp.eq.s32.totalorder %s19, 1
    %p182 = por %p180, %p181
    %p183 = scmp.ne.s32.totalorder %s172, %s173
    %p184 = scmp.eq.s32.totalorder %s19, 0
    %p185 = por %p183, %p184
    %p186 = scmp.ne.s32.totalorder %s172, %s173
    %p187 = scmp.eq.s32.totalorder %s20, 1
    %p188 = por %p186, %p187
    %p190 = scmp.ne.s32.totalorder %s173, %s189
    %p191 = scmp.eq.s32.totalorder %s20, 0
    %p192 = por %p190, %p191
    %s193 = ssub.s32 %s21, %s33
    %p194 = scmp.eq.s32.totalorder %s193, 0
    %s196 = sadd.s32 %s195, 1
    %s197 = scalar_select %p194, %s195, %s196
    %p200 = pneg %p194
    %p201 = scmp.eq.s32.totalorder %s14, 1
    %p202 = por %p200, %p201
    %p203 = scmp.ne.s32.totalorder %s195, %s198
    %p204 = scmp.eq.s32.totalorder %s14, 0
    %p205 = por %p203, %p204
    %p206 = scmp.ne.s32.totalorder %s195, %s198
    %p207 = scmp.eq.s32.totalorder %s19, 1
    %p208 = por %p206, %p207
    %p209 = scmp.ne.s32.totalorder %s198, %s199
    %p210 = scmp.eq.s32.totalorder %s19, 0
    %p211 = por %p209, %p210
    %p212 = scmp.ne.s32.totalorder %s198, %s199
    %p213 = scmp.eq.s32.totalorder %s20, 1
    %p214 = por %p212, %p213
    %p216 = scmp.ne.s32.totalorder %s199, %s215
    %p217 = scmp.eq.s32.totalorder %s20, 0
    %p218 = por %p216, %p217
    %p219 = scmp.le.s32.totalorder 1, %s14
    %p220 = scmp.lt.s32.totalorder %s14, 3
    %p221 = pnand %p219, %p220
    %p222 = pneg %p221
    // Predicated region
    $region9: #{nonlocal_block.2} parent=5 // pred_check
      _
    $region10: #{nonlocal_block.2} parent=5 // pred_check_branch
      %224 = sbr.rel (%p221) target = $region12
    $region11: #{nonlocal_block.2} parent=5 // pred_region
      %s225 = ssub.s32 %s14, 1
      // Predicated region
      $region13: #{nonlocal_block.2} parent=11 // pred_check
        %p226 = pneg %p75
      $region14: #{nonlocal_block.2} parent=11 // pred_check_branch
        %228 = sbr.rel (%p226) target = $region16
      $region15: #{nonlocal_block.2} parent=11 // pred_region
        _
      $region16: #{nonlocal_block.2} parent=11 // pred_fallthru
        _
      // Predicated region
      $region17: #{nonlocal_block.2} parent=11 // pred_check
        %p229 = pneg %p96
      $region18: #{nonlocal_block.2} parent=11 // pred_check_branch
        %231 = sbr.rel (%p229) target = $region20
      $region19: #{nonlocal_block.2} parent=11 // pred_region
        _
      $region20: #{nonlocal_block.2} parent=11 // pred_fallthru
        _
      // Predicated region
      $region21: #{nonlocal_block.2} parent=11 // pred_check
        %p232 = pneg %p117
      $region22: #{nonlocal_block.2} parent=11 // pred_check_branch
        %234 = sbr.rel (%p232) target = $region24
      $region23: #{nonlocal_block.2} parent=11 // pred_region
        _
      $region24: #{nonlocal_block.2} parent=11 // pred_fallthru
        _
      // Predicated region
      $region25: #{nonlocal_block.2} parent=11 // pred_check
        %p235 = pneg %p138
      $region26: #{nonlocal_block.2} parent=11 // pred_check_branch
        %237 = sbr.rel (%p235) target = $region28
      $region27: #{nonlocal_block.2} parent=11 // pred_region
        _
      $region28: #{nonlocal_block.2} parent=11 // pred_fallthru
        _
      // Predicated region
      $region29: #{nonlocal_block.2} parent=11 // pred_check
        %p238 = pneg %p159
      $region30: #{nonlocal_block.2} parent=11 // pred_check_branch
        %240 = sbr.rel (%p238) target = $region32
      $region31: #{nonlocal_block.2} parent=11 // pred_region
        _
      $region32: #{nonlocal_block.2} parent=11 // pred_fallthru
        _
    $region12: #{nonlocal_block.2} parent=5 // pred_fallthru
      _
    %p241 = scmp.lt.s32.totalorder %s14, 2
    // Predicated region
    $region33: #{nonlocal_block.2} parent=5 // pred_check
      %p242 = pneg %p241
    $region34: #{nonlocal_block.2} parent=5 // pred_check_branch
      %244 = sbr.rel (%p242) target = $region36
    $region35: #{nonlocal_block.2} parent=5 // pred_region
      // Predicated region
      $region37: #{nonlocal_block.2} parent=35 // pred_check
        %p245 = pneg %p48
      $region38: #{nonlocal_block.2} parent=35 // pred_check_branch
        %247 = sbr.rel (%p245) target = $region40
      $region39: #{nonlocal_block.2} parent=35 // pred_region
        %s248 = sadd.s32 %s21, %s22
        %s249 = smul.u32 32, %s248
        %p250 = scmp.lt.s32.totalorder %s249, 63
        %s251 = scalar_select %p250, %s249, 63
        %s252 = smul.addr %s251, 4
        %s253 = smul.addr %s252, 8
        %s254 = scalar_lea.vmem %s0, %s253
        %s255 = sadd.s32 %s21, %s22
        %s256 = smul.u32 32, %s255
      $region40: #{nonlocal_block.2} parent=35 // pred_fallthru
        _
    $region36: #{nonlocal_block.2} parent=5 // pred_fallthru
      _
    %p257 = scmp.le.s32.totalorder 1, %s14
    %p258 = scmp.lt.s32.totalorder %s14, 3
    %p259 = pnand %p257, %p258
    %p260 = pneg %p259
    // Predicated region
    $region41: #{nonlocal_block.2} parent=5 // pred_check
      _
    $region42: #{nonlocal_block.2} parent=5 // pred_check_branch
      %262 = sbr.rel (%p259) target = $region44
    $region43: #{nonlocal_block.2} parent=5 // pred_region
      %s263 = ssub.s32 %s14, 1
      %s264 = sadd.s32 %s23, %s24
      %s265 = smul.u32 32, %s264
      %p266 = scmp.lt.s32.totalorder %s265, 63
      %s267 = scalar_select %p266, %s265, 63
      %s268 = smul.addr %s267, 4
      %s269 = smul.addr %s268, 8
      %s270 = scalar_lea.vmem %s0, %s269
      %p271 = pneg %p54
      %p272 = pneg %p51
      %p273 = pneg %p75
      %p274 = pneg %p72
      %p275 = pneg %p96
      %p276 = pneg %p93
      %p277 = pneg %p117
      %p278 = pneg %p114
      %p279 = pneg %p138
      %p280 = pneg %p135
      %p281 = pneg %p159
      %p282 = pneg %p156
      %p283 = pneg %p185
      %p284 = pneg %p182
      %p285 = scmp.lt.s32.totalorder %s23, 1
      %s286 = scalar_select %p285, %s23, 1
      %s287 = smul.addr %s286, 16
      %s288 = smul.addr %s287, 4
      %s289 = scalar_lea.vmem %s6, %s288
      %p290 = pneg %p211
      %p291 = pneg %p208
      %p292 = scmp.lt.s32.totalorder %s23, 1
      %s293 = scalar_select %p292, %s23, 1
      %s294 = scalar_lea.vmem %s7, %s293
      %s295 = sadd.s32 %s23, %s24
      %s296 = smul.u32 32, %s295
      %p297 = scmp.lt.s32.totalorder %s296, 63
      %s298 = scalar_select %p297, %s296, 63
      %s299 = smul.addr %s298, 4
      %s300 = smul.addr %s299, 8
      %s301 = scalar_lea.vmem %s0, %s300
      %s302 = sadd.s32 %s23, %s24
      %s303 = smul.u32 32, %s302
      %p304 = scmp.lt.s32.totalorder %s23, 1
      %s305 = scalar_select %p304, %s23, 1
      %s306 = smul.addr %s305, 16
      %s307 = smul.addr %s306, 4
      %s308 = scalar_lea.vmem %s6, %s307
      %p309 = scmp.lt.s32.totalorder %s23, 1
      %s310 = scalar_select %p309, %s23, 1
      %s311 = scalar_lea.vmem %s7, %s310
      %p313 = scmp.eq.s32.totalorder %s24, 0
      // Predicated region
      $region45: #{nonlocal_block.2} parent=43 // pred_check
        %p314 = pneg %p313
      $region46: #{nonlocal_block.2} parent=43 // pred_check_branch
        %316 = sbr.rel (%p314) target = $region48
      $region47: #{nonlocal_block.2} parent=43 // pred_region
        %317 = vst [vmem:[#allocation2] sm:$0xff] 0.0
        %318 = vst [vmem:[#allocation2 + $0x8] sm:$0xff] 0.0
        %319 = vst [vmem:[#allocation2 + $0x10] sm:$0xff] 0.0
        %320 = vst [vmem:[#allocation2 + $0x18] sm:$0xff] 0.0
        %321 = vst [vmem:[#allocation2 + $0x20] sm:$0xff] 0.0
        %322 = vst [vmem:[#allocation2 + $0x28] sm:$0xff] 0.0
        %323 = vst [vmem:[#allocation2 + $0x30] sm:$0xff] 0.0
        %324 = vst [vmem:[#allocation2 + $0x38] sm:$0xff] 0.0
        %325 = vst [vmem:[#allocation2 + $0x40] sm:$0xff] 0.0
        %326 = vst [vmem:[#allocation2 + $0x48] sm:$0xff] 0.0
        %327 = vst [vmem:[#allocation2 + $0x50] sm:$0xff] 0.0
        %328 = vst [vmem:[#allocation2 + $0x58] sm:$0xff] 0.0
        %329 = vst [vmem:[#allocation2 + $0x60] sm:$0xff] 0.0
        %330 = vst [vmem:[#allocation2 + $0x68] sm:$0xff] 0.0
        %331 = vst [vmem:[#allocation2 + $0x70] sm:$0xff] 0.0
        %332 = vst [vmem:[#allocation2 + $0x78] sm:$0xff] 0.0
      $region48: #{nonlocal_block.2} parent=43 // pred_fallthru
        _
      %v333 = vld [vmem:[%s301] sm:$0xff]
      %v334 = vld [vmem:[%s301 + $0x20] sm:$0xff]
      %v335 = vld [vmem:[%s301 + $0x40] sm:$0xff]
      %v336 = vld [vmem:[%s301 + $0x60] sm:$0xff]
      %v337 = vld [vmem:[%s301 + $0x80] sm:$0xff]
      %v338 = vld [vmem:[%s301 + $0xa0] sm:$0xff]
      %v339 = vld [vmem:[%s301 + $0xc0] sm:$0xff]
      %v340 = vld [vmem:[%s301 + $0xe0] sm:$0xff]
      %v341 = vld [vmem:[%s301 + $0x100] sm:$0xff]
      %v342 = vld [vmem:[%s301 + $0x120] sm:$0xff]
      %v343 = vld [vmem:[%s301 + $0x140] sm:$0xff]
      %v344 = vld [vmem:[%s301 + $0x160] sm:$0xff]
      %v345 = vld [vmem:[%s301 + $0x180] sm:$0xff]
      %v346 = vld [vmem:[%s301 + $0x1a0] sm:$0xff]
      %v347 = vld [vmem:[%s301 + $0x1c0] sm:$0xff]
      %v348 = vld [vmem:[%s301 + $0x1e0] sm:$0xff]
      %v349 = vld [vmem:[%s301 + $0x200] sm:$0xff]
      %v350 = vld [vmem:[%s301 + $0x220] sm:$0xff]
      %v351 = vld [vmem:[%s301 + $0x240] sm:$0xff]
      %v352 = vld [vmem:[%s301 + $0x260] sm:$0xff]
      %v353 = vld [vmem:[%s301 + $0x280] sm:$0xff]
      %v354 = vld [vmem:[%s301 + $0x2a0] sm:$0xff]
      %v355 = vld [vmem:[%s301 + $0x2c0] sm:$0xff]
      %v356 = vld [vmem:[%s301 + $0x2e0] sm:$0xff]
      %v357 = vld [vmem:[%s301 + $0x300] sm:$0xff]
      %v358 = vld [vmem:[%s301 + $0x320] sm:$0xff]
      %v359 = vld [vmem:[%s301 + $0x340] sm:$0xff]
      %v360 = vld [vmem:[%s301 + $0x360] sm:$0xff]
      %v361 = vld [vmem:[%s301 + $0x380] sm:$0xff]
      %v362 = vld [vmem:[%s301 + $0x3a0] sm:$0xff]
      %v363 = vld [vmem:[%s301 + $0x3c0] sm:$0xff]
      %v364 = vld [vmem:[%s301 + $0x3e0] sm:$0xff]
      %v365 = vpack.c.bf16 %v334, %v333
      %v366 = vpack.c.bf16 %v336, %v335
      %v367 = vpack.c.bf16 %v338, %v337
      %v368 = vpack.c.bf16 %v340, %v339
      %v369 = vpack.c.bf16 %v342, %v341
      %v370 = vpack.c.bf16 %v344, %v343
      %v371 = vpack.c.bf16 %v346, %v345
      %v372 = vpack.c.bf16 %v348, %v347
      %v373 = vpack.c.bf16 %v350, %v349
      %v374 = vpack.c.bf16 %v352, %v351
      %v375 = vpack.c.bf16 %v354, %v353
      %v376 = vpack.c.bf16 %v356, %v355
      %v377 = vpack.c.bf16 %v358, %v357
      %v378 = vpack.c.bf16 %v360, %v359
      %v379 = vpack.c.bf16 %v362, %v361
      %v380 = vpack.c.bf16 %v364, %v363
      %v381 = vld [vmem:[%s1] sm:$0xff]
      %v382 = vld [vmem:[%s1 + $0x8] sm:$0xff]
      %v383 = vld [vmem:[%s1 + $0x10] sm:$0xff]
      %v384 = vld [vmem:[%s1 + $0x18] sm:$0xff]
      %v385 = vld [vmem:[%s1 + $0x20] sm:$0xff]
      %v386 = vld [vmem:[%s1 + $0x28] sm:$0xff]
      %v387 = vld [vmem:[%s1 + $0x30] sm:$0xff]
      %v388 = vld [vmem:[%s1 + $0x38] sm:$0xff]
      %v389 = vld [vmem:[%s1 + $0x40] sm:$0xff]
      %v390 = vld [vmem:[%s1 + $0x48] sm:$0xff]
      %v391 = vld [vmem:[%s1 + $0x50] sm:$0xff]
      %v392 = vld [vmem:[%s1 + $0x58] sm:$0xff]
      %v393 = vld [vmem:[%s1 + $0x60] sm:$0xff]
      %v394 = vld [vmem:[%s1 + $0x68] sm:$0xff]
      %v395 = vld [vmem:[%s1 + $0x70] sm:$0xff]
      %v396 = vld [vmem:[%s1 + $0x78] sm:$0xff]
      %v413 = vunpack.c.l.b16 %v381
      %v414 = vunpack.c.h.b16 %v381
      %v415 = vunpack.c.l.b16 %v382
      %v416 = vunpack.c.h.b16 %v382
      %v417 = vunpack.c.l.b16 %v383
      %v418 = vunpack.c.h.b16 %v383
      %v419 = vunpack.c.l.b16 %v384
      %v420 = vunpack.c.h.b16 %v384
      %v421 = vunpack.c.l.b16 %v385
      %v422 = vunpack.c.h.b16 %v385
      %v423 = vunpack.c.l.b16 %v386
      %v424 = vunpack.c.h.b16 %v386
      %v425 = vunpack.c.l.b16 %v387
      %v426 = vunpack.c.h.b16 %v387
      %v427 = vunpack.c.l.b16 %v388
      %v428 = vunpack.c.h.b16 %v388
      %v429 = vunpack.c.l.b16 %v389
      %v430 = vunpack.c.h.b16 %v389
      %v431 = vunpack.c.l.b16 %v390
      %v432 = vunpack.c.h.b16 %v390
      %v433 = vunpack.c.l.b16 %v391
      %v434 = vunpack.c.h.b16 %v391
      %v435 = vunpack.c.l.b16 %v392
      %v436 = vunpack.c.h.b16 %v392
      %v437 = vunpack.c.l.b16 %v393
      %v438 = vunpack.c.h.b16 %v393
      %v439 = vunpack.c.l.b16 %v394
      %v440 = vunpack.c.h.b16 %v394
      %v441 = vunpack.c.l.b16 %v395
      %v442 = vunpack.c.h.b16 %v395
      %v443 = vunpack.c.l.b16 %v396
      %v444 = vunpack.c.h.b16 %v396
      %v445 = vpack.c.b16 %v415, %v413
      %v446 = vpack.c.b16 %v416, %v414
      %v447 = vpack.c.b16 %v419, %v417
      %v448 = vpack.c.b16 %v420, %v418
      %v449 = vpack.c.b16 %v423, %v421
      %v450 = vpack.c.b16 %v424, %v422
      %v451 = vpack.c.b16 %v427, %v425
      %v452 = vpack.c.b16 %v428, %v426
      %v453 = vpack.c.b16 %v431, %v429
      %v454 = vpack.c.b16 %v432, %v430
      %v455 = vpack.c.b16 %v435, %v433
      %v456 = vpack.c.b16 %v436, %v434
      %v457 = vpack.c.b16 %v439, %v437
      %v458 = vpack.c.b16 %v440, %v438
      %v459 = vpack.c.b16 %v443, %v441
      %v460 = vpack.c.b16 %v444, %v442
      %477 = vmatprep.subr.bf16.mxu0 %v460
      %478 = vmatpush1.bf16.msra.mxu0 %v459
      %479 = vmatprep.subr.bf16.mxu0 %v458
      %480 = vmatpush1.bf16.msra.mxu0 %v457
      %481 = vmatprep.subr.bf16.mxu0 %v456
      %482 = vmatpush1.bf16.msra.mxu0 %v455
      %483 = vmatprep.subr.bf16.mxu0 %v454
      %484 = vmatpush1.bf16.msra.mxu0 %v453
      %485 = vmatprep.subr.bf16.mxu0 %v452
      %486 = vmatpush1.bf16.msra.mxu0 %v451
      %487 = vmatprep.subr.bf16.mxu0 %v450
      %488 = vmatpush1.bf16.msra.mxu0 %v449
      %489 = vmatprep.subr.bf16.mxu0 %v448
      %490 = vmatpush1.bf16.msra.mxu0 %v447
      %491 = vmatprep.subr.bf16.mxu0 %v446
      %492 = vmatpush1.bf16.msra.mxu0 %v445
      %493 = vmatprep.subr.bf16.mxu0 0
      %494 = vmatpush2.bf16.msra.mxu0 0
      %495 = vmatprep.subr.bf16.mxu0 0
      %496 = vmatpush2.bf16.msra.mxu0 0
      %497 = vmatprep.subr.bf16.mxu0 0
      %498 = vmatpush2.bf16.msra.mxu0 0
      %499 = vmatprep.subr.bf16.mxu0 0
      %500 = vmatpush2.bf16.msra.mxu0 0
      %501 = vmatprep.subr.bf16.mxu0 0
      %502 = vmatpush2.bf16.msra.mxu0 0
      %503 = vmatprep.subr.bf16.mxu0 0
      %504 = vmatpush2.bf16.msra.mxu0 0
      %505 = vmatprep.subr.bf16.mxu0 0
      %506 = vmatpush2.bf16.msra.mxu0 0
      %507 = vmatprep.subr.bf16.mxu0 0
      %508 = vmatpush2.bf16.msra.mxu0 0
      %509 = vmatprep.mubr.bf16.mxu0 0
      %510 = vmatmul.mubr.bf16.gmra.mxu0 %v365
      %v511 = vpop.f32.mrf.mxu0
      %v512 = vadd.f32 0.0, %v511
      %v513 = vpop.f32.mrf.mxu0
      %v514 = vadd.f32 0.0, %v513
      %v515 = vpop.f32.mrf.mxu0
      %v516 = vadd.f32 0.0, %v515
      %v517 = vpop.f32.mrf.mxu0
      %v518 = vadd.f32 0.0, %v517
      %519 = vmatprep.mubr.bf16.mxu0 0
      %520 = vmatmul.mubr.bf16.gmra.mxu0 %v366
      %v521 = vpop.f32.mrf.mxu0
      %v522 = vadd.f32 0.0, %v521
      %v523 = vpop.f32.mrf.mxu0
      %v524 = vadd.f32 0.0, %v523
      %v525 = vpop.f32.mrf.mxu0
      %v526 = vadd.f32 0.0, %v525
      %v527 = vpop.f32.mrf.mxu0
      %v528 = vadd.f32 0.0, %v527
      %529 = vmatprep.mubr.bf16.mxu0 0
      %530 = vmatmul.mubr.bf16.gmra.mxu0 %v367
      %v531 = vpop.f32.mrf.mxu0
      %v532 = vadd.f32 0.0, %v531
      %v533 = vpop.f32.mrf.mxu0
      %v534 = vadd.f32 0.0, %v533
      %v535 = vpop.f32.mrf.mxu0
      %v536 = vadd.f32 0.0, %v535
      %v537 = vpop.f32.mrf.mxu0
      %v538 = vadd.f32 0.0, %v537
      %539 = vmatprep.mubr.bf16.mxu0 0
      %540 = vmatmul.mubr.bf16.gmra.mxu0 %v368
      %v541 = vpop.f32.mrf.mxu0
      %v542 = vadd.f32 0.0, %v541
      %v543 = vpop.f32.mrf.mxu0
      %v544 = vadd.f32 0.0, %v543
      %v545 = vpop.f32.mrf.mxu0
      %v546 = vadd.f32 0.0, %v545
      %v547 = vpop.f32.mrf.mxu0
      %v548 = vadd.f32 0.0, %v547
      %549 = vmatprep.mubr.bf16.mxu0 0
      %550 = vmatmul.mubr.bf16.gmra.mxu0 %v369
      %v551 = vpop.f32.mrf.mxu0
      %v552 = vadd.f32 0.0, %v551
      %v553 = vpop.f32.mrf.mxu0
      %v554 = vadd.f32 0.0, %v553
      %v555 = vpop.f32.mrf.mxu0
      %v556 = vadd.f32 0.0, %v555
      %v557 = vpop.f32.mrf.mxu0
      %v558 = vadd.f32 0.0, %v557
      %559 = vmatprep.mubr.bf16.mxu0 0
      %560 = vmatmul.mubr.bf16.gmra.mxu0 %v370
      %v561 = vpop.f32.mrf.mxu0
      %v562 = vadd.f32 0.0, %v561
      %v563 = vpop.f32.mrf.mxu0
      %v564 = vadd.f32 0.0, %v563
      %v565 = vpop.f32.mrf.mxu0
      %v566 = vadd.f32 0.0, %v565
      %v567 = vpop.f32.mrf.mxu0
      %v568 = vadd.f32 0.0, %v567
      %569 = vmatprep.mubr.bf16.mxu0 0
      %570 = vmatmul.mubr.bf16.gmra.mxu0 %v371
      %v571 = vpop.f32.mrf.mxu0
      %v572 = vadd.f32 0.0, %v571
      %v573 = vpop.f32.mrf.mxu0
      %v574 = vadd.f32 0.0, %v573
      %v575 = vpop.f32.mrf.mxu0
      %v576 = vadd.f32 0.0, %v575
      %v577 = vpop.f32.mrf.mxu0
      %v578 = vadd.f32 0.0, %v577
      %579 = vmatprep.mubr.bf16.mxu0 0
      %580 = vmatmul.mubr.bf16.gmra.mxu0 %v372
      %v581 = vpop.f32.mrf.mxu0
      %v582 = vadd.f32 0.0, %v581
      %v583 = vpop.f32.mrf.mxu0
      %v584 = vadd.f32 0.0, %v583
      %v585 = vpop.f32.mrf.mxu0
      %v586 = vadd.f32 0.0, %v585
      %v587 = vpop.f32.mrf.mxu0
      %v588 = vadd.f32 0.0, %v587
      %589 = vmatprep.mubr.bf16.mxu0 0
      %590 = vmatmul.mubr.bf16.gmra.mxu0 %v373
      %v591 = vpop.f32.mrf.mxu0
      %v592 = vadd.f32 0.0, %v591
      %v593 = vpop.f32.mrf.mxu0
      %v594 = vadd.f32 0.0, %v593
      %v595 = vpop.f32.mrf.mxu0
      %v596 = vadd.f32 0.0, %v595
      %v597 = vpop.f32.mrf.mxu0
      %v598 = vadd.f32 0.0, %v597
      %599 = vmatprep.mubr.bf16.mxu0 0
      %600 = vmatmul.mubr.bf16.gmra.mxu0 %v374
      %v601 = vpop.f32.mrf.mxu0
      %v602 = vadd.f32 0.0, %v601
      %v603 = vpop.f32.mrf.mxu0
      %v604 = vadd.f32 0.0, %v603
      %v605 = vpop.f32.mrf.mxu0
      %v606 = vadd.f32 0.0, %v605
      %v607 = vpop.f32.mrf.mxu0
      %v608 = vadd.f32 0.0, %v607
      %609 = vmatprep.mubr.bf16.mxu0 0
      %610 = vmatmul.mubr.bf16.gmra.mxu0 %v375
      %v611 = vpop.f32.mrf.mxu0
      %v612 = vadd.f32 0.0, %v611
      %v613 = vpop.f32.mrf.mxu0
      %v614 = vadd.f32 0.0, %v613
      %v615 = vpop.f32.mrf.mxu0
      %v616 = vadd.f32 0.0, %v615
      %v617 = vpop.f32.mrf.mxu0
      %v618 = vadd.f32 0.0, %v617
      %619 = vmatprep.mubr.bf16.mxu0 0
      %620 = vmatmul.mubr.bf16.gmra.mxu0 %v376
      %v621 = vpop.f32.mrf.mxu0
      %v622 = vadd.f32 0.0, %v621
      %v623 = vpop.f32.mrf.mxu0
      %v624 = vadd.f32 0.0, %v623
      %v625 = vpop.f32.mrf.mxu0
      %v626 = vadd.f32 0.0, %v625
      %v627 = vpop.f32.mrf.mxu0
      %v628 = vadd.f32 0.0, %v627
      %629 = vmatprep.mubr.bf16.mxu0 0
      %630 = vmatmul.mubr.bf16.gmra.mxu0 %v377
      %v631 = vpop.f32.mrf.mxu0
      %v632 = vadd.f32 0.0, %v631
      %v633 = vpop.f32.mrf.mxu0
      %v634 = vadd.f32 0.0, %v633
      %v635 = vpop.f32.mrf.mxu0
      %v636 = vadd.f32 0.0, %v635
      %v637 = vpop.f32.mrf.mxu0
      %v638 = vadd.f32 0.0, %v637
      %639 = vmatprep.mubr.bf16.mxu0 0
      %640 = vmatmul.mubr.bf16.gmra.mxu0 %v378
      %v641 = vpop.f32.mrf.mxu0
      %v642 = vadd.f32 0.0, %v641
      %v643 = vpop.f32.mrf.mxu0
      %v644 = vadd.f32 0.0, %v643
      %v645 = vpop.f32.mrf.mxu0
      %v646 = vadd.f32 0.0, %v645
      %v647 = vpop.f32.mrf.mxu0
      %v648 = vadd.f32 0.0, %v647
      %649 = vmatprep.mubr.bf16.mxu0 0
      %650 = vmatmul.mubr.bf16.gmra.mxu0 %v379
      %v651 = vpop.f32.mrf.mxu0
      %v652 = vadd.f32 0.0, %v651
      %v653 = vpop.f32.mrf.mxu0
      %v654 = vadd.f32 0.0, %v653
      %v655 = vpop.f32.mrf.mxu0
      %v656 = vadd.f32 0.0, %v655
      %v657 = vpop.f32.mrf.mxu0
      %v658 = vadd.f32 0.0, %v657
      %659 = vmatprep.mubr.bf16.mxu0 0
      %660 = vmatmul.mubr.bf16.gmra.mxu0 %v380
      %v661 = vpop.f32.mrf.mxu0
      %v662 = vadd.f32 0.0, %v661
      %v663 = vpop.f32.mrf.mxu0
      %v664 = vadd.f32 0.0, %v663
      %v665 = vpop.f32.mrf.mxu0
      %v666 = vadd.f32 0.0, %v665
      %v667 = vpop.f32.mrf.mxu0
      %v668 = vadd.f32 0.0, %v667
      %669 = vdwg.mxu0
      %v670 = vld [vmem:[%s301 + $0x8] sm:$0xff]
      %v671 = vld [vmem:[%s301 + $0x28] sm:$0xff]
      %v672 = vld [vmem:[%s301 + $0x48] sm:$0xff]
      %v673 = vld [vmem:[%s301 + $0x68] sm:$0xff]
      %v674 = vld [vmem:[%s301 + $0x88] sm:$0xff]
      %v675 = vld [vmem:[%s301 + $0xa8] sm:$0xff]
      %v676 = vld [vmem:[%s301 + $0xc8] sm:$0xff]
      %v677 = vld [vmem:[%s301 + $0xe8] sm:$0xff]
      %v678 = vld [vmem:[%s301 + $0x108] sm:$0xff]
      %v679 = vld [vmem:[%s301 + $0x128] sm:$0xff]
      %v680 = vld [vmem:[%s301 + $0x148] sm:$0xff]
      %v681 = vld [vmem:[%s301 + $0x168] sm:$0xff]
      %v682 = vld [vmem:[%s301 + $0x188] sm:$0xff]
      %v683 = vld [vmem:[%s301 + $0x1a8] sm:$0xff]
      %v684 = vld [vmem:[%s301 + $0x1c8] sm:$0xff]
      %v685 = vld [vmem:[%s301 + $0x1e8] sm:$0xff]
      %v686 = vld [vmem:[%s301 + $0x208] sm:$0xff]
      %v687 = vld [vmem:[%s301 + $0x228] sm:$0xff]
      %v688 = vld [vmem:[%s301 + $0x248] sm:$0xff]
      %v689 = vld [vmem:[%s301 + $0x268] sm:$0xff]
      %v690 = vld [vmem:[%s301 + $0x288] sm:$0xff]
      %v691 = vld [vmem:[%s301 + $0x2a8] sm:$0xff]
      %v692 = vld [vmem:[%s301 + $0x2c8] sm:$0xff]
      %v693 = vld [vmem:[%s301 + $0x2e8] sm:$0xff]
      %v694 = vld [vmem:[%s301 + $0x308] sm:$0xff]
      %v695 = vld [vmem:[%s301 + $0x328] sm:$0xff]
      %v696 = vld [vmem:[%s301 + $0x348] sm:$0xff]
      %v697 = vld [vmem:[%s301 + $0x368] sm:$0xff]
      %v698 = vld [vmem:[%s301 + $0x388] sm:$0xff]
      %v699 = vld [vmem:[%s301 + $0x3a8] sm:$0xff]
      %v700 = vld [vmem:[%s301 + $0x3c8] sm:$0xff]
      %v701 = vld [vmem:[%s301 + $0x3e8] sm:$0xff]
      %v702 = vpack.c.bf16 %v671, %v670
      %v703 = vpack.c.bf16 %v673, %v672
      %v704 = vpack.c.bf16 %v675, %v674
      %v705 = vpack.c.bf16 %v677, %v676
      %v706 = vpack.c.bf16 %v679, %v678
      %v707 = vpack.c.bf16 %v681, %v680
      %v708 = vpack.c.bf16 %v683, %v682
      %v709 = vpack.c.bf16 %v685, %v684
      %v710 = vpack.c.bf16 %v687, %v686
      %v711 = vpack.c.bf16 %v689, %v688
      %v712 = vpack.c.bf16 %v691, %v690
      %v713 = vpack.c.bf16 %v693, %v692
      %v714 = vpack.c.bf16 %v695, %v694
      %v715 = vpack.c.bf16 %v697, %v696
      %v716 = vpack.c.bf16 %v699, %v698
      %v717 = vpack.c.bf16 %v701, %v700
      %718 = vmatprep.subr.bf16.mxu0 %v460
      %719 = vmatpush1.bf16.msra.mxu0 %v459
      %720 = vmatprep.subr.bf16.mxu0 %v458
      %721 = vmatpush1.bf16.msra.mxu0 %v457
      %722 = vmatprep.subr.bf16.mxu0 %v456
      %723 = vmatpush1.bf16.msra.mxu0 %v455
      %724 = vmatprep.subr.bf16.mxu0 %v454
      %725 = vmatpush1.bf16.msra.mxu0 %v453
      %726 = vmatprep.subr.bf16.mxu0 %v452
      %727 = vmatpush1.bf16.msra.mxu0 %v451
      %728 = vmatprep.subr.bf16.mxu0 %v450
      %729 = vmatpush1.bf16.msra.mxu0 %v449
      %730 = vmatprep.subr.bf16.mxu0 %v448
      %731 = vmatpush1.bf16.msra.mxu0 %v447
      %732 = vmatprep.subr.bf16.mxu0 %v446
      %733 = vmatpush1.bf16.msra.mxu0 %v445
      %734 = vmatprep.subr.bf16.mxu0 0
      %735 = vmatpush2.bf16.msra.mxu0 0
      %736 = vmatprep.subr.bf16.mxu0 0
      %737 = vmatpush2.bf16.msra.mxu0 0
      %738 = vmatprep.subr.bf16.mxu0 0
      %739 = vmatpush2.bf16.msra.mxu0 0
      %740 = vmatprep.subr.bf16.mxu0 0
      %741 = vmatpush2.bf16.msra.mxu0 0
      %742 = vmatprep.subr.bf16.mxu0 0
      %743 = vmatpush2.bf16.msra.mxu0 0
      %744 = vmatprep.subr.bf16.mxu0 0
      %745 = vmatpush2.bf16.msra.mxu0 0
      %746 = vmatprep.subr.bf16.mxu0 0
      %747 = vmatpush2.bf16.msra.mxu0 0
      %748 = vmatprep.subr.bf16.mxu0 0
      %749 = vmatpush2.bf16.msra.mxu0 0
      %750 = vmatprep.mubr.bf16.mxu0 0
      %751 = vmatmul.mubr.bf16.gmra.mxu0 %v702
      %v752 = vpop.f32.mrf.mxu0
      %v753 = vadd.f32 0.0, %v752
      %v754 = vpop.f32.mrf.mxu0
      %v755 = vadd.f32 0.0, %v754
      %v756 = vpop.f32.mrf.mxu0
      %v757 = vadd.f32 0.0, %v756
      %v758 = vpop.f32.mrf.mxu0
      %v759 = vadd.f32 0.0, %v758
      %760 = vmatprep.mubr.bf16.mxu0 0
      %761 = vmatmul.mubr.bf16.gmra.mxu0 %v703
      %v762 = vpop.f32.mrf.mxu0
      %v763 = vadd.f32 0.0, %v762
      %v764 = vpop.f32.mrf.mxu0
      %v765 = vadd.f32 0.0, %v764
      %v766 = vpop.f32.mrf.mxu0
      %v767 = vadd.f32 0.0, %v766
      %v768 = vpop.f32.mrf.mxu0
      %v769 = vadd.f32 0.0, %v768
      %770 = vmatprep.mubr.bf16.mxu0 0
      %771 = vmatmul.mubr.bf16.gmra.mxu0 %v704
      %v772 = vpop.f32.mrf.mxu0
      %v773 = vadd.f32 0.0, %v772
      %v774 = vpop.f32.mrf.mxu0
      %v775 = vadd.f32 0.0, %v774
      %v776 = vpop.f32.mrf.mxu0
      %v777 = vadd.f32 0.0, %v776
      %v778 = vpop.f32.mrf.mxu0
      %v779 = vadd.f32 0.0, %v778
      %780 = vmatprep.mubr.bf16.mxu0 0
      %781 = vmatmul.mubr.bf16.gmra.mxu0 %v705
      %v782 = vpop.f32.mrf.mxu0
      %v783 = vadd.f32 0.0, %v782
      %v784 = vpop.f32.mrf.mxu0
      %v785 = vadd.f32 0.0, %v784
      %v786 = vpop.f32.mrf.mxu0
      %v787 = vadd.f32 0.0, %v786
      %v788 = vpop.f32.mrf.mxu0
      %v789 = vadd.f32 0.0, %v788
      %790 = vmatprep.mubr.bf16.mxu0 0
      %791 = vmatmul.mubr.bf16.gmra.mxu0 %v706
      %v792 = vpop.f32.mrf.mxu0
      %v793 = vadd.f32 0.0, %v792
      %v794 = vpop.f32.mrf.mxu0
      %v795 = vadd.f32 0.0, %v794
      %v796 = vpop.f32.mrf.mxu0
      %v797 = vadd.f32 0.0, %v796
      %v798 = vpop.f32.mrf.mxu0
      %v799 = vadd.f32 0.0, %v798
      %800 = vmatprep.mubr.bf16.mxu0 0
      %801 = vmatmul.mubr.bf16.gmra.mxu0 %v707
      %v802 = vpop.f32.mrf.mxu0
      %v803 = vadd.f32 0.0, %v802
      %v804 = vpop.f32.mrf.mxu0
      %v805 = vadd.f32 0.0, %v804
      %v806 = vpop.f32.mrf.mxu0
      %v807 = vadd.f32 0.0, %v806
      %v808 = vpop.f32.mrf.mxu0
      %v809 = vadd.f32 0.0, %v808
      %810 = vmatprep.mubr.bf16.mxu0 0
      %811 = vmatmul.mubr.bf16.gmra.mxu0 %v708
      %v812 = vpop.f32.mrf.mxu0
      %v813 = vadd.f32 0.0, %v812
      %v814 = vpop.f32.mrf.mxu0
      %v815 = vadd.f32 0.0, %v814
      %v816 = vpop.f32.mrf.mxu0
      %v817 = vadd.f32 0.0, %v816
      %v818 = vpop.f32.mrf.mxu0
      %v819 = vadd.f32 0.0, %v818
      %820 = vmatprep.mubr.bf16.mxu0 0
      %821 = vmatmul.mubr.bf16.gmra.mxu0 %v709
      %v822 = vpop.f32.mrf.mxu0
      %v823 = vadd.f32 0.0, %v822
      %v824 = vpop.f32.mrf.mxu0
      %v825 = vadd.f32 0.0, %v824
      %v826 = vpop.f32.mrf.mxu0
      %v827 = vadd.f32 0.0, %v826
      %v828 = vpop.f32.mrf.mxu0
      %v829 = vadd.f32 0.0, %v828
      %830 = vmatprep.mubr.bf16.mxu0 0
      %831 = vmatmul.mubr.bf16.gmra.mxu0 %v710
      %v832 = vpop.f32.mrf.mxu0
      %v833 = vadd.f32 0.0, %v832
      %v834 = vpop.f32.mrf.mxu0
      %v835 = vadd.f32 0.0, %v834
      %v836 = vpop.f32.mrf.mxu0
      %v837 = vadd.f32 0.0, %v836
      %v838 = vpop.f32.mrf.mxu0
      %v839 = vadd.f32 0.0, %v838
      %840 = vmatprep.mubr.bf16.mxu0 0
      %841 = vmatmul.mubr.bf16.gmra.mxu0 %v711
      %v842 = vpop.f32.mrf.mxu0
      %v843 = vadd.f32 0.0, %v842
      %v844 = vpop.f32.mrf.mxu0
      %v845 = vadd.f32 0.0, %v844
      %v846 = vpop.f32.mrf.mxu0
      %v847 = vadd.f32 0.0, %v846
      %v848 = vpop.f32.mrf.mxu0
      %v849 = vadd.f32 0.0, %v848
      %850 = vmatprep.mubr.bf16.mxu0 0
      %851 = vmatmul.mubr.bf16.gmra.mxu0 %v712
      %v852 = vpop.f32.mrf.mxu0
      %v853 = vadd.f32 0.0, %v852
      %v854 = vpop.f32.mrf.mxu0
      %v855 = vadd.f32 0.0, %v854
      %v856 = vpop.f32.mrf.mxu0
      %v857 = vadd.f32 0.0, %v856
      %v858 = vpop.f32.mrf.mxu0
      %v859 = vadd.f32 0.0, %v858
      %860 = vmatprep.mubr.bf16.mxu0 0
      %861 = vmatmul.mubr.bf16.gmra.mxu0 %v713
      %v862 = vpop.f32.mrf.mxu0
      %v863 = vadd.f32 0.0, %v862
      %v864 = vpop.f32.mrf.mxu0
      %v865 = vadd.f32 0.0, %v864
      %v866 = vpop.f32.mrf.mxu0
      %v867 = vadd.f32 0.0, %v866
      %v868 = vpop.f32.mrf.mxu0
      %v869 = vadd.f32 0.0, %v868
      %870 = vmatprep.mubr.bf16.mxu0 0
      %871 = vmatmul.mubr.bf16.gmra.mxu0 %v714
      %v872 = vpop.f32.mrf.mxu0
      %v873 = vadd.f32 0.0, %v872
      %v874 = vpop.f32.mrf.mxu0
      %v875 = vadd.f32 0.0, %v874
      %v876 = vpop.f32.mrf.mxu0
      %v877 = vadd.f32 0.0, %v876
      %v878 = vpop.f32.mrf.mxu0
      %v879 = vadd.f32 0.0, %v878
      %880 = vmatprep.mubr.bf16.mxu0 0
      %881 = vmatmul.mubr.bf16.gmra.mxu0 %v715
      %v882 = vpop.f32.mrf.mxu0
      %v883 = vadd.f32 0.0, %v882
      %v884 = vpop.f32.mrf.mxu0
      %v885 = vadd.f32 0.0, %v884
      %v886 = vpop.f32.mrf.mxu0
      %v887 = vadd.f32 0.0, %v886
      %v888 = vpop.f32.mrf.mxu0
      %v889 = vadd.f32 0.0, %v888
      %890 = vmatprep.mubr.bf16.mxu0 0
      %891 = vmatmul.mubr.bf16.gmra.mxu0 %v716
      %v892 = vpop.f32.mrf.mxu0
      %v893 = vadd.f32 0.0, %v892
      %v894 = vpop.f32.mrf.mxu0
      %v895 = vadd.f32 0.0, %v894
      %v896 = vpop.f32.mrf.mxu0
      %v897 = vadd.f32 0.0, %v896
      %v898 = vpop.f32.mrf.mxu0
      %v899 = vadd.f32 0.0, %v898
      %900 = vmatprep.mubr.bf16.mxu0 0
      %901 = vmatmul.mubr.bf16.gmra.mxu0 %v717
      %v902 = vpop.f32.mrf.mxu0
      %v903 = vadd.f32 0.0, %v902
      %v904 = vpop.f32.mrf.mxu0
      %v905 = vadd.f32 0.0, %v904
      %v906 = vpop.f32.mrf.mxu0
      %v907 = vadd.f32 0.0, %v906
      %v908 = vpop.f32.mrf.mxu0
      %v909 = vadd.f32 0.0, %v908
      %910 = vdwg.mxu0
      %v911 = vmax.f32 %v512, %v753
      %v912 = vmax.f32 %v514, %v755
      %v913 = vmax.f32 %v516, %v757
      %v914 = vmax.f32 %v518, %v759
      %v915 = vmax.f32 %v522, %v763
      %v916 = vmax.f32 %v524, %v765
      %v917 = vmax.f32 %v526, %v767
      %v918 = vmax.f32 %v528, %v769
      %v919 = vmax.f32 %v532, %v773
      %v920 = vmax.f32 %v534, %v775
      %v921 = vmax.f32 %v536, %v777
      %v922 = vmax.f32 %v538, %v779
      %v923 = vmax.f32 %v542, %v783
      %v924 = vmax.f32 %v544, %v785
      %v925 = vmax.f32 %v546, %v787
      %v926 = vmax.f32 %v548, %v789
      %v927 = vmax.f32 %v552, %v793
      %v928 = vmax.f32 %v554, %v795
      %v929 = vmax.f32 %v556, %v797
      %v930 = vmax.f32 %v558, %v799
      %v931 = vmax.f32 %v562, %v803
      %v932 = vmax.f32 %v564, %v805
      %v933 = vmax.f32 %v566, %v807
      %v934 = vmax.f32 %v568, %v809
      %v935 = vmax.f32 %v572, %v813
      %v936 = vmax.f32 %v574, %v815
      %v937 = vmax.f32 %v576, %v817
      %v938 = vmax.f32 %v578, %v819
      %v939 = vmax.f32 %v582, %v823
      %v940 = vmax.f32 %v584, %v825
      %v941 = vmax.f32 %v586, %v827
      %v942 = vmax.f32 %v588, %v829
      %v943 = vmax.f32 %v592, %v833
      %v944 = vmax.f32 %v594, %v835
      %v945 = vmax.f32 %v596, %v837
      %v946 = vmax.f32 %v598, %v839
      %v947 = vmax.f32 %v602, %v843
      %v948 = vmax.f32 %v604, %v845
      %v949 = vmax.f32 %v606, %v847
      %v950 = vmax.f32 %v608, %v849
      %v951 = vmax.f32 %v612, %v853
      %v952 = vmax.f32 %v614, %v855
      %v953 = vmax.f32 %v616, %v857
      %v954 = vmax.f32 %v618, %v859
      %v955 = vmax.f32 %v622, %v863
      %v956 = vmax.f32 %v624, %v865
      %v957 = vmax.f32 %v626, %v867
      %v958 = vmax.f32 %v628, %v869
      %v959 = vmax.f32 %v632, %v873
      %v960 = vmax.f32 %v634, %v875
      %v961 = vmax.f32 %v636, %v877
      %v962 = vmax.f32 %v638, %v879
      %v963 = vmax.f32 %v642, %v883
      %v964 = vmax.f32 %v644, %v885
      %v965 = vmax.f32 %v646, %v887
      %v966 = vmax.f32 %v648, %v889
      %v967 = vmax.f32 %v652, %v893
      %v968 = vmax.f32 %v654, %v895
      %v969 = vmax.f32 %v656, %v897
      %v970 = vmax.f32 %v658, %v899
      %v971 = vmax.f32 %v662, %v903
      %v972 = vmax.f32 %v664, %v905
      %v973 = vmax.f32 %v666, %v907
      %v974 = vmax.f32 %v668, %v909
      %s975 = scalar_lea.vmem %s301, 16
      %v976 = vld [vmem:[%s975] sm:$0xff]
      %v977 = vld [vmem:[%s975 + $0x20] sm:$0xff]
      %v978 = vld [vmem:[%s975 + $0x40] sm:$0xff]
      %v979 = vld [vmem:[%s975 + $0x60] sm:$0xff]
      %v980 = vld [vmem:[%s975 + $0x80] sm:$0xff]
      %v981 = vld [vmem:[%s975 + $0xa0] sm:$0xff]
      %v982 = vld [vmem:[%s975 + $0xc0] sm:$0xff]
      %v983 = vld [vmem:[%s975 + $0xe0] sm:$0xff]
      %v984 = vld [vmem:[%s975 + $0x100] sm:$0xff]
      %v985 = vld [vmem:[%s975 + $0x120] sm:$0xff]
      %v986 = vld [vmem:[%s975 + $0x140] sm:$0xff]
      %v987 = vld [vmem:[%s975 + $0x160] sm:$0xff]
      %v988 = vld [vmem:[%s975 + $0x180] sm:$0xff]
      %v989 = vld [vmem:[%s975 + $0x1a0] sm:$0xff]
      %v990 = vld [vmem:[%s975 + $0x1c0] sm:$0xff]
      %v991 = vld [vmem:[%s975 + $0x1e0] sm:$0xff]
      %v992 = vld [vmem:[%s975 + $0x200] sm:$0xff]
      %v993 = vld [vmem:[%s975 + $0x220] sm:$0xff]
      %v994 = vld [vmem:[%s975 + $0x240] sm:$0xff]
      %v995 = vld [vmem:[%s975 + $0x260] sm:$0xff]
      %v996 = vld [vmem:[%s975 + $0x280] sm:$0xff]
      %v997 = vld [vmem:[%s975 + $0x2a0] sm:$0xff]
      %v998 = vld [vmem:[%s975 + $0x2c0] sm:$0xff]
      %v999 = vld [vmem:[%s975 + $0x2e0] sm:$0xff]
      %v1000 = vld [vmem:[%s975 + $0x300] sm:$0xff]
      %v1001 = vld [vmem:[%s975 + $0x320] sm:$0xff]
      %v1002 = vld [vmem:[%s975 + $0x340] sm:$0xff]
      %v1003 = vld [vmem:[%s975 + $0x360] sm:$0xff]
      %v1004 = vld [vmem:[%s975 + $0x380] sm:$0xff]
      %v1005 = vld [vmem:[%s975 + $0x3a0] sm:$0xff]
      %v1006 = vld [vmem:[%s975 + $0x3c0] sm:$0xff]
      %v1007 = vld [vmem:[%s975 + $0x3e0] sm:$0xff]
      %v1008 = vpack.c.bf16 %v977, %v976
      %v1009 = vpack.c.bf16 %v979, %v978
      %v1010 = vpack.c.bf16 %v981, %v980
      %v1011 = vpack.c.bf16 %v983, %v982
      %v1012 = vpack.c.bf16 %v985, %v984
      %v1013 = vpack.c.bf16 %v987, %v986
      %v1014 = vpack.c.bf16 %v989, %v988
      %v1015 = vpack.c.bf16 %v991, %v990
      %v1016 = vpack.c.bf16 %v993, %v992
      %v1017 = vpack.c.bf16 %v995, %v994
      %v1018 = vpack.c.bf16 %v997, %v996
      %v1019 = vpack.c.bf16 %v999, %v998
      %v1020 = vpack.c.bf16 %v1001, %v1000
      %v1021 = vpack.c.bf16 %v1003, %v1002
      %v1022 = vpack.c.bf16 %v1005, %v1004
      %v1023 = vpack.c.bf16 %v1007, %v1006
      %1024 = vmatprep.subr.bf16.mxu0 %v460
      %1025 = vmatpush1.bf16.msra.mxu0 %v459
      %1026 = vmatprep.subr.bf16.mxu0 %v458
      %1027 = vmatpush1.bf16.msra.mxu0 %v457
      %1028 = vmatprep.subr.bf16.mxu0 %v456
      %1029 = vmatpush1.bf16.msra.mxu0 %v455
      %1030 = vmatprep.subr.bf16.mxu0 %v454
      %1031 = vmatpush1.bf16.msra.mxu0 %v453
      %1032 = vmatprep.subr.bf16.mxu0 %v452
      %1033 = vmatpush1.bf16.msra.mxu0 %v451
      %1034 = vmatprep.subr.bf16.mxu0 %v450
      %1035 = vmatpush1.bf16.msra.mxu0 %v449
      %1036 = vmatprep.subr.bf16.mxu0 %v448
      %1037 = vmatpush1.bf16.msra.mxu0 %v447
      %1038 = vmatprep.subr.bf16.mxu0 %v446
      %1039 = vmatpush1.bf16.msra.mxu0 %v445
      %1040 = vmatprep.subr.bf16.mxu0 0
      %1041 = vmatpush2.bf16.msra.mxu0 0
      %1042 = vmatprep.subr.bf16.mxu0 0
      %1043 = vmatpush2.bf16.msra.mxu0 0
      %1044 = vmatprep.subr.bf16.mxu0 0
      %1045 = vmatpush2.bf16.msra.mxu0 0
      %1046 = vmatprep.subr.bf16.mxu0 0
      %1047 = vmatpush2.bf16.msra.mxu0 0
      %1048 = vmatprep.subr.bf16.mxu0 0
      %1049 = vmatpush2.bf16.msra.mxu0 0
      %1050 = vmatprep.subr.bf16.mxu0 0
      %1051 = vmatpush2.bf16.msra.mxu0 0
      %1052 = vmatprep.subr.bf16.mxu0 0
      %1053 = vmatpush2.bf16.msra.mxu0 0
      %1054 = vmatprep.subr.bf16.mxu0 0
      %1055 = vmatpush2.bf16.msra.mxu0 0
      %1056 = vmatprep.mubr.bf16.mxu0 0
      %1057 = vmatmul.mubr.bf16.gmra.mxu0 %v1008
      %v1058 = vpop.f32.mrf.mxu0
      %v1059 = vadd.f32 0.0, %v1058
      %v1060 = vpop.f32.mrf.mxu0
      %v1061 = vadd.f32 0.0, %v1060
      %v1062 = vpop.f32.mrf.mxu0
      %v1063 = vadd.f32 0.0, %v1062
      %v1064 = vpop.f32.mrf.mxu0
      %v1065 = vadd.f32 0.0, %v1064
      %1066 = vmatprep.mubr.bf16.mxu0 0
      %1067 = vmatmul.mubr.bf16.gmra.mxu0 %v1009
      %v1068 = vpop.f32.mrf.mxu0
      %v1069 = vadd.f32 0.0, %v1068
      %v1070 = vpop.f32.mrf.mxu0
      %v1071 = vadd.f32 0.0, %v1070
      %v1072 = vpop.f32.mrf.mxu0
      %v1073 = vadd.f32 0.0, %v1072
      %v1074 = vpop.f32.mrf.mxu0
      %v1075 = vadd.f32 0.0, %v1074
      %1076 = vmatprep.mubr.bf16.mxu0 0
      %1077 = vmatmul.mubr.bf16.gmra.mxu0 %v1010
      %v1078 = vpop.f32.mrf.mxu0
      %v1079 = vadd.f32 0.0, %v1078
      %v1080 = vpop.f32.mrf.mxu0
      %v1081 = vadd.f32 0.0, %v1080
      %v1082 = vpop.f32.mrf.mxu0
      %v1083 = vadd.f32 0.0, %v1082
      %v1084 = vpop.f32.mrf.mxu0
      %v1085 = vadd.f32 0.0, %v1084
      %1086 = vmatprep.mubr.bf16.mxu0 0
      %1087 = vmatmul.mubr.bf16.gmra.mxu0 %v1011
      %v1088 = vpop.f32.mrf.mxu0
      %v1089 = vadd.f32 0.0, %v1088
      %v1090 = vpop.f32.mrf.mxu0
      %v1091 = vadd.f32 0.0, %v1090
      %v1092 = vpop.f32.mrf.mxu0
      %v1093 = vadd.f32 0.0, %v1092
      %v1094 = vpop.f32.mrf.mxu0
      %v1095 = vadd.f32 0.0, %v1094
      %1096 = vmatprep.mubr.bf16.mxu0 0
      %1097 = vmatmul.mubr.bf16.gmra.mxu0 %v1012
      %v1098 = vpop.f32.mrf.mxu0
      %v1099 = vadd.f32 0.0, %v1098
      %v1100 = vpop.f32.mrf.mxu0
      %v1101 = vadd.f32 0.0, %v1100
      %v1102 = vpop.f32.mrf.mxu0
      %v1103 = vadd.f32 0.0, %v1102
      %v1104 = vpop.f32.mrf.mxu0
      %v1105 = vadd.f32 0.0, %v1104
      %1106 = vmatprep.mubr.bf16.mxu0 0
      %1107 = vmatmul.mubr.bf16.gmra.mxu0 %v1013
      %v1108 = vpop.f32.mrf.mxu0
      %v1109 = vadd.f32 0.0, %v1108
      %v1110 = vpop.f32.mrf.mxu0
      %v1111 = vadd.f32 0.0, %v1110
      %v1112 = vpop.f32.mrf.mxu0
      %v1113 = vadd.f32 0.0, %v1112
      %v1114 = vpop.f32.mrf.mxu0
      %v1115 = vadd.f32 0.0, %v1114
      %1116 = vmatprep.mubr.bf16.mxu0 0
      %1117 = vmatmul.mubr.bf16.gmra.mxu0 %v1014
      %v1118 = vpop.f32.mrf.mxu0
      %v1119 = vadd.f32 0.0, %v1118
      %v1120 = vpop.f32.mrf.mxu0
      %v1121 = vadd.f32 0.0, %v1120
      %v1122 = vpop.f32.mrf.mxu0
      %v1123 = vadd.f32 0.0, %v1122
      %v1124 = vpop.f32.mrf.mxu0
      %v1125 = vadd.f32 0.0, %v1124
      %1126 = vmatprep.mubr.bf16.mxu0 0
      %1127 = vmatmul.mubr.bf16.gmra.mxu0 %v1015
      %v1128 = vpop.f32.mrf.mxu0
      %v1129 = vadd.f32 0.0, %v1128
      %v1130 = vpop.f32.mrf.mxu0
      %v1131 = vadd.f32 0.0, %v1130
      %v1132 = vpop.f32.mrf.mxu0
      %v1133 = vadd.f32 0.0, %v1132
      %v1134 = vpop.f32.mrf.mxu0
      %v1135 = vadd.f32 0.0, %v1134
      %1136 = vmatprep.mubr.bf16.mxu0 0
      %1137 = vmatmul.mubr.bf16.gmra.mxu0 %v1016
      %v1138 = vpop.f32.mrf.mxu0
      %v1139 = vadd.f32 0.0, %v1138
      %v1140 = vpop.f32.mrf.mxu0
      %v1141 = vadd.f32 0.0, %v1140
      %v1142 = vpop.f32.mrf.mxu0
      %v1143 = vadd.f32 0.0, %v1142
      %v1144 = vpop.f32.mrf.mxu0
      %v1145 = vadd.f32 0.0, %v1144
      %1146 = vmatprep.mubr.bf16.mxu0 0
      %1147 = vmatmul.mubr.bf16.gmra.mxu0 %v1017
      %v1148 = vpop.f32.mrf.mxu0
      %v1149 = vadd.f32 0.0, %v1148
      %v1150 = vpop.f32.mrf.mxu0
      %v1151 = vadd.f32 0.0, %v1150
      %v1152 = vpop.f32.mrf.mxu0
      %v1153 = vadd.f32 0.0, %v1152
      %v1154 = vpop.f32.mrf.mxu0
      %v1155 = vadd.f32 0.0, %v1154
      %1156 = vmatprep.mubr.bf16.mxu0 0
      %1157 = vmatmul.mubr.bf16.gmra.mxu0 %v1018
      %v1158 = vpop.f32.mrf.mxu0
      %v1159 = vadd.f32 0.0, %v1158
      %v1160 = vpop.f32.mrf.mxu0
      %v1161 = vadd.f32 0.0, %v1160
      %v1162 = vpop.f32.mrf.mxu0
      %v1163 = vadd.f32 0.0, %v1162
      %v1164 = vpop.f32.mrf.mxu0
      %v1165 = vadd.f32 0.0, %v1164
      %1166 = vmatprep.mubr.bf16.mxu0 0
      %1167 = vmatmul.mubr.bf16.gmra.mxu0 %v1019
      %v1168 = vpop.f32.mrf.mxu0
      %v1169 = vadd.f32 0.0, %v1168
      %v1170 = vpop.f32.mrf.mxu0
      %v1171 = vadd.f32 0.0, %v1170
      %v1172 = vpop.f32.mrf.mxu0
      %v1173 = vadd.f32 0.0, %v1172
      %v1174 = vpop.f32.mrf.mxu0
      %v1175 = vadd.f32 0.0, %v1174
      %1176 = vmatprep.mubr.bf16.mxu0 0
      %1177 = vmatmul.mubr.bf16.gmra.mxu0 %v1020
      %v1178 = vpop.f32.mrf.mxu0
      %v1179 = vadd.f32 0.0, %v1178
      %v1180 = vpop.f32.mrf.mxu0
      %v1181 = vadd.f32 0.0, %v1180
      %v1182 = vpop.f32.mrf.mxu0
      %v1183 = vadd.f32 0.0, %v1182
      %v1184 = vpop.f32.mrf.mxu0
      %v1185 = vadd.f32 0.0, %v1184
      %1186 = vmatprep.mubr.bf16.mxu0 0
      %1187 = vmatmul.mubr.bf16.gmra.mxu0 %v1021
      %v1188 = vpop.f32.mrf.mxu0
      %v1189 = vadd.f32 0.0, %v1188
      %v1190 = vpop.f32.mrf.mxu0
      %v1191 = vadd.f32 0.0, %v1190
      %v1192 = vpop.f32.mrf.mxu0
      %v1193 = vadd.f32 0.0, %v1192
      %v1194 = vpop.f32.mrf.mxu0
      %v1195 = vadd.f32 0.0, %v1194
      %1196 = vmatprep.mubr.bf16.mxu0 0
      %1197 = vmatmul.mubr.bf16.gmra.mxu0 %v1022
      %v1198 = vpop.f32.mrf.mxu0
      %v1199 = vadd.f32 0.0, %v1198
      %v1200 = vpop.f32.mrf.mxu0
      %v1201 = vadd.f32 0.0, %v1200
      %v1202 = vpop.f32.mrf.mxu0
      %v1203 = vadd.f32 0.0, %v1202
      %v1204 = vpop.f32.mrf.mxu0
      %v1205 = vadd.f32 0.0, %v1204
      %1206 = vmatprep.mubr.bf16.mxu0 0
      %1207 = vmatmul.mubr.bf16.gmra.mxu0 %v1023
      %v1208 = vpop.f32.mrf.mxu0
      %v1209 = vadd.f32 0.0, %v1208
      %v1210 = vpop.f32.mrf.mxu0
      %v1211 = vadd.f32 0.0, %v1210
      %v1212 = vpop.f32.mrf.mxu0
      %v1213 = vadd.f32 0.0, %v1212
      %v1214 = vpop.f32.mrf.mxu0
      %v1215 = vadd.f32 0.0, %v1214
      %1216 = vdwg.mxu0
      %v1217 = vld [vmem:[%s975 + $0x8] sm:$0xff]
      %v1218 = vld [vmem:[%s975 + $0x28] sm:$0xff]
      %v1219 = vld [vmem:[%s975 + $0x48] sm:$0xff]
      %v1220 = vld [vmem:[%s975 + $0x68] sm:$0xff]
      %v1221 = vld [vmem:[%s975 + $0x88] sm:$0xff]
      %v1222 = vld [vmem:[%s975 + $0xa8] sm:$0xff]
      %v1223 = vld [vmem:[%s975 + $0xc8] sm:$0xff]
      %v1224 = vld [vmem:[%s975 + $0xe8] sm:$0xff]
      %v1225 = vld [vmem:[%s975 + $0x108] sm:$0xff]
      %v1226 = vld [vmem:[%s975 + $0x128] sm:$0xff]
      %v1227 = vld [vmem:[%s975 + $0x148] sm:$0xff]
      %v1228 = vld [vmem:[%s975 + $0x168] sm:$0xff]
      %v1229 = vld [vmem:[%s975 + $0x188] sm:$0xff]
      %v1230 = vld [vmem:[%s975 + $0x1a8] sm:$0xff]
      %v1231 = vld [vmem:[%s975 + $0x1c8] sm:$0xff]
      %v1232 = vld [vmem:[%s975 + $0x1e8] sm:$0xff]
      %v1233 = vld [vmem:[%s975 + $0x208] sm:$0xff]
      %v1234 = vld [vmem:[%s975 + $0x228] sm:$0xff]
      %v1235 = vld [vmem:[%s975 + $0x248] sm:$0xff]
      %v1236 = vld [vmem:[%s975 + $0x268] sm:$0xff]
      %v1237 = vld [vmem:[%s975 + $0x288] sm:$0xff]
      %v1238 = vld [vmem:[%s975 + $0x2a8] sm:$0xff]
      %v1239 = vld [vmem:[%s975 + $0x2c8] sm:$0xff]
      %v1240 = vld [vmem:[%s975 + $0x2e8] sm:$0xff]
      %v1241 = vld [vmem:[%s975 + $0x308] sm:$0xff]
      %v1242 = vld [vmem:[%s975 + $0x328] sm:$0xff]
      %v1243 = vld [vmem:[%s975 + $0x348] sm:$0xff]
      %v1244 = vld [vmem:[%s975 + $0x368] sm:$0xff]
      %v1245 = vld [vmem:[%s975 + $0x388] sm:$0xff]
      %v1246 = vld [vmem:[%s975 + $0x3a8] sm:$0xff]
      %v1247 = vld [vmem:[%s975 + $0x3c8] sm:$0xff]
      %v1248 = vld [vmem:[%s975 + $0x3e8] sm:$0xff]
      %v1249 = vpack.c.bf16 %v1218, %v1217
      %v1250 = vpack.c.bf16 %v1220, %v1219
      %v1251 = vpack.c.bf16 %v1222, %v1221
      %v1252 = vpack.c.bf16 %v1224, %v1223
      %v1253 = vpack.c.bf16 %v1226, %v1225
      %v1254 = vpack.c.bf16 %v1228, %v1227
      %v1255 = vpack.c.bf16 %v1230, %v1229
      %v1256 = vpack.c.bf16 %v1232, %v1231
      %v1257 = vpack.c.bf16 %v1234, %v1233
      %v1258 = vpack.c.bf16 %v1236, %v1235
      %v1259 = vpack.c.bf16 %v1238, %v1237
      %v1260 = vpack.c.bf16 %v1240, %v1239
      %v1261 = vpack.c.bf16 %v1242, %v1241
      %v1262 = vpack.c.bf16 %v1244, %v1243
      %v1263 = vpack.c.bf16 %v1246, %v1245
      %v1264 = vpack.c.bf16 %v1248, %v1247
      %1265 = vmatprep.subr.bf16.mxu0 %v460
      %1266 = vmatpush1.bf16.msra.mxu0 %v459
      %1267 = vmatprep.subr.bf16.mxu0 %v458
      %1268 = vmatpush1.bf16.msra.mxu0 %v457
      %1269 = vmatprep.subr.bf16.mxu0 %v456
      %1270 = vmatpush1.bf16.msra.mxu0 %v455
      %1271 = vmatprep.subr.bf16.mxu0 %v454
      %1272 = vmatpush1.bf16.msra.mxu0 %v453
      %1273 = vmatprep.subr.bf16.mxu0 %v452
      %1274 = vmatpush1.bf16.msra.mxu0 %v451
      %1275 = vmatprep.subr.bf16.mxu0 %v450
      %1276 = vmatpush1.bf16.msra.mxu0 %v449
      %1277 = vmatprep.subr.bf16.mxu0 %v448
      %1278 = vmatpush1.bf16.msra.mxu0 %v447
      %1279 = vmatprep.subr.bf16.mxu0 %v446
      %1280 = vmatpush1.bf16.msra.mxu0 %v445
      %1281 = vmatprep.subr.bf16.mxu0 0
      %1282 = vmatpush2.bf16.msra.mxu0 0
      %1283 = vmatprep.subr.bf16.mxu0 0
      %1284 = vmatpush2.bf16.msra.mxu0 0
      %1285 = vmatprep.subr.bf16.mxu0 0
      %1286 = vmatpush2.bf16.msra.mxu0 0
      %1287 = vmatprep.subr.bf16.mxu0 0
      %1288 = vmatpush2.bf16.msra.mxu0 0
      %1289 = vmatprep.subr.bf16.mxu0 0
      %1290 = vmatpush2.bf16.msra.mxu0 0
      %1291 = vmatprep.subr.bf16.mxu0 0
      %1292 = vmatpush2.bf16.msra.mxu0 0
      %1293 = vmatprep.subr.bf16.mxu0 0
      %1294 = vmatpush2.bf16.msra.mxu0 0
      %1295 = vmatprep.subr.bf16.mxu0 0
      %1296 = vmatpush2.bf16.msra.mxu0 0
      %1297 = vmatprep.mubr.bf16.mxu0 0
      %1298 = vmatmul.mubr.bf16.gmra.mxu0 %v1249
      %v1299 = vpop.f32.mrf.mxu0
      %v1300 = vadd.f32 0.0, %v1299
      %v1301 = vpop.f32.mrf.mxu0
      %v1302 = vadd.f32 0.0, %v1301
      %v1303 = vpop.f32.mrf.mxu0
      %v1304 = vadd.f32 0.0, %v1303
      %v1305 = vpop.f32.mrf.mxu0
      %v1306 = vadd.f32 0.0, %v1305
      %1307 = vmatprep.mubr.bf16.mxu0 0
      %1308 = vmatmul.mubr.bf16.gmra.mxu0 %v1250
      %v1309 = vpop.f32.mrf.mxu0
      %v1310 = vadd.f32 0.0, %v1309
      %v1311 = vpop.f32.mrf.mxu0
      %v1312 = vadd.f32 0.0, %v1311
      %v1313 = vpop.f32.mrf.mxu0
      %v1314 = vadd.f32 0.0, %v1313
      %v1315 = vpop.f32.mrf.mxu0
      %v1316 = vadd.f32 0.0, %v1315
      %1317 = vmatprep.mubr.bf16.mxu0 0
      %1318 = vmatmul.mubr.bf16.gmra.mxu0 %v1251
      %v1319 = vpop.f32.mrf.mxu0
      %v1320 = vadd.f32 0.0, %v1319
      %v1321 = vpop.f32.mrf.mxu0
      %v1322 = vadd.f32 0.0, %v1321
      %v1323 = vpop.f32.mrf.mxu0
      %v1324 = vadd.f32 0.0, %v1323
      %v1325 = vpop.f32.mrf.mxu0
      %v1326 = vadd.f32 0.0, %v1325
      %1327 = vmatprep.mubr.bf16.mxu0 0
      %1328 = vmatmul.mubr.bf16.gmra.mxu0 %v1252
      %v1329 = vpop.f32.mrf.mxu0
      %v1330 = vadd.f32 0.0, %v1329
      %v1331 = vpop.f32.mrf.mxu0
      %v1332 = vadd.f32 0.0, %v1331
      %v1333 = vpop.f32.mrf.mxu0
      %v1334 = vadd.f32 0.0, %v1333
      %v1335 = vpop.f32.mrf.mxu0
      %v1336 = vadd.f32 0.0, %v1335
      %1337 = vmatprep.mubr.bf16.mxu0 0
      %1338 = vmatmul.mubr.bf16.gmra.mxu0 %v1253
      %v1339 = vpop.f32.mrf.mxu0
      %v1340 = vadd.f32 0.0, %v1339
      %v1341 = vpop.f32.mrf.mxu0
      %v1342 = vadd.f32 0.0, %v1341
      %v1343 = vpop.f32.mrf.mxu0
      %v1344 = vadd.f32 0.0, %v1343
      %v1345 = vpop.f32.mrf.mxu0
      %v1346 = vadd.f32 0.0, %v1345
      %1347 = vmatprep.mubr.bf16.mxu0 0
      %1348 = vmatmul.mubr.bf16.gmra.mxu0 %v1254
      %v1349 = vpop.f32.mrf.mxu0
      %v1350 = vadd.f32 0.0, %v1349
      %v1351 = vpop.f32.mrf.mxu0
      %v1352 = vadd.f32 0.0, %v1351
      %v1353 = vpop.f32.mrf.mxu0
      %v1354 = vadd.f32 0.0, %v1353
      %v1355 = vpop.f32.mrf.mxu0
      %v1356 = vadd.f32 0.0, %v1355
      %1357 = vmatprep.mubr.bf16.mxu0 0
      %1358 = vmatmul.mubr.bf16.gmra.mxu0 %v1255
      %v1359 = vpop.f32.mrf.mxu0
      %v1360 = vadd.f32 0.0, %v1359
      %v1361 = vpop.f32.mrf.mxu0
      %v1362 = vadd.f32 0.0, %v1361
      %v1363 = vpop.f32.mrf.mxu0
      %v1364 = vadd.f32 0.0, %v1363
      %v1365 = vpop.f32.mrf.mxu0
      %v1366 = vadd.f32 0.0, %v1365
      %1367 = vmatprep.mubr.bf16.mxu0 0
      %1368 = vmatmul.mubr.bf16.gmra.mxu0 %v1256
      %v1369 = vpop.f32.mrf.mxu0
      %v1370 = vadd.f32 0.0, %v1369
      %v1371 = vpop.f32.mrf.mxu0
      %v1372 = vadd.f32 0.0, %v1371
      %v1373 = vpop.f32.mrf.mxu0
      %v1374 = vadd.f32 0.0, %v1373
      %v1375 = vpop.f32.mrf.mxu0
      %v1376 = vadd.f32 0.0, %v1375
      %1377 = vmatprep.mubr.bf16.mxu0 0
      %1378 = vmatmul.mubr.bf16.gmra.mxu0 %v1257
      %v1379 = vpop.f32.mrf.mxu0
      %v1380 = vadd.f32 0.0, %v1379
      %v1381 = vpop.f32.mrf.mxu0
      %v1382 = vadd.f32 0.0, %v1381
      %v1383 = vpop.f32.mrf.mxu0
      %v1384 = vadd.f32 0.0, %v1383
      %v1385 = vpop.f32.mrf.mxu0
      %v1386 = vadd.f32 0.0, %v1385
      %1387 = vmatprep.mubr.bf16.mxu0 0
      %1388 = vmatmul.mubr.bf16.gmra.mxu0 %v1258
      %v1389 = vpop.f32.mrf.mxu0
      %v1390 = vadd.f32 0.0, %v1389
      %v1391 = vpop.f32.mrf.mxu0
      %v1392 = vadd.f32 0.0, %v1391
      %v1393 = vpop.f32.mrf.mxu0
      %v1394 = vadd.f32 0.0, %v1393
      %v1395 = vpop.f32.mrf.mxu0
      %v1396 = vadd.f32 0.0, %v1395
      %1397 = vmatprep.mubr.bf16.mxu0 0
      %1398 = vmatmul.mubr.bf16.gmra.mxu0 %v1259
      %v1399 = vpop.f32.mrf.mxu0
      %v1400 = vadd.f32 0.0, %v1399
      %v1401 = vpop.f32.mrf.mxu0
      %v1402 = vadd.f32 0.0, %v1401
      %v1403 = vpop.f32.mrf.mxu0
      %v1404 = vadd.f32 0.0, %v1403
      %v1405 = vpop.f32.mrf.mxu0
      %v1406 = vadd.f32 0.0, %v1405
      %1407 = vmatprep.mubr.bf16.mxu0 0
      %1408 = vmatmul.mubr.bf16.gmra.mxu0 %v1260
      %v1409 = vpop.f32.mrf.mxu0
      %v1410 = vadd.f32 0.0, %v1409
      %v1411 = vpop.f32.mrf.mxu0
      %v1412 = vadd.f32 0.0, %v1411
      %v1413 = vpop.f32.mrf.mxu0
      %v1414 = vadd.f32 0.0, %v1413
      %v1415 = vpop.f32.mrf.mxu0
      %v1416 = vadd.f32 0.0, %v1415
      %1417 = vmatprep.mubr.bf16.mxu0 0
      %1418 = vmatmul.mubr.bf16.gmra.mxu0 %v1261
      %v1419 = vpop.f32.mrf.mxu0
      %v1420 = vadd.f32 0.0, %v1419
      %v1421 = vpop.f32.mrf.mxu0
      %v1422 = vadd.f32 0.0, %v1421
      %v1423 = vpop.f32.mrf.mxu0
      %v1424 = vadd.f32 0.0, %v1423
      %v1425 = vpop.f32.mrf.mxu0
      %v1426 = vadd.f32 0.0, %v1425
      %1427 = vmatprep.mubr.bf16.mxu0 0
      %1428 = vmatmul.mubr.bf16.gmra.mxu0 %v1262
      %v1429 = vpop.f32.mrf.mxu0
      %v1430 = vadd.f32 0.0, %v1429
      %v1431 = vpop.f32.mrf.mxu0
      %v1432 = vadd.f32 0.0, %v1431
      %v1433 = vpop.f32.mrf.mxu0
      %v1434 = vadd.f32 0.0, %v1433
      %v1435 = vpop.f32.mrf.mxu0
      %v1436 = vadd.f32 0.0, %v1435
      %1437 = vmatprep.mubr.bf16.mxu0 0
      %1438 = vmatmul.mubr.bf16.gmra.mxu0 %v1263
      %v1439 = vpop.f32.mrf.mxu0
      %v1440 = vadd.f32 0.0, %v1439
      %v1441 = vpop.f32.mrf.mxu0
      %v1442 = vadd.f32 0.0, %v1441
      %v1443 = vpop.f32.mrf.mxu0
      %v1444 = vadd.f32 0.0, %v1443
      %v1445 = vpop.f32.mrf.mxu0
      %v1446 = vadd.f32 0.0, %v1445
      %1447 = vmatprep.mubr.bf16.mxu0 0
      %1448 = vmatmul.mubr.bf16.gmra.mxu0 %v1264
      %v1449 = vpop.f32.mrf.mxu0
      %v1450 = vadd.f32 0.0, %v1449
      %v1451 = vpop.f32.mrf.mxu0
      %v1452 = vadd.f32 0.0, %v1451
      %v1453 = vpop.f32.mrf.mxu0
      %v1454 = vadd.f32 0.0, %v1453
      %v1455 = vpop.f32.mrf.mxu0
      %v1456 = vadd.f32 0.0, %v1455
      %1457 = vdwg.mxu0
      %v1458 = vmax.f32 %v1059, %v1300
      %v1459 = vmax.f32 %v1061, %v1302
      %v1460 = vmax.f32 %v1063, %v1304
      %v1461 = vmax.f32 %v1065, %v1306
      %v1462 = vmax.f32 %v1069, %v1310
      %v1463 = vmax.f32 %v1071, %v1312
      %v1464 = vmax.f32 %v1073, %v1314
      %v1465 = vmax.f32 %v1075, %v1316
      %v1466 = vmax.f32 %v1079, %v1320
      %v1467 = vmax.f32 %v1081, %v1322
      %v1468 = vmax.f32 %v1083, %v1324
      %v1469 = vmax.f32 %v1085, %v1326
      %v1470 = vmax.f32 %v1089, %v1330
      %v1471 = vmax.f32 %v1091, %v1332
      %v1472 = vmax.f32 %v1093, %v1334
      %v1473 = vmax.f32 %v1095, %v1336
      %v1474 = vmax.f32 %v1099, %v1340
      %v1475 = vmax.f32 %v1101, %v1342
      %v1476 = vmax.f32 %v1103, %v1344
      %v1477 = vmax.f32 %v1105, %v1346
      %v1478 = vmax.f32 %v1109, %v1350
      %v1479 = vmax.f32 %v1111, %v1352
      %v1480 = vmax.f32 %v1113, %v1354
      %v1481 = vmax.f32 %v1115, %v1356
      %v1482 = vmax.f32 %v1119, %v1360
      %v1483 = vmax.f32 %v1121, %v1362
      %v1484 = vmax.f32 %v1123, %v1364
      %v1485 = vmax.f32 %v1125, %v1366
      %v1486 = vmax.f32 %v1129, %v1370
      %v1487 = vmax.f32 %v1131, %v1372
      %v1488 = vmax.f32 %v1133, %v1374
      %v1489 = vmax.f32 %v1135, %v1376
      %v1490 = vmax.f32 %v1139, %v1380
      %v1491 = vmax.f32 %v1141, %v1382
      %v1492 = vmax.f32 %v1143, %v1384
      %v1493 = vmax.f32 %v1145, %v1386
      %v1494 = vmax.f32 %v1149, %v1390
      %v1495 = vmax.f32 %v1151, %v1392
      %v1496 = vmax.f32 %v1153, %v1394
      %v1497 = vmax.f32 %v1155, %v1396
      %v1498 = vmax.f32 %v1159, %v1400
      %v1499 = vmax.f32 %v1161, %v1402
      %v1500 = vmax.f32 %v1163, %v1404
      %v1501 = vmax.f32 %v1165, %v1406
      %v1502 = vmax.f32 %v1169, %v1410
      %v1503 = vmax.f32 %v1171, %v1412
      %v1504 = vmax.f32 %v1173, %v1414
      %v1505 = vmax.f32 %v1175, %v1416
      %v1506 = vmax.f32 %v1179, %v1420
      %v1507 = vmax.f32 %v1181, %v1422
      %v1508 = vmax.f32 %v1183, %v1424
      %v1509 = vmax.f32 %v1185, %v1426
      %v1510 = vmax.f32 %v1189, %v1430
      %v1511 = vmax.f32 %v1191, %v1432
      %v1512 = vmax.f32 %v1193, %v1434
      %v1513 = vmax.f32 %v1195, %v1436
      %v1514 = vmax.f32 %v1199, %v1440
      %v1515 = vmax.f32 %v1201, %v1442
      %v1516 = vmax.f32 %v1203, %v1444
      %v1517 = vmax.f32 %v1205, %v1446
      %v1518 = vmax.f32 %v1209, %v1450
      %v1519 = vmax.f32 %v1211, %v1452
      %v1520 = vmax.f32 %v1213, %v1454
      %v1521 = vmax.f32 %v1215, %v1456
      %v1522 = vmax.f32 %v911, %v1458
      %v1523 = vmax.f32 %v912, %v1459
      %v1524 = vmax.f32 %v913, %v1460
      %v1525 = vmax.f32 %v914, %v1461
      %v1526 = vmax.f32 %v915, %v1462
      %v1527 = vmax.f32 %v916, %v1463
      %v1528 = vmax.f32 %v917, %v1464
      %v1529 = vmax.f32 %v918, %v1465
      %v1530 = vmax.f32 %v919, %v1466
      %v1531 = vmax.f32 %v920, %v1467
      %v1532 = vmax.f32 %v921, %v1468
      %v1533 = vmax.f32 %v922, %v1469
      %v1534 = vmax.f32 %v923, %v1470
      %v1535 = vmax.f32 %v924, %v1471
      %v1536 = vmax.f32 %v925, %v1472
      %v1537 = vmax.f32 %v926, %v1473
      %v1538 = vmax.f32 %v927, %v1474
      %v1539 = vmax.f32 %v928, %v1475
      %v1540 = vmax.f32 %v929, %v1476
      %v1541 = vmax.f32 %v930, %v1477
      %v1542 = vmax.f32 %v931, %v1478
      %v1543 = vmax.f32 %v932, %v1479
      %v1544 = vmax.f32 %v933, %v1480
      %v1545 = vmax.f32 %v934, %v1481
      %v1546 = vmax.f32 %v935, %v1482
      %v1547 = vmax.f32 %v936, %v1483
      %v1548 = vmax.f32 %v937, %v1484
      %v1549 = vmax.f32 %v938, %v1485
      %v1550 = vmax.f32 %v939, %v1486
      %v1551 = vmax.f32 %v940, %v1487
      %v1552 = vmax.f32 %v941, %v1488
      %v1553 = vmax.f32 %v942, %v1489
      %v1554 = vmax.f32 %v943, %v1490
      %v1555 = vmax.f32 %v944, %v1491
      %v1556 = vmax.f32 %v945, %v1492
      %v1557 = vmax.f32 %v946, %v1493
      %v1558 = vmax.f32 %v947, %v1494
      %v1559 = vmax.f32 %v948, %v1495
      %v1560 = vmax.f32 %v949, %v1496
      %v1561 = vmax.f32 %v950, %v1497
      %v1562 = vmax.f32 %v951, %v1498
      %v1563 = vmax.f32 %v952, %v1499
      %v1564 = vmax.f32 %v953, %v1500
      %v1565 = vmax.f32 %v954, %v1501
      %v1566 = vmax.f32 %v955, %v1502
      %v1567 = vmax.f32 %v956, %v1503
      %v1568 = vmax.f32 %v957, %v1504
      %v1569 = vmax.f32 %v958, %v1505
      %v1570 = vmax.f32 %v959, %v1506
      %v1571 = vmax.f32 %v960, %v1507
      %v1572 = vmax.f32 %v961, %v1508
      %v1573 = vmax.f32 %v962, %v1509
      %v1574 = vmax.f32 %v963, %v1510
      %v1575 = vmax.f32 %v964, %v1511
      %v1576 = vmax.f32 %v965, %v1512
      %v1577 = vmax.f32 %v966, %v1513
      %v1578 = vmax.f32 %v967, %v1514
      %v1579 = vmax.f32 %v968, %v1515
      %v1580 = vmax.f32 %v969, %v1516
      %v1581 = vmax.f32 %v970, %v1517
      %v1582 = vmax.f32 %v971, %v1518
      %v1583 = vmax.f32 %v972, %v1519
      %v1584 = vmax.f32 %v973, %v1520
      %v1585 = vmax.f32 %v974, %v1521
      %v1586 = vld [vmem:[%s2] sm:$0x3]
      %v1588 = vlaneseq
      %v1589 = vshrl.u32 %v1588, 7
      %v1590 = vsub.s32 0, %v1589
      %v1591 = vrot.slane %v1586, %v1590
      %v1592 = vlaneseq
      %v1593 = vshrl.u32 %v1592, 7
      %v1594 = vsub.s32 1, %v1593
      %v1595 = vrot.slane %v1586, %v1594
      %v1598 = vadd.f32 %v1522, %v1591
      %v1599 = vadd.f32 %v1523, %v1595
      %v1600 = vadd.f32 %v1524, %v1591
      %v1601 = vadd.f32 %v1525, %v1595
      %v1602 = vadd.f32 %v1526, %v1591
      %v1603 = vadd.f32 %v1527, %v1595
      %v1604 = vadd.f32 %v1528, %v1591
      %v1605 = vadd.f32 %v1529, %v1595
      %v1606 = vadd.f32 %v1530, %v1591
      %v1607 = vadd.f32 %v1531, %v1595
      %v1608 = vadd.f32 %v1532, %v1591
      %v1609 = vadd.f32 %v1533, %v1595
      %v1610 = vadd.f32 %v1534, %v1591
      %v1611 = vadd.f32 %v1535, %v1595
      %v1612 = vadd.f32 %v1536, %v1591
      %v1613 = vadd.f32 %v1537, %v1595
      %v1614 = vadd.f32 %v1538, %v1591
      %v1615 = vadd.f32 %v1539, %v1595
      %v1616 = vadd.f32 %v1540, %v1591
      %v1617 = vadd.f32 %v1541, %v1595
      %v1618 = vadd.f32 %v1542, %v1591
      %v1619 = vadd.f32 %v1543, %v1595
      %v1620 = vadd.f32 %v1544, %v1591
      %v1621 = vadd.f32 %v1545, %v1595
      %v1622 = vadd.f32 %v1546, %v1591
      %v1623 = vadd.f32 %v1547, %v1595
      %v1624 = vadd.f32 %v1548, %v1591
      %v1625 = vadd.f32 %v1549, %v1595
      %v1626 = vadd.f32 %v1550, %v1591
      %v1627 = vadd.f32 %v1551, %v1595
      %v1628 = vadd.f32 %v1552, %v1591
      %v1629 = vadd.f32 %v1553, %v1595
      %v1630 = vadd.f32 %v1554, %v1591
      %v1631 = vadd.f32 %v1555, %v1595
      %v1632 = vadd.f32 %v1556, %v1591
      %v1633 = vadd.f32 %v1557, %v1595
      %v1634 = vadd.f32 %v1558, %v1591
      %v1635 = vadd.f32 %v1559, %v1595
      %v1636 = vadd.f32 %v1560, %v1591
      %v1637 = vadd.f32 %v1561, %v1595
      %v1638 = vadd.f32 %v1562, %v1591
      %v1639 = vadd.f32 %v1563, %v1595
      %v1640 = vadd.f32 %v1564, %v1591
      %v1641 = vadd.f32 %v1565, %v1595
      %v1642 = vadd.f32 %v1566, %v1591
      %v1643 = vadd.f32 %v1567, %v1595
      %v1644 = vadd.f32 %v1568, %v1591
      %v1645 = vadd.f32 %v1569, %v1595
      %v1646 = vadd.f32 %v1570, %v1591
      %v1647 = vadd.f32 %v1571, %v1595
      %v1648 = vadd.f32 %v1572, %v1591
      %v1649 = vadd.f32 %v1573, %v1595
      %v1650 = vadd.f32 %v1574, %v1591
      %v1651 = vadd.f32 %v1575, %v1595
      %v1652 = vadd.f32 %v1576, %v1591
      %v1653 = vadd.f32 %v1577, %v1595
      %v1654 = vadd.f32 %v1578, %v1591
      %v1655 = vadd.f32 %v1579, %v1595
      %v1656 = vadd.f32 %v1580, %v1591
      %v1657 = vadd.f32 %v1581, %v1595
      %v1658 = vadd.f32 %v1582, %v1591
      %v1659 = vadd.f32 %v1583, %v1595
      %v1660 = vadd.f32 %v1584, %v1591
      %v1661 = vadd.f32 %v1585, %v1595
      %v1662 = vpack.c.bf16 %v1600, %v1598
      %v1663 = vpack.c.bf16 %v1604, %v1602
      %v1664 = vpack.c.bf16 %v1608, %v1606
      %v1665 = vpack.c.bf16 %v1612, %v1610
      %v1666 = vpack.c.bf16 %v1616, %v1614
      %v1667 = vpack.c.bf16 %v1620, %v1618
      %v1668 = vpack.c.bf16 %v1624, %v1622
      %v1669 = vpack.c.bf16 %v1628, %v1626
      %v1670 = vpack.c.bf16 %v1632, %v1630
      %v1671 = vpack.c.bf16 %v1636, %v1634
      %v1672 = vpack.c.bf16 %v1640, %v1638
      %v1673 = vpack.c.bf16 %v1644, %v1642
      %v1674 = vpack.c.bf16 %v1648, %v1646
      %v1675 = vpack.c.bf16 %v1652, %v1650
      %v1676 = vpack.c.bf16 %v1656, %v1654
      %v1677 = vpack.c.bf16 %v1660, %v1658
      %v1678 = vpack.c.bf16 %v1601, %v1599
      %v1679 = vpack.c.bf16 %v1605, %v1603
      %v1680 = vpack.c.bf16 %v1609, %v1607
      %v1681 = vpack.c.bf16 %v1613, %v1611
      %v1682 = vpack.c.bf16 %v1617, %v1615
      %v1683 = vpack.c.bf16 %v1621, %v1619
      %v1684 = vpack.c.bf16 %v1625, %v1623
      %v1685 = vpack.c.bf16 %v1629, %v1627
      %v1686 = vpack.c.bf16 %v1633, %v1631
      %v1687 = vpack.c.bf16 %v1637, %v1635
      %v1688 = vpack.c.bf16 %v1641, %v1639
      %v1689 = vpack.c.bf16 %v1645, %v1643
      %v1690 = vpack.c.bf16 %v1649, %v1647
      %v1691 = vpack.c.bf16 %v1653, %v1651
      %v1692 = vpack.c.bf16 %v1657, %v1655
      %v1693 = vpack.c.bf16 %v1661, %v1659
      %v1694 = vld [vmem:[#allocation2] sm:$0xff]
      %v1695 = vld [vmem:[#allocation2 + $0x8] sm:$0xff]
      %v1696 = vld [vmem:[#allocation2 + $0x10] sm:$0xff]
      %v1697 = vld [vmem:[#allocation2 + $0x18] sm:$0xff]
      %v1698 = vld [vmem:[#allocation2 + $0x20] sm:$0xff]
      %v1699 = vld [vmem:[#allocation2 + $0x28] sm:$0xff]
      %v1700 = vld [vmem:[#allocation2 + $0x30] sm:$0xff]
      %v1701 = vld [vmem:[#allocation2 + $0x38] sm:$0xff]
      %v1702 = vld [vmem:[#allocation2 + $0x40] sm:$0xff]
      %v1703 = vld [vmem:[#allocation2 + $0x48] sm:$0xff]
      %v1704 = vld [vmem:[#allocation2 + $0x50] sm:$0xff]
      %v1705 = vld [vmem:[#allocation2 + $0x58] sm:$0xff]
      %v1706 = vld [vmem:[#allocation2 + $0x60] sm:$0xff]
      %v1707 = vld [vmem:[#allocation2 + $0x68] sm:$0xff]
      %v1708 = vld [vmem:[#allocation2 + $0x70] sm:$0xff]
      %v1709 = vld [vmem:[#allocation2 + $0x78] sm:$0xff]
      %1710 = vxpose.xlu0.c.b16.start [1/8] %v1662, 128
      %1711 = vxpose.xlu0.c.b16.cont [2/8] %v1663, 128
      %1712 = vxpose.xlu0.c.b16.cont [3/8] %v1664, 128
      %1713 = vxpose.xlu0.c.b16.cont [4/8] %v1665, 128
      %1714 = vxpose.xlu0.c.b16.cont [5/8] %v1666, 128
      %1715 = vxpose.xlu0.c.b16.cont [6/8] %v1667, 128
      %1716 = vxpose.xlu0.c.b16.cont [7/8] %v1668, 128
      %1717 = vxpose.xlu0.c.b16.end [8/8] %v1669, 128
      %v1718 = vpop.trf.xlu0
      %v1719 = vpop.trf.xlu0
      %v1720 = vpop.trf.xlu0
      %v1721 = vpop.trf.xlu0
      %v1722 = vpop.trf.xlu0
      %v1723 = vpop.trf.xlu0
      %v1724 = vpop.trf.xlu0
      %v1725 = vpop.trf.xlu0
      %1726 = vxpose.xlu0.c.b16.start [1/8] %v1670, 128
      %1727 = vxpose.xlu0.c.b16.cont [2/8] %v1671, 128
      %1728 = vxpose.xlu0.c.b16.cont [3/8] %v1672, 128
      %1729 = vxpose.xlu0.c.b16.cont [4/8] %v1673, 128
      %1730 = vxpose.xlu0.c.b16.cont [5/8] %v1674, 128
      %1731 = vxpose.xlu0.c.b16.cont [6/8] %v1675, 128
      %1732 = vxpose.xlu0.c.b16.cont [7/8] %v1676, 128
      %1733 = vxpose.xlu0.c.b16.end [8/8] %v1677, 128
      %v1734 = vpop.trf.xlu0
      %v1735 = vpop.trf.xlu0
      %v1736 = vpop.trf.xlu0
      %v1737 = vpop.trf.xlu0
      %v1738 = vpop.trf.xlu0
      %v1739 = vpop.trf.xlu0
      %v1740 = vpop.trf.xlu0
      %v1741 = vpop.trf.xlu0
      %1742 = vmatprep.subr.bf16.mxu0 0
      %1743 = vmatpush1.bf16.msra.mxu0 %v1685
      %1744 = vmatprep.subr.bf16.mxu0 0
      %1745 = vmatpush1.bf16.msra.mxu0 %v1684
      %1746 = vmatprep.subr.bf16.mxu0 0
      %1747 = vmatpush1.bf16.msra.mxu0 %v1683
      %1748 = vmatprep.subr.bf16.mxu0 0
      %1749 = vmatpush1.bf16.msra.mxu0 %v1682
      %1750 = vmatprep.subr.bf16.mxu0 0
      %1751 = vmatpush1.bf16.msra.mxu0 %v1681
      %1752 = vmatprep.subr.bf16.mxu0 0
      %1753 = vmatpush1.bf16.msra.mxu0 %v1680
      %1754 = vmatprep.subr.bf16.mxu0 0
      %1755 = vmatpush1.bf16.msra.mxu0 %v1679
      %1756 = vmatprep.subr.bf16.mxu0 0
      %1757 = vmatpush1.bf16.msra.mxu0 %v1678
      %1758 = vmatprep.subr.bf16.mxu0 0
      %1759 = vmatpush2.bf16.msra.mxu0 %v1693
      %1760 = vmatprep.subr.bf16.mxu0 0
      %1761 = vmatpush2.bf16.msra.mxu0 %v1692
      %1762 = vmatprep.subr.bf16.mxu0 0
      %1763 = vmatpush2.bf16.msra.mxu0 %v1691
      %1764 = vmatprep.subr.bf16.mxu0 0
      %1765 = vmatpush2.bf16.msra.mxu0 %v1690
      %1766 = vmatprep.subr.bf16.mxu0 0
      %1767 = vmatpush2.bf16.msra.mxu0 %v1689
      %1768 = vmatprep.subr.bf16.mxu0 0
      %1769 = vmatpush2.bf16.msra.mxu0 %v1688
      %1770 = vmatprep.subr.bf16.mxu0 0
      %1771 = vmatpush2.bf16.msra.mxu0 %v1687
      %1772 = vmatprep.subr.bf16.mxu0 0
      %1773 = vmatpush2.bf16.msra.mxu0 %v1686
      %1774 = vmatprep.mubr.bf16.mxu0 %v1734
      %1775 = vmatmul.mubr.bf16.gmra.mxu0 %v1718
      %v1776 = vpop.f32.mrf.mxu0
      %v1777 = vadd.f32 0.0, %v1776
      %v1778 = vpop.f32.mrf.mxu0
      %v1779 = vpop.f32.mrf.mxu0
      %v1780 = vadd.f32 0.0, %v1779
      %v1781 = vpop.f32.mrf.mxu0
      %1782 = vmatprep.mubr.bf16.mxu0 %v1735
      %1783 = vmatmul.mubr.bf16.gmra.mxu0 %v1719
      %v1784 = vpop.f32.mrf.mxu0
      %v1785 = vadd.f32 0.0, %v1784
      %v1786 = vpop.f32.mrf.mxu0
      %v1787 = vpop.f32.mrf.mxu0
      %v1788 = vadd.f32 0.0, %v1787
      %v1789 = vpop.f32.mrf.mxu0
      %1790 = vmatprep.mubr.bf16.mxu0 %v1736
      %1791 = vmatmul.mubr.bf16.gmra.mxu0 %v1720
      %v1792 = vpop.f32.mrf.mxu0
      %v1793 = vadd.f32 0.0, %v1792
      %v1794 = vpop.f32.mrf.mxu0
      %v1795 = vpop.f32.mrf.mxu0
      %v1796 = vadd.f32 0.0, %v1795
      %v1797 = vpop.f32.mrf.mxu0
      %1798 = vmatprep.mubr.bf16.mxu0 %v1737
      %1799 = vmatmul.mubr.bf16.gmra.mxu0 %v1721
      %v1800 = vpop.f32.mrf.mxu0
      %v1801 = vadd.f32 0.0, %v1800
      %v1802 = vpop.f32.mrf.mxu0
      %v1803 = vpop.f32.mrf.mxu0
      %v1804 = vadd.f32 0.0, %v1803
      %v1805 = vpop.f32.mrf.mxu0
      %1806 = vmatprep.mubr.bf16.mxu0 %v1738
      %1807 = vmatmul.mubr.bf16.gmra.mxu0 %v1722
      %v1808 = vpop.f32.mrf.mxu0
      %v1809 = vadd.f32 0.0, %v1808
      %v1810 = vpop.f32.mrf.mxu0
      %v1811 = vpop.f32.mrf.mxu0
      %v1812 = vadd.f32 0.0, %v1811
      %v1813 = vpop.f32.mrf.mxu0
      %1814 = vmatprep.mubr.bf16.mxu0 %v1739
      %1815 = vmatmul.mubr.bf16.gmra.mxu0 %v1723
      %v1816 = vpop.f32.mrf.mxu0
      %v1817 = vadd.f32 0.0, %v1816
      %v1818 = vpop.f32.mrf.mxu0
      %v1819 = vpop.f32.mrf.mxu0
      %v1820 = vadd.f32 0.0, %v1819
      %v1821 = vpop.f32.mrf.mxu0
      %1822 = vmatprep.mubr.bf16.mxu0 %v1740
      %1823 = vmatmul.mubr.bf16.gmra.mxu0 %v1724
      %v1824 = vpop.f32.mrf.mxu0
      %v1825 = vadd.f32 0.0, %v1824
      %v1826 = vpop.f32.mrf.mxu0
      %v1827 = vpop.f32.mrf.mxu0
      %v1828 = vadd.f32 0.0, %v1827
      %v1829 = vpop.f32.mrf.mxu0
      %1830 = vmatprep.mubr.bf16.mxu0 %v1741
      %1831 = vmatmul.mubr.bf16.gmra.mxu0 %v1725
      %v1832 = vpop.f32.mrf.mxu0
      %v1833 = vadd.f32 0.0, %v1832
      %v1834 = vpop.f32.mrf.mxu0
      %v1835 = vpop.f32.mrf.mxu0
      %v1836 = vadd.f32 0.0, %v1835
      %v1837 = vpop.f32.mrf.mxu0
      %1838 = vdwg.mxu0
      %v1839 = vadd.f32 %v1694, %v1777
      %v1840 = vadd.f32 %v1695, %v1780
      %v1841 = vadd.f32 %v1696, %v1785
      %v1842 = vadd.f32 %v1697, %v1788
      %v1843 = vadd.f32 %v1698, %v1793
      %v1844 = vadd.f32 %v1699, %v1796
      %v1845 = vadd.f32 %v1700, %v1801
      %v1846 = vadd.f32 %v1701, %v1804
      %v1847 = vadd.f32 %v1702, %v1809
      %v1848 = vadd.f32 %v1703, %v1812
      %v1849 = vadd.f32 %v1704, %v1817
      %v1850 = vadd.f32 %v1705, %v1820
      %v1851 = vadd.f32 %v1706, %v1825
      %v1852 = vadd.f32 %v1707, %v1828
      %v1853 = vadd.f32 %v1708, %v1833
      %v1854 = vadd.f32 %v1709, %v1836
      %1855 = vst [vmem:[#allocation2] sm:$0xff] %v1839
      %1856 = vst [vmem:[#allocation2 + $0x8] sm:$0xff] %v1840
      %1857 = vst [vmem:[#allocation2 + $0x10] sm:$0xff] %v1841
      %1858 = vst [vmem:[#allocation2 + $0x18] sm:$0xff] %v1842
      %1859 = vst [vmem:[#allocation2 + $0x20] sm:$0xff] %v1843
      %1860 = vst [vmem:[#allocation2 + $0x28] sm:$0xff] %v1844
      %1861 = vst [vmem:[#allocation2 + $0x30] sm:$0xff] %v1845
      %1862 = vst [vmem:[#allocation2 + $0x38] sm:$0xff] %v1846
      %1863 = vst [vmem:[#allocation2 + $0x40] sm:$0xff] %v1847
      %1864 = vst [vmem:[#allocation2 + $0x48] sm:$0xff] %v1848
      %1865 = vst [vmem:[#allocation2 + $0x50] sm:$0xff] %v1849
      %1866 = vst [vmem:[#allocation2 + $0x58] sm:$0xff] %v1850
      %1867 = vst [vmem:[#allocation2 + $0x60] sm:$0xff] %v1851
      %1868 = vst [vmem:[#allocation2 + $0x68] sm:$0xff] %v1852
      %1869 = vst [vmem:[#allocation2 + $0x70] sm:$0xff] %v1853
      %1870 = vst [vmem:[#allocation2 + $0x78] sm:$0xff] %v1854
      // Predicated region
      $region49: #{nonlocal_block.2} parent=43 // pred_check
        %p1871 = pneg %p313
      $region50: #{nonlocal_block.2} parent=43 // pred_check_branch
        %1873 = sbr.rel (%p1871) target = $region52
      $region51: #{nonlocal_block.2} parent=43 // pred_region
        %v1874 = vld [vmem:[#allocation2] sm:$0xff]
        %v1875 = vld [vmem:[#allocation2 + $0x8] sm:$0xff]
        %v1876 = vld [vmem:[#allocation2 + $0x10] sm:$0xff]
        %v1877 = vld [vmem:[#allocation2 + $0x18] sm:$0xff]
        %v1878 = vld [vmem:[#allocation2 + $0x20] sm:$0xff]
        %v1879 = vld [vmem:[#allocation2 + $0x28] sm:$0xff]
        %v1880 = vld [vmem:[#allocation2 + $0x30] sm:$0xff]
        %v1881 = vld [vmem:[#allocation2 + $0x38] sm:$0xff]
        %v1882 = vld [vmem:[#allocation2 + $0x40] sm:$0xff]
        %v1883 = vld [vmem:[#allocation2 + $0x48] sm:$0xff]
        %v1884 = vld [vmem:[#allocation2 + $0x50] sm:$0xff]
        %v1885 = vld [vmem:[#allocation2 + $0x58] sm:$0xff]
        %v1886 = vld [vmem:[#allocation2 + $0x60] sm:$0xff]
        %v1887 = vld [vmem:[#allocation2 + $0x68] sm:$0xff]
        %v1888 = vld [vmem:[#allocation2 + $0x70] sm:$0xff]
        %v1889 = vld [vmem:[#allocation2 + $0x78] sm:$0xff]
        %v1890 = vpack.c.bf16 %v1875, %v1874
        %v1891 = vpack.c.bf16 %v1877, %v1876
        %v1892 = vpack.c.bf16 %v1879, %v1878
        %v1893 = vpack.c.bf16 %v1881, %v1880
        %v1894 = vpack.c.bf16 %v1883, %v1882
        %v1895 = vpack.c.bf16 %v1885, %v1884
        %v1896 = vpack.c.bf16 %v1887, %v1886
        %v1897 = vpack.c.bf16 %v1889, %v1888
        %v1898 = vld [vmem:[%s4] sm:$0xf]
        %v1899 = vld [vmem:[%s4 + $0x4] sm:$0xf]
        %v1900 = vld [vmem:[%s4 + $0x8] sm:$0xf]
        %v1901 = vld [vmem:[%s4 + $0xc] sm:$0xf]
        %v1902 = vld [vmem:[%s4 + $0x10] sm:$0xf]
        %v1903 = vld [vmem:[%s4 + $0x14] sm:$0xf]
        %v1904 = vld [vmem:[%s4 + $0x18] sm:$0xf]
        %v1905 = vld [vmem:[%s4 + $0x1c] sm:$0xf]
        %v1906 = vld [vmem:[%s4 + $0x20] sm:$0xf]
        %v1907 = vld [vmem:[%s4 + $0x24] sm:$0xf]
        %v1908 = vld [vmem:[%s4 + $0x28] sm:$0xf]
        %v1909 = vld [vmem:[%s4 + $0x2c] sm:$0xf]
        %v1910 = vld [vmem:[%s4 + $0x30] sm:$0xf]
        %v1911 = vld [vmem:[%s4 + $0x34] sm:$0xf]
        %v1912 = vld [vmem:[%s4 + $0x38] sm:$0xf]
        %v1913 = vld [vmem:[%s4 + $0x3c] sm:$0xf]
        %v1930 = vunpack.c.l.b16 %v1898
        %v1931 = vunpack.c.l.b16 %v1899
        %v1932 = vunpack.c.l.b16 %v1900
        %v1933 = vunpack.c.l.b16 %v1901
        %v1934 = vunpack.c.l.b16 %v1902
        %v1935 = vunpack.c.l.b16 %v1903
        %v1936 = vunpack.c.l.b16 %v1904
        %v1937 = vunpack.c.l.b16 %v1905
        %v1938 = vunpack.c.l.b16 %v1906
        %v1939 = vunpack.c.l.b16 %v1907
        %v1940 = vunpack.c.l.b16 %v1908
        %v1941 = vunpack.c.l.b16 %v1909
        %v1942 = vunpack.c.l.b16 %v1910
        %v1943 = vunpack.c.l.b16 %v1911
        %v1944 = vunpack.c.l.b16 %v1912
        %v1945 = vunpack.c.l.b16 %v1913
        %v1946 = vpack.c.b16 %v1931, %v1930
        %v1947 = vpack.c.b16 %v1933, %v1932
        %v1948 = vpack.c.b16 %v1935, %v1934
        %v1949 = vpack.c.b16 %v1937, %v1936
        %v1950 = vpack.c.b16 %v1939, %v1938
        %v1951 = vpack.c.b16 %v1941, %v1940
        %v1952 = vpack.c.b16 %v1943, %v1942
        %v1953 = vpack.c.b16 %v1945, %v1944
        %1962 = vmatprep.subr.bf16.mxu0 0
        %1963 = vmatpush1.bf16.msra.mxu0 %v1953
        %1964 = vmatprep.subr.bf16.mxu0 0
        %1965 = vmatpush1.bf16.msra.mxu0 %v1952
        %1966 = vmatprep.subr.bf16.mxu0 0
        %1967 = vmatpush1.bf16.msra.mxu0 %v1951
        %1968 = vmatprep.subr.bf16.mxu0 0
        %1969 = vmatpush1.bf16.msra.mxu0 %v1950
        %1970 = vmatprep.subr.bf16.mxu0 0
        %1971 = vmatpush1.bf16.msra.mxu0 %v1949
        %1972 = vmatprep.subr.bf16.mxu0 0
        %1973 = vmatpush1.bf16.msra.mxu0 %v1948
        %1974 = vmatprep.subr.bf16.mxu0 0
        %1975 = vmatpush1.bf16.msra.mxu0 %v1947
        %1976 = vmatprep.subr.bf16.mxu0 0
        %1977 = vmatpush1.bf16.msra.mxu0 %v1946
        %1978 = vmatprep.subr.bf16.mxu0 0
        %1979 = vmatpush2.bf16.msra.mxu0 0
        %1980 = vmatprep.subr.bf16.mxu0 0
        %1981 = vmatpush2.bf16.msra.mxu0 0
        %1982 = vmatprep.subr.bf16.mxu0 0
        %1983 = vmatpush2.bf16.msra.mxu0 0
        %1984 = vmatprep.subr.bf16.mxu0 0
        %1985 = vmatpush2.bf16.msra.mxu0 0
        %1986 = vmatprep.subr.bf16.mxu0 0
        %1987 = vmatpush2.bf16.msra.mxu0 0
        %1988 = vmatprep.subr.bf16.mxu0 0
        %1989 = vmatpush2.bf16.msra.mxu0 0
        %1990 = vmatprep.subr.bf16.mxu0 0
        %1991 = vmatpush2.bf16.msra.mxu0 0
        %1992 = vmatprep.subr.bf16.mxu0 0
        %1993 = vmatpush2.bf16.msra.mxu0 0
        %1994 = vmatprep.mubr.bf16.mxu0 0
        %1995 = vmatmul.mubr.bf16.gmra.mxu0 %v1890
        %v1996 = vpop.f32.mrf.mxu0
        %v1997 = vadd.f32 0.0, %v1996
        %v1998 = vpop.f32.mrf.mxu0
        %v1999 = vpop.f32.mrf.mxu0
        %v2000 = vadd.f32 0.0, %v1999
        %v2001 = vpop.f32.mrf.mxu0
        %2002 = vmatprep.mubr.bf16.mxu0 0
        %2003 = vmatmul.mubr.bf16.gmra.mxu0 %v1891
        %v2004 = vpop.f32.mrf.mxu0
        %v2005 = vadd.f32 0.0, %v2004
        %v2006 = vpop.f32.mrf.mxu0
        %v2007 = vpop.f32.mrf.mxu0
        %v2008 = vadd.f32 0.0, %v2007
        %v2009 = vpop.f32.mrf.mxu0
        %2010 = vmatprep.mubr.bf16.mxu0 0
        %2011 = vmatmul.mubr.bf16.gmra.mxu0 %v1892
        %v2012 = vpop.f32.mrf.mxu0
        %v2013 = vadd.f32 0.0, %v2012
        %v2014 = vpop.f32.mrf.mxu0
        %v2015 = vpop.f32.mrf.mxu0
        %v2016 = vadd.f32 0.0, %v2015
        %v2017 = vpop.f32.mrf.mxu0
        %2018 = vmatprep.mubr.bf16.mxu0 0
        %2019 = vmatmul.mubr.bf16.gmra.mxu0 %v1893
        %v2020 = vpop.f32.mrf.mxu0
        %v2021 = vadd.f32 0.0, %v2020
        %v2022 = vpop.f32.mrf.mxu0
        %v2023 = vpop.f32.mrf.mxu0
        %v2024 = vadd.f32 0.0, %v2023
        %v2025 = vpop.f32.mrf.mxu0
        %2026 = vmatprep.mubr.bf16.mxu0 0
        %2027 = vmatmul.mubr.bf16.gmra.mxu0 %v1894
        %v2028 = vpop.f32.mrf.mxu0
        %v2029 = vadd.f32 0.0, %v2028
        %v2030 = vpop.f32.mrf.mxu0
        %v2031 = vpop.f32.mrf.mxu0
        %v2032 = vadd.f32 0.0, %v2031
        %v2033 = vpop.f32.mrf.mxu0
        %2034 = vmatprep.mubr.bf16.mxu0 0
        %2035 = vmatmul.mubr.bf16.gmra.mxu0 %v1895
        %v2036 = vpop.f32.mrf.mxu0
        %v2037 = vadd.f32 0.0, %v2036
        %v2038 = vpop.f32.mrf.mxu0
        %v2039 = vpop.f32.mrf.mxu0
        %v2040 = vadd.f32 0.0, %v2039
        %v2041 = vpop.f32.mrf.mxu0
        %2042 = vmatprep.mubr.bf16.mxu0 0
        %2043 = vmatmul.mubr.bf16.gmra.mxu0 %v1896
        %v2044 = vpop.f32.mrf.mxu0
        %v2045 = vadd.f32 0.0, %v2044
        %v2046 = vpop.f32.mrf.mxu0
        %v2047 = vpop.f32.mrf.mxu0
        %v2048 = vadd.f32 0.0, %v2047
        %v2049 = vpop.f32.mrf.mxu0
        %2050 = vmatprep.mubr.bf16.mxu0 0
        %2051 = vmatmul.mubr.bf16.gmra.mxu0 %v1897
        %v2052 = vpop.f32.mrf.mxu0
        %v2053 = vadd.f32 0.0, %v2052
        %v2054 = vpop.f32.mrf.mxu0
        %v2055 = vpop.f32.mrf.mxu0
        %v2056 = vadd.f32 0.0, %v2055
        %v2057 = vpop.f32.mrf.mxu0
        %2058 = vdwg.mxu0
        %v2059 = vpack.c.bf16 %v2000, %v1997
        %v2060 = vpack.c.bf16 %v2008, %v2005
        %v2061 = vpack.c.bf16 %v2016, %v2013
        %v2062 = vpack.c.bf16 %v2024, %v2021
        %v2063 = vpack.c.bf16 %v2032, %v2029
        %v2064 = vpack.c.bf16 %v2040, %v2037
        %v2065 = vpack.c.bf16 %v2048, %v2045
        %v2066 = vpack.c.bf16 %v2056, %v2053
        %v2067 = vld [vmem:[%s3] sm:$0xf]
        %v2068 = vld [vmem:[%s3 + $0x4] sm:$0xf]
        %v2069 = vld [vmem:[%s3 + $0x8] sm:$0xf]
        %v2070 = vld [vmem:[%s3 + $0xc] sm:$0xf]
        %v2071 = vld [vmem:[%s3 + $0x10] sm:$0xf]
        %v2072 = vld [vmem:[%s3 + $0x14] sm:$0xf]
        %v2073 = vld [vmem:[%s3 + $0x18] sm:$0xf]
        %v2074 = vld [vmem:[%s3 + $0x1c] sm:$0xf]
        %v2075 = vld [vmem:[%s3 + $0x20] sm:$0xf]
        %v2076 = vld [vmem:[%s3 + $0x24] sm:$0xf]
        %v2077 = vld [vmem:[%s3 + $0x28] sm:$0xf]
        %v2078 = vld [vmem:[%s3 + $0x2c] sm:$0xf]
        %v2079 = vld [vmem:[%s3 + $0x30] sm:$0xf]
        %v2080 = vld [vmem:[%s3 + $0x34] sm:$0xf]
        %v2081 = vld [vmem:[%s3 + $0x38] sm:$0xf]
        %v2082 = vld [vmem:[%s3 + $0x3c] sm:$0xf]
        %v2083 = vld [vmem:[%s3 + $0x40] sm:$0xf]
        %v2101 = vunpack.c.l.b16 %v2067
        %v2102 = vunpack.c.l.b16 %v2068
        %v2103 = vunpack.c.l.b16 %v2069
        %v2104 = vunpack.c.l.b16 %v2070
        %v2105 = vunpack.c.l.b16 %v2071
        %v2106 = vunpack.c.l.b16 %v2072
        %v2107 = vunpack.c.l.b16 %v2073
        %v2108 = vunpack.c.l.b16 %v2074
        %v2109 = vunpack.c.l.b16 %v2075
        %v2110 = vunpack.c.l.b16 %v2076
        %v2111 = vunpack.c.l.b16 %v2077
        %v2112 = vunpack.c.l.b16 %v2078
        %v2113 = vunpack.c.l.b16 %v2079
        %v2114 = vunpack.c.l.b16 %v2080
        %v2115 = vunpack.c.l.b16 %v2081
        %v2116 = vunpack.c.l.b16 %v2082
        %v2117 = vunpack.c.l.b16 %v2083
        %v2118 = vpack.c.b16 %v2102, %v2101
        %v2119 = vpack.c.b16 %v2104, %v2103
        %v2120 = vpack.c.b16 %v2106, %v2105
        %v2121 = vpack.c.b16 %v2108, %v2107
        %v2122 = vpack.c.b16 %v2110, %v2109
        %v2123 = vpack.c.b16 %v2112, %v2111
        %v2124 = vpack.c.b16 %v2114, %v2113
        %v2125 = vpack.c.b16 %v2116, %v2115
        %v2126 = vpack.c.b16 %v2117, %v2117
        %2136 = vmatprep.subr.bf16.mxu0 0
        %2137 = vmatpush1.bf16.msra.mxu0 %v2066
        %2138 = vmatprep.subr.bf16.mxu0 0
        %2139 = vmatpush1.bf16.msra.mxu0 %v2065
        %2140 = vmatprep.subr.bf16.mxu0 0
        %2141 = vmatpush1.bf16.msra.mxu0 %v2064
        %2142 = vmatprep.subr.bf16.mxu0 0
        %2143 = vmatpush1.bf16.msra.mxu0 %v2063
        %2144 = vmatprep.subr.bf16.mxu0 0
        %2145 = vmatpush1.bf16.msra.mxu0 %v2062
        %2146 = vmatprep.subr.bf16.mxu0 0
        %2147 = vmatpush1.bf16.msra.mxu0 %v2061
        %2148 = vmatprep.subr.bf16.mxu0 0
        %2149 = vmatpush1.bf16.msra.mxu0 %v2060
        %2150 = vmatprep.subr.bf16.mxu0 0
        %2151 = vmatpush1.bf16.msra.mxu0 %v2059
        %2152 = vmatprep.subr.bf16.mxu0 0
        %2153 = vmatpush2.bf16.msra.mxu0 0
        %2154 = vmatprep.subr.bf16.mxu0 0
        %2155 = vmatpush2.bf16.msra.mxu0 0
        %2156 = vmatprep.subr.bf16.mxu0 0
        %2157 = vmatpush2.bf16.msra.mxu0 0
        %2158 = vmatprep.subr.bf16.mxu0 0
        %2159 = vmatpush2.bf16.msra.mxu0 0
        %2160 = vmatprep.subr.bf16.mxu0 0
        %2161 = vmatpush2.bf16.msra.mxu0 0
        %2162 = vmatprep.subr.bf16.mxu0 0
        %2163 = vmatpush2.bf16.msra.mxu0 0
        %2164 = vmatprep.subr.bf16.mxu0 0
        %2165 = vmatpush2.bf16.msra.mxu0 0
        %2166 = vmatprep.subr.bf16.mxu0 0
        %2167 = vmatpush2.bf16.msra.mxu0 0
        %2168 = vmatprep.mubr.bf16.mxu0 0
        %2169 = vmatmul.mubr.bf16.gmra.mxu0 %v2118
        %v2170 = vpop.f32.mrf.mxu0
        %v2171 = vadd.f32 0.0, %v2170
        %v2172 = vpop.f32.mrf.mxu0
        %v2173 = vpop.f32.mrf.mxu0
        %v2174 = vadd.f32 0.0, %v2173
        %v2175 = vpop.f32.mrf.mxu0
        %2176 = vmatprep.mubr.bf16.mxu0 0
        %2177 = vmatmul.mubr.bf16.gmra.mxu0 %v2119
        %v2178 = vpop.f32.mrf.mxu0
        %v2179 = vadd.f32 0.0, %v2178
        %v2180 = vpop.f32.mrf.mxu0
        %v2181 = vpop.f32.mrf.mxu0
        %v2182 = vadd.f32 0.0, %v2181
        %v2183 = vpop.f32.mrf.mxu0
        %2184 = vmatprep.mubr.bf16.mxu0 0
        %2185 = vmatmul.mubr.bf16.gmra.mxu0 %v2120
        %v2186 = vpop.f32.mrf.mxu0
        %v2187 = vadd.f32 0.0, %v2186
        %v2188 = vpop.f32.mrf.mxu0
        %v2189 = vpop.f32.mrf.mxu0
        %v2190 = vadd.f32 0.0, %v2189
        %v2191 = vpop.f32.mrf.mxu0
        %2192 = vmatprep.mubr.bf16.mxu0 0
        %2193 = vmatmul.mubr.bf16.gmra.mxu0 %v2121
        %v2194 = vpop.f32.mrf.mxu0
        %v2195 = vadd.f32 0.0, %v2194
        %v2196 = vpop.f32.mrf.mxu0
        %v2197 = vpop.f32.mrf.mxu0
        %v2198 = vadd.f32 0.0, %v2197
        %v2199 = vpop.f32.mrf.mxu0
        %2200 = vmatprep.mubr.bf16.mxu0 0
        %2201 = vmatmul.mubr.bf16.gmra.mxu0 %v2122
        %v2202 = vpop.f32.mrf.mxu0
        %v2203 = vadd.f32 0.0, %v2202
        %v2204 = vpop.f32.mrf.mxu0
        %v2205 = vpop.f32.mrf.mxu0
        %v2206 = vadd.f32 0.0, %v2205
        %v2207 = vpop.f32.mrf.mxu0
        %2208 = vmatprep.mubr.bf16.mxu0 0
        %2209 = vmatmul.mubr.bf16.gmra.mxu0 %v2123
        %v2210 = vpop.f32.mrf.mxu0
        %v2211 = vadd.f32 0.0, %v2210
        %v2212 = vpop.f32.mrf.mxu0
        %v2213 = vpop.f32.mrf.mxu0
        %v2214 = vadd.f32 0.0, %v2213
        %v2215 = vpop.f32.mrf.mxu0
        %2216 = vmatprep.mubr.bf16.mxu0 0
        %2217 = vmatmul.mubr.bf16.gmra.mxu0 %v2124
        %v2218 = vpop.f32.mrf.mxu0
        %v2219 = vadd.f32 0.0, %v2218
        %v2220 = vpop.f32.mrf.mxu0
        %v2221 = vpop.f32.mrf.mxu0
        %v2222 = vadd.f32 0.0, %v2221
        %v2223 = vpop.f32.mrf.mxu0
        %2224 = vmatprep.mubr.bf16.mxu0 0
        %2225 = vmatmul.mubr.bf16.gmra.mxu0 %v2125
        %v2226 = vpop.f32.mrf.mxu0
        %v2227 = vadd.f32 0.0, %v2226
        %v2228 = vpop.f32.mrf.mxu0
        %v2229 = vpop.f32.mrf.mxu0
        %v2230 = vadd.f32 0.0, %v2229
        %v2231 = vpop.f32.mrf.mxu0
        %2232 = vmatprep.mubr.bf16.mxu0 0
        %2233 = vmatmul.mubr.bf16.gmra.mxu0 %v2126
        %v2234 = vpop.f32.mrf.mxu0
        %v2235 = vadd.f32 0.0, %v2234
        %v2236 = vpop.f32.mrf.mxu0
        %v2237 = vpop.f32.mrf.mxu0
        %v2238 = vpop.f32.mrf.mxu0
        %2239 = vdwg.mxu0
        %v2240 = vpack.c.bf16 %v2174, %v2171
        %v2241 = vpack.c.bf16 %v2182, %v2179
        %v2242 = vpack.c.bf16 %v2190, %v2187
        %v2243 = vpack.c.bf16 %v2198, %v2195
        %v2244 = vpack.c.bf16 %v2206, %v2203
        %v2245 = vpack.c.bf16 %v2214, %v2211
        %v2246 = vpack.c.bf16 %v2222, %v2219
        %v2247 = vpack.c.bf16 %v2230, %v2227
        %v2256 = vunpack.c.l.b16 %v2240
        %v2257 = vunpack.c.h.b16 %v2240
        %v2258 = vunpack.c.l.b16 %v2241
        %v2259 = vunpack.c.h.b16 %v2241
        %v2260 = vunpack.c.l.b16 %v2242
        %v2261 = vunpack.c.h.b16 %v2242
        %v2262 = vunpack.c.l.b16 %v2243
        %v2263 = vunpack.c.h.b16 %v2243
        %v2264 = vunpack.c.l.b16 %v2244
        %v2265 = vunpack.c.h.b16 %v2244
        %v2266 = vunpack.c.l.b16 %v2245
        %v2267 = vunpack.c.h.b16 %v2245
        %v2268 = vunpack.c.l.b16 %v2246
        %v2269 = vunpack.c.h.b16 %v2246
        %v2270 = vunpack.c.l.b16 %v2247
        %v2271 = vunpack.c.h.b16 %v2247
        %v2272 = vpack.c.b16 %v2256, %v2256
        %v2273 = vpack.c.b16 %v2257, %v2257
        %v2274 = vpack.c.b16 %v2258, %v2258
        %v2275 = vpack.c.b16 %v2259, %v2259
        %v2276 = vpack.c.b16 %v2260, %v2260
        %v2277 = vpack.c.b16 %v2261, %v2261
        %v2278 = vpack.c.b16 %v2262, %v2262
        %v2279 = vpack.c.b16 %v2263, %v2263
        %v2280 = vpack.c.b16 %v2264, %v2264
        %v2281 = vpack.c.b16 %v2265, %v2265
        %v2282 = vpack.c.b16 %v2266, %v2266
        %v2283 = vpack.c.b16 %v2267, %v2267
        %v2284 = vpack.c.b16 %v2268, %v2268
        %v2285 = vpack.c.b16 %v2269, %v2269
        %v2286 = vpack.c.b16 %v2270, %v2270
        %v2287 = vpack.c.b16 %v2271, %v2271
        %vm2304 = vcmask 27648
        %2305 = vst.msk [vmem:[%s308] sm:$0xf] %vm2304, %v2272
        %2306 = vst.msk [vmem:[%s308 + $0x4] sm:$0xf] %vm2304, %v2273
        %2307 = vst.msk [vmem:[%s308 + $0x8] sm:$0xf] %vm2304, %v2274
        %2308 = vst.msk [vmem:[%s308 + $0xc] sm:$0xf] %vm2304, %v2275
        %2309 = vst.msk [vmem:[%s308 + $0x10] sm:$0xf] %vm2304, %v2276
        %2310 = vst.msk [vmem:[%s308 + $0x14] sm:$0xf] %vm2304, %v2277
        %2311 = vst.msk [vmem:[%s308 + $0x18] sm:$0xf] %vm2304, %v2278
        %2312 = vst.msk [vmem:[%s308 + $0x1c] sm:$0xf] %vm2304, %v2279
        %2313 = vst.msk [vmem:[%s308 + $0x20] sm:$0xf] %vm2304, %v2280
        %2314 = vst.msk [vmem:[%s308 + $0x24] sm:$0xf] %vm2304, %v2281
        %2315 = vst.msk [vmem:[%s308 + $0x28] sm:$0xf] %vm2304, %v2282
        %2316 = vst.msk [vmem:[%s308 + $0x2c] sm:$0xf] %vm2304, %v2283
        %2317 = vst.msk [vmem:[%s308 + $0x30] sm:$0xf] %vm2304, %v2284
        %2318 = vst.msk [vmem:[%s308 + $0x34] sm:$0xf] %vm2304, %v2285
        %2319 = vst.msk [vmem:[%s308 + $0x38] sm:$0xf] %vm2304, %v2286
        %2320 = vst.msk [vmem:[%s308 + $0x3c] sm:$0xf] %vm2304, %v2287
        %v2321 = vld [vmem:[%s5] sm:$0x1]
        %v2322 = vadd.f32 %v2235, %v2321
        %vm2323 = vcmask 24576
        %2324 = vst.msk [vmem:[%s311] sm:$0x1] %vm2323, %v2322
      $region52: #{nonlocal_block.2} parent=43 // pred_fallthru
        _
      %p2325 = scmp.lt.s32.totalorder %s23, 1
      %s2326 = scalar_select %p2325, %s23, 1
      %s2327 = smul.addr %s2326, 16
      %s2328 = smul.addr %s2327, 4
      %s2329 = scalar_lea.vmem %s6, %s2328
      %p2330 = scmp.lt.s32.totalorder %s23, 1
      %s2331 = scalar_select %p2330, %s23, 1
      %s2332 = scalar_lea.vmem %s7, %s2331
      // Predicated region
      $region53: #{nonlocal_block.2} parent=43 // pred_check
        %p2333 = pneg %p182
      $region54: #{nonlocal_block.2} parent=43 // pred_check_branch
        %2335 = sbr.rel (%p2333) target = $region56
      $region55: #{nonlocal_block.2} parent=43 // pred_region
        _
      $region56: #{nonlocal_block.2} parent=43 // pred_fallthru
        _
      // Predicated region
      $region57: #{nonlocal_block.2} parent=43 // pred_check
        %p2336 = pneg %p208
      $region58: #{nonlocal_block.2} parent=43 // pred_check_branch
        %2338 = sbr.rel (%p2336) target = $region60
      $region59: #{nonlocal_block.2} parent=43 // pred_region
        _
      $region60: #{nonlocal_block.2} parent=43 // pred_fallthru
        _
    $region44: #{nonlocal_block.2} parent=5 // pred_fallthru
      _
    %p2339 = scmp.le.s32.totalorder 2, %s14
    // Predicated region
    $region61: #{nonlocal_block.2} parent=5 // pred_check
      %p2340 = pneg %p2339
    $region62: #{nonlocal_block.2} parent=5 // pred_check_branch
      %2342 = sbr.rel (%p2340) target = $region64
    $region63: #{nonlocal_block.2} parent=5 // pred_region
      %s2343 = ssub.s32 %s14, 2
      // Predicated region
      $region65: #{nonlocal_block.2} parent=63 // pred_check
        %p2344 = pneg %p188
      $region66: #{nonlocal_block.2} parent=63 // pred_check_branch
        %2346 = sbr.rel (%p2344) target = $region68
      $region67: #{nonlocal_block.2} parent=63 // pred_region
        %p2347 = scmp.lt.s32.totalorder %s25, 1
        %s2348 = scalar_select %p2347, %s25, 1
        %s2349 = smul.addr %s2348, 16
        %s2350 = smul.addr %s2349, 4
        %s2351 = scalar_lea.vmem %s6, %s2350
      $region68: #{nonlocal_block.2} parent=63 // pred_fallthru
        _
      // Predicated region
      $region69: #{nonlocal_block.2} parent=63 // pred_check
        %p2352 = pneg %p214
      $region70: #{nonlocal_block.2} parent=63 // pred_check_branch
        %2354 = sbr.rel (%p2352) target = $region72
      $region71: #{nonlocal_block.2} parent=63 // pred_region
        %p2355 = scmp.lt.s32.totalorder %s25, 1
        %s2356 = scalar_select %p2355, %s25, 1
        %s2357 = scalar_lea.vmem %s7, %s2356
      $region72: #{nonlocal_block.2} parent=63 // pred_fallthru
        _
    $region64: #{nonlocal_block.2} parent=5 // pred_fallthru
      _
  $region6: #{nonlocal_block.2} parent=0 // loop_footer
    %s18 = sadd.s32 1, %s14
  $region7: #{nonlocal_block.2} parent=0 // loop_footer_branch
    %13 = sbr.rel target = $region3
  $region8: #{nonlocal_block.2} parent=0 // loop_exit
    _

</llo_original>
